<compile_context>
chip_gen: v5e
topology: v5e:2x2
jax: 0.10.0
libtpu: 0.0.40
codegen_flags: <defaults>
</compile_context>

<pallas_src>
import jax
import jax.numpy as jnp
from jax.experimental import pallas as pl
from jax.experimental.pallas import tpu as pltpu

IN_DIM = 200
HIDDEN_DIMS = [512, 256, 64, 32]
PAD_OUT_DIM = 256                     # final 200-wide output padded lane-dense

# Logical dim chain (matches the PyTorch module):
#   encoder: 200->512->256->64->32 ; decoder: 32->64->256 ; final: 256->512?  no:
#   encoder: 200->512->256->64->32 ; decoder: 32->64->256->512 ; final: 512->200
DIMS = [IN_DIM] + HIDDEN_DIMS + HIDDEN_DIMS[::-1][1:] + [IN_DIM]
# Padded chain used inside the kernel:
#   * input stays 200 (block == full array dim, no wrapper-side pad pass)
#   * bottlenecks 64/32 padded to 128 so every intermediate is lane-dense
#   * output padded to 256 so the streaming vst is lane-dense
DIMS_PAD = [IN_DIM, 512, 256, 128, 128, 128, 256, 512, PAD_OUT_DIM]
NUM_LAYERS = len(DIMS) - 1            # 8
MAX_DIM = max(DIMS_PAD)               # 512 (lane width of the bias buffer)


def autoencoder_kernel(x_ref, b_ref, *w_and_out):
    """Args: x tile (bt, 200) bf16, bias buffer (8, 512) f32, 8 bf16 weight
    refs, output tile (bt, 256) f32."""
    out_ref = w_and_out[-1]
    w_refs = w_and_out[:-1]

    bt = x_ref.shape[0]
    half = bt // 2
    # Two independent batch sub-chains: their per-layer ops have no data
    # dependences, so the scheduler can co-issue one half's MXU matmul with
    # the other half's bias/ReLU (VPU) and exp/rcp (EUP) epilogue, hiding
    # essentially all non-MXU time under the MXU cadence.
    hs = [x_ref[0:half, :], x_ref[half:bt, :]]

    for layer in range(NUM_LAYERS):
        w = w_refs[layer][...]                       # (din_pad, dout_pad) bf16
        dout = w.shape[1]
        b_f32 = b_ref[layer:layer + 1, :dout]        # (1, dout) f32, static slice
        last = layer == NUM_LAYERS - 1
        if not last:
            b_bf16 = b_f32.astype(jnp.bfloat16)
        nxt = []
        for h in hs:
            # bf16 MXU matmul with f32 accumulation.
            acc = jnp.dot(h, w, preferred_element_type=jnp.float32)
            if not last:
                # bf16 epilogue: halves the vreg footprint of the (rows, dout)
                # intermediates and already matches the next dot's input dtype.
                nxt.append(jnp.maximum(acc.astype(jnp.bfloat16) + b_bf16, 0))
            else:
                # Sigmoid as exp(-x) then EUP reciprocal: both transcendental
                # steps stay on the (otherwise idle) EUP slot.
                s = acc + b_f32
                nxt.append(pl.reciprocal(1.0 + jnp.exp(-s), approx=True))
        hs = nxt

    out_ref[0:half, :] = hs[0].astype(out_ref.dtype)
    out_ref[half:bt, :] = hs[1].astype(out_ref.dtype)


def _num_tensorcores():
    """Best effort: v7x has 2 TensorCores per chip; v5e/v6e have 1."""
    try:
        kind = jax.devices()[0].device_kind.lower()
        if "v7" in kind:
            return 2
    except Exception:
        pass
    return 1


def _pick_batch_tile(batch, n_tc):
    """One grid step on single-TC chips (fewer ~0.35 us step overheads),
    >= n_tc parallel steps on v7x; cap tile rows at 512 for large batches."""
    bt = -(-batch // max(n_tc, 1))        # ceil(batch / n_tc)
    bt = -(-bt // 16) * 16                # multiple of 16: two 8-row-aligned sub-chains
    return max(16, min(bt, 512))


def autoencoder_forward(x, weights_pad, bias_buf, *, batch_tile=None):
    """Returns (X_hat, X), matching the PyTorch forward."""
    B, in_dim = x.shape
    assert in_dim == IN_DIM
    bt = _pick_batch_tile(B, _num_tensorcores()) if batch_tile is None else batch_tile
    steps = pl.cdiv(B, bt)

    # Feed x unpadded as bf16 (the first dot truncates to bf16 anyway); no
    # wrapper-side zero-pad pass.  Ragged/short last blocks are handled by
    # Pallas, and batch rows are independent so block padding is inert.
    # Ideally the producer hands bf16 directly; this cast is a no-op then.
    x_in = x if x.dtype == jnp.bfloat16 else x.astype(jnp.bfloat16)

    in_specs = [
        pl.BlockSpec((bt, IN_DIM), lambda i: (i, 0)),            # x tile
        pl.BlockSpec((NUM_LAYERS, MAX_DIM), lambda i: (0, 0)),   # all 8 biases, 1 DMA
    ]
    for layer in range(NUM_LAYERS):
        din_p, dout_p = DIMS_PAD[layer], DIMS_PAD[layer + 1]
        # Full-array blocks with constant index_maps: fetched once, then
        # VMEM-resident for the whole grid (no re-fetch on unchanged block idx).
        in_specs.append(pl.BlockSpec((din_p, dout_p), lambda i: (0, 0)))

    out_spec = pl.BlockSpec((bt, PAD_OUT_DIM), lambda i: (i, 0))

    b_eff = steps * bt
    flops = 2 * b_eff * sum(DIMS_PAD[l] * DIMS_PAD[l + 1] for l in range(NUM_LAYERS))
    bytes_accessed = (b_eff * IN_DIM * 2 + b_eff * PAD_OUT_DIM * 4
                      + sum(int(w.size) * 2 for w in weights_pad)
                      + NUM_LAYERS * MAX_DIM * 4)
    cost = pl.CostEstimate(flops=flops,
                           transcendentals=b_eff * PAD_OUT_DIM,   # sigmoid exp+rcp
                           bytes_accessed=bytes_accessed)

    x_hat_pad = pl.pallas_call(
        autoencoder_kernel,
        out_shape=jax.ShapeDtypeStruct((B, PAD_OUT_DIM), jnp.float32),
        grid_spec=pltpu.PrefetchScalarGridSpec(
            num_scalar_prefetch=0,
            grid=(steps,),
            in_specs=in_specs,
            out_specs=out_spec,
        ),
        compiler_params=pltpu.CompilerParams(
            dimension_semantics=("parallel",)),
        cost_estimate=cost,
    )(x_in, bias_buf, *weights_pad)

    # A fused consumer could take the lane-dense (B, 256) slab directly and
    # skip this slice; we return the module's (B, 200) shape here.
    return x_hat_pad[:, :IN_DIM], x


def init_params(key):
    """Padded bf16 weights (din_pad, dout_pad) + one f32 bias buffer (8, 512).

    PyTorch Linear stores W as (out, in); we store the transpose (in, out),
    drawn U(-1/sqrt(fan_in), 1/sqrt(fan_in)) like the default init.  Padded
    rows/cols (64/32 -> 128 bottlenecks, 200 -> 256 output) and padded bias
    lanes are zero, so the padding is mathematically inert through the ReLU
    layers; padded output lanes only hold sigmoid(0)=0.5 and are sliced off.
    """
    weights_pad = []
    bias_buf = jnp.zeros((NUM_LAYERS, MAX_DIM), jnp.float32)
    for layer in range(NUM_LAYERS):
        din, dout = DIMS[layer], DIMS[layer + 1]
        din_p, dout_p = DIMS_PAD[layer], DIMS_PAD[layer + 1]
        key, kw, kb = jax.random.split(key, 3)
        bound = 1.0 / (din ** 0.5)
        w = jax.random.uniform(kw, (din, dout), jnp.float32, -bound, bound)
        b = jax.random.uniform(kb, (dout,), jnp.float32, -bound, bound)
        w_p = jnp.zeros((din_p, dout_p), jnp.float32).at[:din, :dout].set(w)
        weights_pad.append(w_p.astype(jnp.bfloat16))
        bias_buf = bias_buf.at[layer, :dout].set(b)
    return weights_pad, bias_buf


def reference_forward(x, weights_pad, bias_buf):
    """Pure-JAX reference with matching numerics (bf16 dot inputs, f32 acc,
    bf16 hidden epilogue); only the final reciprocal is exact instead of the
    kernel's EUP approximation."""
    h = x.astype(jnp.bfloat16)
    for layer in range(NUM_LAYERS):
        dout = DIMS_PAD[layer + 1]
        w = weights_pad[layer]
        acc = jnp.dot(h, w, preferred_element_type=jnp.float32)
        b = bias_buf[layer:layer + 1, :dout]
        if layer < NUM_LAYERS - 1:
            h = jnp.maximum(acc.astype(jnp.bfloat16) + b.astype(jnp.bfloat16), 0)
        else:
            h = 1.0 / (1.0 + jnp.exp(-(acc + b)))
    return h[:, :IN_DIM], x


if __name__ == "__main__":
    key = jax.random.PRNGKey(0)
    key, kx, kp = jax.random.split(key, 3)

    B = 64
    x = jax.random.uniform(kx, (B, IN_DIM), jnp.float32)

    weights_pad, bias_buf = init_params(kp)

    x_hat, x_out = autoencoder_forward(x, weights_pad, bias_buf)
    x_hat = jax.block_until_ready(x_hat)
    x_out = jax.block_until_ready(x_out)

    # Sanity-check against a pure-JAX reference with matching numerics
    # (tolerance covers only the EUP approximate reciprocal in the sigmoid).
    x_hat_ref, _ = reference_forward(x, weights_pad, bias_buf)
    assert x_hat.shape == (B, IN_DIM)
    assert jnp.allclose(x_hat, x_hat_ref, atol=2e-3, rtol=2e-3), \
        float(jnp.max(jnp.abs(x_hat - x_hat_ref)))
    assert jnp.array_equal(x_out, x)

    print("KERNEL_OK")
</pallas_src>

<mosaic_0001>
module attributes {stable_mosaic.version = 11 : i64} {
  func.func @autoencoder_kernel(%arg0: i32, %arg1: memref<64x200xbf16, #tpu.memory_space<vmem>>, %arg2: memref<8x512xf32, #tpu.memory_space<vmem>>, %arg3: memref<200x512xbf16, #tpu.memory_space<vmem>>, %arg4: memref<512x256xbf16, #tpu.memory_space<vmem>>, %arg5: memref<256x128xbf16, #tpu.memory_space<vmem>>, %arg6: memref<128x128xbf16, #tpu.memory_space<vmem>>, %arg7: memref<128x128xbf16, #tpu.memory_space<vmem>>, %arg8: memref<128x256xbf16, #tpu.memory_space<vmem>>, %arg9: memref<256x512xbf16, #tpu.memory_space<vmem>>, %arg10: memref<512x256xbf16, #tpu.memory_space<vmem>>, %arg11: memref<64x256xf32, #tpu.memory_space<vmem>>) attributes {dimension_semantics = [#tpu.dimension_semantics<parallel>], iteration_bounds = array<i64: 1>, scalar_prefetch = 0 : i64, scratch_operands = 0 : i64, tpu.core_type = #tpu.core_type<tc>, window_params = [{transform_indices = @transform_0, window_bounds = array<i64: 64, 200>}, {pipeline_mode = #tpu.pipeline_mode<synchronous>, transform_indices = @transform_1, window_bounds = array<i64: 8, 512>}, {pipeline_mode = #tpu.pipeline_mode<synchronous>, transform_indices = @transform_2, window_bounds = array<i64: 200, 512>}, {pipeline_mode = #tpu.pipeline_mode<synchronous>, transform_indices = @transform_3, window_bounds = array<i64: 512, 256>}, {pipeline_mode = #tpu.pipeline_mode<synchronous>, transform_indices = @transform_4, window_bounds = array<i64: 256, 128>}, {pipeline_mode = #tpu.pipeline_mode<synchronous>, transform_indices = @transform_5, window_bounds = array<i64: 128, 128>}, {pipeline_mode = #tpu.pipeline_mode<synchronous>, transform_indices = @transform_6, window_bounds = array<i64: 128, 128>}, {pipeline_mode = #tpu.pipeline_mode<synchronous>, transform_indices = @transform_7, window_bounds = array<i64: 128, 256>}, {pipeline_mode = #tpu.pipeline_mode<synchronous>, transform_indices = @transform_8, window_bounds = array<i64: 256, 512>}, {pipeline_mode = #tpu.pipeline_mode<synchronous>, transform_indices = @transform_9, window_bounds = array<i64: 512, 256>}, {transform_indices = @transform_10, window_bounds = array<i64: 64, 256>}]} {
    %c0 = arith.constant 0 : index
    %c0_0 = arith.constant 0 : index
    %0 = vector.load %arg1[%c0, %c0_0] : memref<64x200xbf16, #tpu.memory_space<vmem>>, vector<32x200xbf16>
    %c32 = arith.constant 32 : index
    %c0_1 = arith.constant 0 : index
    %1 = vector.load %arg1[%c32, %c0_1] : memref<64x200xbf16, #tpu.memory_space<vmem>>, vector<32x200xbf16>
    %c0_2 = arith.constant 0 : index
    %c0_3 = arith.constant 0 : index
    %2 = vector.load %arg3[%c0_2, %c0_3] : memref<200x512xbf16, #tpu.memory_space<vmem>>, vector<200x512xbf16>
    %c0_4 = arith.constant 0 : index
    %c0_5 = arith.constant 0 : index
    %3 = vector.load %arg2[%c0_4, %c0_5] : memref<8x512xf32, #tpu.memory_space<vmem>>, vector<1x512xf32>
    %4 = arith.truncf %3 : vector<1x512xf32> to vector<1x512xbf16>
    %cst = arith.constant dense<0.000000e+00> : vector<32x512xf32>
    %5 = tpu.matmul %0, %2, %cst {dimension_numbers = #tpu.dot_dimension_numbers<[1], [0], [0], [1], [0, 0, 1, 1], [], []>} : vector<32x200xbf16>, vector<200x512xbf16>, vector<32x512xf32> -> vector<32x512xf32>
    %6 = arith.truncf %5 : vector<32x512xf32> to vector<32x512xbf16>
    %7 = vector.broadcast %4 : vector<1x512xbf16> to vector<32x512xbf16>
    %8 = arith.addf %6, %7 : vector<32x512xbf16>
    %cst_6 = arith.constant 0.000000e+00 : bf16
    %9 = vector.broadcast %cst_6 : bf16 to vector<32x512xbf16>
    %10 = arith.maximumf %8, %9 : vector<32x512xbf16>
    %cst_7 = arith.constant dense<0.000000e+00> : vector<32x512xf32>
    %11 = tpu.matmul %1, %2, %cst_7 {dimension_numbers = #tpu.dot_dimension_numbers<[1], [0], [0], [1], [0, 0, 1, 1], [], []>} : vector<32x200xbf16>, vector<200x512xbf16>, vector<32x512xf32> -> vector<32x512xf32>
    %12 = arith.truncf %11 : vector<32x512xf32> to vector<32x512xbf16>
    %13 = vector.broadcast %4 : vector<1x512xbf16> to vector<32x512xbf16>
    %14 = arith.addf %12, %13 : vector<32x512xbf16>
    %cst_8 = arith.constant 0.000000e+00 : bf16
    %15 = vector.broadcast %cst_8 : bf16 to vector<32x512xbf16>
    %16 = arith.maximumf %14, %15 : vector<32x512xbf16>
    %c0_9 = arith.constant 0 : index
    %c0_10 = arith.constant 0 : index
    %17 = vector.load %arg4[%c0_9, %c0_10] : memref<512x256xbf16, #tpu.memory_space<vmem>>, vector<512x256xbf16>
    %c1 = arith.constant 1 : index
    %c0_11 = arith.constant 0 : index
    %18 = vector.load %arg2[%c1, %c0_11] : memref<8x512xf32, #tpu.memory_space<vmem>>, vector<1x256xf32>
    %19 = arith.truncf %18 : vector<1x256xf32> to vector<1x256xbf16>
    %cst_12 = arith.constant dense<0.000000e+00> : vector<32x256xf32>
    %20 = tpu.matmul %10, %17, %cst_12 {dimension_numbers = #tpu.dot_dimension_numbers<[1], [0], [0], [1], [0, 0, 1, 1], [], []>} : vector<32x512xbf16>, vector<512x256xbf16>, vector<32x256xf32> -> vector<32x256xf32>
    %21 = arith.truncf %20 : vector<32x256xf32> to vector<32x256xbf16>
    %22 = vector.broadcast %19 : vector<1x256xbf16> to vector<32x256xbf16>
    %23 = arith.addf %21, %22 : vector<32x256xbf16>
    %cst_13 = arith.constant 0.000000e+00 : bf16
    %24 = vector.broadcast %cst_13 : bf16 to vector<32x256xbf16>
    %25 = arith.maximumf %23, %24 : vector<32x256xbf16>
    %cst_14 = arith.constant dense<0.000000e+00> : vector<32x256xf32>
    %26 = tpu.matmul %16, %17, %cst_14 {dimension_numbers = #tpu.dot_dimension_numbers<[1], [0], [0], [1], [0, 0, 1, 1], [], []>} : vector<32x512xbf16>, vector<512x256xbf16>, vector<32x256xf32> -> vector<32x256xf32>
    %27 = arith.truncf %26 : vector<32x256xf32> to vector<32x256xbf16>
    %28 = vector.broadcast %19 : vector<1x256xbf16> to vector<32x256xbf16>
    %29 = arith.addf %27, %28 : vector<32x256xbf16>
    %cst_15 = arith.constant 0.000000e+00 : bf16
    %30 = vector.broadcast %cst_15 : bf16 to vector<32x256xbf16>
    %31 = arith.maximumf %29, %30 : vector<32x256xbf16>
    %c0_16 = arith.constant 0 : index
    %c0_17 = arith.constant 0 : index
    %32 = vector.load %arg5[%c0_16, %c0_17] : memref<256x128xbf16, #tpu.memory_space<vmem>>, vector<256x128xbf16>
    %c2 = arith.constant 2 : index
    %c0_18 = arith.constant 0 : index
    %33 = vector.load %arg2[%c2, %c0_18] : memref<8x512xf32, #tpu.memory_space<vmem>>, vector<1x128xf32>
    %34 = arith.truncf %33 : vector<1x128xf32> to vector<1x128xbf16>
    %cst_19 = arith.constant dense<0.000000e+00> : vector<32x128xf32>
    %35 = tpu.matmul %25, %32, %cst_19 {dimension_numbers = #tpu.dot_dimension_numbers<[1], [0], [0], [1], [0, 0, 1, 1], [], []>} : vector<32x256xbf16>, vector<256x128xbf16>, vector<32x128xf32> -> vector<32x128xf32>
    %36 = arith.truncf %35 : vector<32x128xf32> to vector<32x128xbf16>
    %37 = vector.broadcast %34 : vector<1x128xbf16> to vector<32x128xbf16>
    %38 = arith.addf %36, %37 : vector<32x128xbf16>
    %cst_20 = arith.constant 0.000000e+00 : bf16
    %39 = vector.broadcast %cst_20 : bf16 to vector<32x128xbf16>
    %40 = arith.maximumf %38, %39 : vector<32x128xbf16>
    %cst_21 = arith.constant dense<0.000000e+00> : vector<32x128xf32>
    %41 = tpu.matmul %31, %32, %cst_21 {dimension_numbers = #tpu.dot_dimension_numbers<[1], [0], [0], [1], [0, 0, 1, 1], [], []>} : vector<32x256xbf16>, vector<256x128xbf16>, vector<32x128xf32> -> vector<32x128xf32>
    %42 = arith.truncf %41 : vector<32x128xf32> to vector<32x128xbf16>
    %43 = vector.broadcast %34 : vector<1x128xbf16> to vector<32x128xbf16>
    %44 = arith.addf %42, %43 : vector<32x128xbf16>
    %cst_22 = arith.constant 0.000000e+00 : bf16
    %45 = vector.broadcast %cst_22 : bf16 to vector<32x128xbf16>
    %46 = arith.maximumf %44, %45 : vector<32x128xbf16>
    %c0_23 = arith.constant 0 : index
    %c0_24 = arith.constant 0 : index
    %47 = vector.load %arg6[%c0_23, %c0_24] : memref<128x128xbf16, #tpu.memory_space<vmem>>, vector<128x128xbf16>
    %c3 = arith.constant 3 : index
    %c0_25 = arith.constant 0 : index
    %48 = vector.load %arg2[%c3, %c0_25] : memref<8x512xf32, #tpu.memory_space<vmem>>, vector<1x128xf32>
    %49 = arith.truncf %48 : vector<1x128xf32> to vector<1x128xbf16>
    %cst_26 = arith.constant dense<0.000000e+00> : vector<32x128xf32>
    %50 = tpu.matmul %40, %47, %cst_26 {dimension_numbers = #tpu.dot_dimension_numbers<[1], [0], [0], [1], [0, 0, 1, 1], [], []>} : vector<32x128xbf16>, vector<128x128xbf16>, vector<32x128xf32> -> vector<32x128xf32>
    %51 = arith.truncf %50 : vector<32x128xf32> to vector<32x128xbf16>
    %52 = vector.broadcast %49 : vector<1x128xbf16> to vector<32x128xbf16>
    %53 = arith.addf %51, %52 : vector<32x128xbf16>
    %cst_27 = arith.constant 0.000000e+00 : bf16
    %54 = vector.broadcast %cst_27 : bf16 to vector<32x128xbf16>
    %55 = arith.maximumf %53, %54 : vector<32x128xbf16>
    %cst_28 = arith.constant dense<0.000000e+00> : vector<32x128xf32>
    %56 = tpu.matmul %46, %47, %cst_28 {dimension_numbers = #tpu.dot_dimension_numbers<[1], [0], [0], [1], [0, 0, 1, 1], [], []>} : vector<32x128xbf16>, vector<128x128xbf16>, vector<32x128xf32> -> vector<32x128xf32>
    %57 = arith.truncf %56 : vector<32x128xf32> to vector<32x128xbf16>
    %58 = vector.broadcast %49 : vector<1x128xbf16> to vector<32x128xbf16>
    %59 = arith.addf %57, %58 : vector<32x128xbf16>
    %cst_29 = arith.constant 0.000000e+00 : bf16
    %60 = vector.broadcast %cst_29 : bf16 to vector<32x128xbf16>
    %61 = arith.maximumf %59, %60 : vector<32x128xbf16>
    %c0_30 = arith.constant 0 : index
    %c0_31 = arith.constant 0 : index
    %62 = vector.load %arg7[%c0_30, %c0_31] : memref<128x128xbf16, #tpu.memory_space<vmem>>, vector<128x128xbf16>
    %c4 = arith.constant 4 : index
    %c0_32 = arith.constant 0 : index
    %63 = vector.load %arg2[%c4, %c0_32] : memref<8x512xf32, #tpu.memory_space<vmem>>, vector<1x128xf32>
    %64 = arith.truncf %63 : vector<1x128xf32> to vector<1x128xbf16>
    %cst_33 = arith.constant dense<0.000000e+00> : vector<32x128xf32>
    %65 = tpu.matmul %55, %62, %cst_33 {dimension_numbers = #tpu.dot_dimension_numbers<[1], [0], [0], [1], [0, 0, 1, 1], [], []>} : vector<32x128xbf16>, vector<128x128xbf16>, vector<32x128xf32> -> vector<32x128xf32>
    %66 = arith.truncf %65 : vector<32x128xf32> to vector<32x128xbf16>
    %67 = vector.broadcast %64 : vector<1x128xbf16> to vector<32x128xbf16>
    %68 = arith.addf %66, %67 : vector<32x128xbf16>
    %cst_34 = arith.constant 0.000000e+00 : bf16
    %69 = vector.broadcast %cst_34 : bf16 to vector<32x128xbf16>
    %70 = arith.maximumf %68, %69 : vector<32x128xbf16>
    %cst_35 = arith.constant dense<0.000000e+00> : vector<32x128xf32>
    %71 = tpu.matmul %61, %62, %cst_35 {dimension_numbers = #tpu.dot_dimension_numbers<[1], [0], [0], [1], [0, 0, 1, 1], [], []>} : vector<32x128xbf16>, vector<128x128xbf16>, vector<32x128xf32> -> vector<32x128xf32>
    %72 = arith.truncf %71 : vector<32x128xf32> to vector<32x128xbf16>
    %73 = vector.broadcast %64 : vector<1x128xbf16> to vector<32x128xbf16>
    %74 = arith.addf %72, %73 : vector<32x128xbf16>
    %cst_36 = arith.constant 0.000000e+00 : bf16
    %75 = vector.broadcast %cst_36 : bf16 to vector<32x128xbf16>
    %76 = arith.maximumf %74, %75 : vector<32x128xbf16>
    %c0_37 = arith.constant 0 : index
    %c0_38 = arith.constant 0 : index
    %77 = vector.load %arg8[%c0_37, %c0_38] : memref<128x256xbf16, #tpu.memory_space<vmem>>, vector<128x256xbf16>
    %c5 = arith.constant 5 : index
    %c0_39 = arith.constant 0 : index
    %78 = vector.load %arg2[%c5, %c0_39] : memref<8x512xf32, #tpu.memory_space<vmem>>, vector<1x256xf32>
    %79 = arith.truncf %78 : vector<1x256xf32> to vector<1x256xbf16>
    %cst_40 = arith.constant dense<0.000000e+00> : vector<32x256xf32>
    %80 = tpu.matmul %70, %77, %cst_40 {dimension_numbers = #tpu.dot_dimension_numbers<[1], [0], [0], [1], [0, 0, 1, 1], [], []>} : vector<32x128xbf16>, vector<128x256xbf16>, vector<32x256xf32> -> vector<32x256xf32>
    %81 = arith.truncf %80 : vector<32x256xf32> to vector<32x256xbf16>
    %82 = vector.broadcast %79 : vector<1x256xbf16> to vector<32x256xbf16>
    %83 = arith.addf %81, %82 : vector<32x256xbf16>
    %cst_41 = arith.constant 0.000000e+00 : bf16
    %84 = vector.broadcast %cst_41 : bf16 to vector<32x256xbf16>
    %85 = arith.maximumf %83, %84 : vector<32x256xbf16>
    %cst_42 = arith.constant dense<0.000000e+00> : vector<32x256xf32>
    %86 = tpu.matmul %76, %77, %cst_42 {dimension_numbers = #tpu.dot_dimension_numbers<[1], [0], [0], [1], [0, 0, 1, 1], [], []>} : vector<32x128xbf16>, vector<128x256xbf16>, vector<32x256xf32> -> vector<32x256xf32>
    %87 = arith.truncf %86 : vector<32x256xf32> to vector<32x256xbf16>
    %88 = vector.broadcast %79 : vector<1x256xbf16> to vector<32x256xbf16>
    %89 = arith.addf %87, %88 : vector<32x256xbf16>
    %cst_43 = arith.constant 0.000000e+00 : bf16
    %90 = vector.broadcast %cst_43 : bf16 to vector<32x256xbf16>
    %91 = arith.maximumf %89, %90 : vector<32x256xbf16>
    %c0_44 = arith.constant 0 : index
    %c0_45 = arith.constant 0 : index
    %92 = vector.load %arg9[%c0_44, %c0_45] : memref<256x512xbf16, #tpu.memory_space<vmem>>, vector<256x512xbf16>
    %c6 = arith.constant 6 : index
    %c0_46 = arith.constant 0 : index
    %93 = vector.load %arg2[%c6, %c0_46] : memref<8x512xf32, #tpu.memory_space<vmem>>, vector<1x512xf32>
    %94 = arith.truncf %93 : vector<1x512xf32> to vector<1x512xbf16>
    %cst_47 = arith.constant dense<0.000000e+00> : vector<32x512xf32>
    %95 = tpu.matmul %85, %92, %cst_47 {dimension_numbers = #tpu.dot_dimension_numbers<[1], [0], [0], [1], [0, 0, 1, 1], [], []>} : vector<32x256xbf16>, vector<256x512xbf16>, vector<32x512xf32> -> vector<32x512xf32>
    %96 = arith.truncf %95 : vector<32x512xf32> to vector<32x512xbf16>
    %97 = vector.broadcast %94 : vector<1x512xbf16> to vector<32x512xbf16>
    %98 = arith.addf %96, %97 : vector<32x512xbf16>
    %cst_48 = arith.constant 0.000000e+00 : bf16
    %99 = vector.broadcast %cst_48 : bf16 to vector<32x512xbf16>
    %100 = arith.maximumf %98, %99 : vector<32x512xbf16>
    %cst_49 = arith.constant dense<0.000000e+00> : vector<32x512xf32>
    %101 = tpu.matmul %91, %92, %cst_49 {dimension_numbers = #tpu.dot_dimension_numbers<[1], [0], [0], [1], [0, 0, 1, 1], [], []>} : vector<32x256xbf16>, vector<256x512xbf16>, vector<32x512xf32> -> vector<32x512xf32>
    %102 = arith.truncf %101 : vector<32x512xf32> to vector<32x512xbf16>
    %103 = vector.broadcast %94 : vector<1x512xbf16> to vector<32x512xbf16>
    %104 = arith.addf %102, %103 : vector<32x512xbf16>
    %cst_50 = arith.constant 0.000000e+00 : bf16
    %105 = vector.broadcast %cst_50 : bf16 to vector<32x512xbf16>
    %106 = arith.maximumf %104, %105 : vector<32x512xbf16>
    %c0_51 = arith.constant 0 : index
    %c0_52 = arith.constant 0 : index
    %107 = vector.load %arg10[%c0_51, %c0_52] : memref<512x256xbf16, #tpu.memory_space<vmem>>, vector<512x256xbf16>
    %c7 = arith.constant 7 : index
    %c0_53 = arith.constant 0 : index
    %108 = vector.load %arg2[%c7, %c0_53] : memref<8x512xf32, #tpu.memory_space<vmem>>, vector<1x256xf32>
    %cst_54 = arith.constant dense<0.000000e+00> : vector<32x256xf32>
    %109 = tpu.matmul %100, %107, %cst_54 {dimension_numbers = #tpu.dot_dimension_numbers<[1], [0], [0], [1], [0, 0, 1, 1], [], []>} : vector<32x512xbf16>, vector<512x256xbf16>, vector<32x256xf32> -> vector<32x256xf32>
    %110 = vector.broadcast %108 : vector<1x256xf32> to vector<32x256xf32>
    %111 = arith.addf %109, %110 : vector<32x256xf32>
    %cst_55 = arith.constant 0.000000e+00 : f32
    %112 = vector.broadcast %cst_55 : f32 to vector<32x256xf32>
    %113 = arith.subf %112, %111 : vector<32x256xf32>
    %114 = math.exp %113 : vector<32x256xf32>
    %cst_56 = arith.constant 1.000000e+00 : f32
    %115 = vector.broadcast %cst_56 : f32 to vector<32x256xf32>
    %116 = arith.addf %115, %114 : vector<32x256xf32>
    %117 = tpu.reciprocal %116 {approx = true} : vector<32x256xf32> -> vector<32x256xf32>
    %cst_57 = arith.constant dense<0.000000e+00> : vector<32x256xf32>
    %118 = tpu.matmul %106, %107, %cst_57 {dimension_numbers = #tpu.dot_dimension_numbers<[1], [0], [0], [1], [0, 0, 1, 1], [], []>} : vector<32x512xbf16>, vector<512x256xbf16>, vector<32x256xf32> -> vector<32x256xf32>
    %119 = vector.broadcast %108 : vector<1x256xf32> to vector<32x256xf32>
    %120 = arith.addf %118, %119 : vector<32x256xf32>
    %cst_58 = arith.constant 0.000000e+00 : f32
    %121 = vector.broadcast %cst_58 : f32 to vector<32x256xf32>
    %122 = arith.subf %121, %120 : vector<32x256xf32>
    %123 = math.exp %122 : vector<32x256xf32>
    %cst_59 = arith.constant 1.000000e+00 : f32
    %124 = vector.broadcast %cst_59 : f32 to vector<32x256xf32>
    %125 = arith.addf %124, %123 : vector<32x256xf32>
    %126 = tpu.reciprocal %125 {approx = true} : vector<32x256xf32> -> vector<32x256xf32>
    %c0_60 = arith.constant 0 : index
    %c0_61 = arith.constant 0 : index
    %127 = vector.load %arg11[%c0_60, %c0_61] : memref<64x256xf32, #tpu.memory_space<vmem>>, vector<32x256xf32>
    tpu.vector_store %arg11[%c0_60, %c0_61], %117 {strides = array<i32>} : memref<64x256xf32, #tpu.memory_space<vmem>>, vector<32x256xf32>,
    %c32_62 = arith.constant 32 : index
    %c0_63 = arith.constant 0 : index
    %128 = vector.load %arg11[%c32_62, %c0_63] : memref<64x256xf32, #tpu.memory_space<vmem>>, vector<32x256xf32>
    tpu.vector_store %arg11[%c32_62, %c0_63], %126 {strides = array<i32>} : memref<64x256xf32, #tpu.memory_space<vmem>>, vector<32x256xf32>,
    return
  }
  func.func @transform_0(%arg0: i32) -> (i32, i32) {
    %c0_i32 = arith.constant 0 : i32
    %c0_i32_0 = arith.constant 0 : i32
    return %arg0, %c0_i32 : i32, i32
  }
  func.func @transform_1(%arg0: i32) -> (i32, i32) {
    %c0_i32 = arith.constant 0 : i32
    %c0_i32_0 = arith.constant 0 : i32
    %c0_i32_1 = arith.constant 0 : i32
    return %c0_i32, %c0_i32_0 : i32, i32
  }
  func.func @transform_2(%arg0: i32) -> (i32, i32) {
    %c0_i32 = arith.constant 0 : i32
    %c0_i32_0 = arith.constant 0 : i32
    %c0_i32_1 = arith.constant 0 : i32
    return %c0_i32, %c0_i32_0 : i32, i32
  }
  func.func @transform_3(%arg0: i32) -> (i32, i32) {
    %c0_i32 = arith.constant 0 : i32
    %c0_i32_0 = arith.constant 0 : i32
    %c0_i32_1 = arith.constant 0 : i32
    return %c0_i32, %c0_i32_0 : i32, i32
  }
  func.func @transform_4(%arg0: i32) -> (i32, i32) {
    %c0_i32 = arith.constant 0 : i32
    %c0_i32_0 = arith.constant 0 : i32
    %c0_i32_1 = arith.constant 0 : i32
    return %c0_i32, %c0_i32_0 : i32, i32
  }
  func.func @transform_5(%arg0: i32) -> (i32, i32) {
    %c0_i32 = arith.constant 0 : i32
    %c0_i32_0 = arith.constant 0 : i32
    %c0_i32_1 = arith.constant 0 : i32
    return %c0_i32, %c0_i32_0 : i32, i32
  }
  func.func @transform_6(%arg0: i32) -> (i32, i32) {
    %c0_i32 = arith.constant 0 : i32
    %c0_i32_0 = arith.constant 0 : i32
    %c0_i32_1 = arith.constant 0 : i32
    return %c0_i32, %c0_i32_0 : i32, i32
  }
  func.func @transform_7(%arg0: i32) -> (i32, i32) {
    %c0_i32 = arith.constant 0 : i32
    %c0_i32_0 = arith.constant 0 : i32
    %c0_i32_1 = arith.constant 0 : i32
    return %c0_i32, %c0_i32_0 : i32, i32
  }
  func.func @transform_8(%arg0: i32) -> (i32, i32) {
    %c0_i32 = arith.constant 0 : i32
    %c0_i32_0 = arith.constant 0 : i32
    %c0_i32_1 = arith.constant 0 : i32
    return %c0_i32, %c0_i32_0 : i32, i32
  }
  func.func @transform_9(%arg0: i32) -> (i32, i32) {
    %c0_i32 = arith.constant 0 : i32
    %c0_i32_0 = arith.constant 0 : i32
    %c0_i32_1 = arith.constant 0 : i32
    return %c0_i32, %c0_i32_0 : i32, i32
  }
  func.func @transform_10(%arg0: i32) -> (i32, i32) {
    %c0_i32 = arith.constant 0 : i32
    %c0_i32_0 = arith.constant 0 : i32
    return %arg0, %c0_i32 : i32, i32
  }
}

</mosaic_0001>

<llo_original>
// kernel: tpu_custom_call.1
$region0: #{tpu_custom_call.1}
  #allocation0 [shape = 'u32[]', space=smem, size = 0x4, offset = 0x4, fixed_abs, tag = 'smem constant byte address 0x4 - core index']
  #allocation1 [shape = 'u32[72,128]{1,0:T(1,128)}', space=vmem, size = 0x9000, scoped, tag = 'internal scratch']
  %s0 = inlined_call_operand.hbm [shape: bf16[64,200], index: 0, kind: input, shape index: {}]
  %s1 = inlined_call_operand.hbm [shape: f32[8,512], index: 1, kind: input, shape index: {}]
  %s2 = inlined_call_operand.hbm [shape: bf16[200,512], index: 2, kind: input, shape index: {}]
  %s3 = inlined_call_operand.hbm [shape: bf16[512,256], index: 3, kind: input, shape index: {}]
  %s4 = inlined_call_operand.hbm [shape: bf16[256,128], index: 4, kind: input, shape index: {}]
  %s5 = inlined_call_operand.hbm [shape: bf16[128,128], index: 5, kind: input, shape index: {}]
  %s6 = inlined_call_operand.hbm [shape: bf16[128,128], index: 6, kind: input, shape index: {}]
  %s7 = inlined_call_operand.hbm [shape: bf16[128,256], index: 7, kind: input, shape index: {}]
  %s8 = inlined_call_operand.hbm [shape: bf16[256,512], index: 8, kind: input, shape index: {}]
  %s9 = inlined_call_operand.hbm [shape: bf16[512,256], index: 9, kind: input, shape index: {}]
  %s10 = inlined_call_operand.hbm [shape: f32[64,256], index: 10, kind: output, shape index: {}]
  %s11 = sld [smem:[#allocation0]]
  $region90: #{tpu_custom_call.1} parent=0
    _
  %s13 = ssub.s32 1, %s11
  %s14 = scalar_select 0, %s13, %s11
  $region1: #{tpu_custom_call.1} parent=0
    #allocation2 [shape = 'u8[32768]{0}', space=vmem, size = 0x8000, scoped, tag = 'input window, operand 0, single buffered']
    #allocation3 [shape = 's32[1]{0}', space=sflag, size = 0x4, scoped, tag = 'scoped memory for tpu_custom_call.1']
    #allocation4 [shape = 's32[1]{0}', space=sflag, size = 0x4, scoped, tag = 'scoped memory for tpu_custom_call.1']
    #allocation5 [shape = 'u8[16384]{0}', space=vmem, size = 0x4000, scoped, tag = 'input window, operand 1, single buffered']
    #allocation6 [shape = 's32[1]{0}', space=sflag, size = 0x4, scoped, tag = 'scoped memory for tpu_custom_call.1']
    #allocation7 [shape = 'u8[204800]{0}', space=vmem, size = 0x32000, scoped, tag = 'input window, operand 2, single buffered']
    #allocation8 [shape = 'u8[262144]{0}', space=vmem, size = 0x40000, scoped, tag = 'input window, operand 3, single buffered']
    #allocation9 [shape = 's32[1]{0}', space=sflag, size = 0x4, scoped, tag = 'scoped memory for tpu_custom_call.1']
    #allocation10 [shape = 'u8[65536]{0}', space=vmem, size = 0x10000, scoped, tag = 'input window, operand 4, single buffered']
    #allocation11 [shape = 'u8[32768]{0}', space=vmem, size = 0x8000, scoped, tag = 'input window, operand 5, single buffered']
    #allocation12 [shape = 's32[1]{0}', space=sflag, size = 0x4, scoped, tag = 'scoped memory for tpu_custom_call.1']
    #allocation13 [shape = 'u8[32768]{0}', space=vmem, size = 0x8000, scoped, tag = 'input window, operand 6, single buffered']
    #allocation14 [shape = 'u8[65536]{0}', space=vmem, size = 0x10000, scoped, tag = 'input window, operand 7, single buffered']
    #allocation15 [shape = 's32[1]{0}', space=sflag, size = 0x4, scoped, tag = 'scoped memory for tpu_custom_call.1']
    #allocation16 [shape = 'u8[262144]{0}', space=vmem, size = 0x40000, scoped, tag = 'input window, operand 8, single buffered']
    #allocation17 [shape = 'u8[262144]{0}', space=vmem, size = 0x40000, scoped, tag = 'input window, operand 9, single buffered']
    #allocation18 [shape = 's32[1]{0}', space=sflag, size = 0x4, scoped, tag = 'scoped memory for tpu_custom_call.1']
    #allocation19 [shape = 'u8[65536]{0}', space=vmem, size = 0x10000, scoped, tag = 'output window, operand 0, single buffered']
    %15 = vsyncpa [#allocation3], 0
    %16 = vsyncpa [#allocation6], 0
    %17 = vsyncpa [#allocation9], 0
    %18 = vsyncpa [#allocation12], 0
    %19 = vsyncpa [#allocation15], 0
    %20 = vsyncpa [#allocation18], 0
    %21 = vsyncpa [#allocation4], 0
    // Predicated region
    $region2: #{tpu_custom_call.1} parent=1 // pred_check
      _
    $region3: #{tpu_custom_call.1} parent=1 // pred_check_branch
      %23 = sbr.rel (0) target = $region5
    $region4: #{tpu_custom_call.1} parent=1 // pred_region
      %25 = vsyncadd [#allocation3], 0
      %s26 = sshll.u32 %s0, 4
      %s27 = int_to_ptr.hbm [resolvable:$true] %s26
      %s28 = sshll.u32 [#allocation2], 4
      %s29 = int_to_ptr.vmem [resolvable:$true] %s28
      %34 = dma.hbm_to_vmem [thread:$0]  %s27, 1024, %s29, [#allocation3], 128, 128, 8
    $region5: #{tpu_custom_call.1} parent=1 // pred_fallthru
      _
    // Predicated region
    $region6: #{tpu_custom_call.1} parent=1 // pred_check
      _
    $region7: #{tpu_custom_call.1} parent=1 // pred_check_branch
      %36 = sbr.rel (0) target = $region9
    $region8: #{tpu_custom_call.1} parent=1 // pred_region
      %38 = vsyncadd [#allocation6], 0
      %s40 = sshll.u32 %s1, 4
      %s41 = int_to_ptr.hbm [resolvable:$true] %s40
      %s42 = sshll.u32 [#allocation5], 4
      %s43 = int_to_ptr.vmem [resolvable:$true] %s42
      %45 = dma.hbm_to_vmem [thread:$0]  %s41, 512, %s43, [#allocation6]
    $region9: #{tpu_custom_call.1} parent=1 // pred_fallthru
      _
    // Predicated region
    $region10: #{tpu_custom_call.1} parent=1 // pred_check
      _
    $region11: #{tpu_custom_call.1} parent=1 // pred_check_branch
      %47 = sbr.rel (0) target = $region13
    $region12: #{tpu_custom_call.1} parent=1 // pred_region
      %49 = vsyncadd [#allocation6], 0
      %s50 = sshll.u32 %s2, 4
      %s51 = int_to_ptr.hbm [resolvable:$true] %s50
      %s52 = sshll.u32 [#allocation7], 4
      %s53 = int_to_ptr.vmem [resolvable:$true] %s52
      %58 = dma.hbm_to_vmem [thread:$0]  %s51, 6400, %s53, [#allocation6], 256, 256, 16
    $region13: #{tpu_custom_call.1} parent=1 // pred_fallthru
      _
    // Predicated region
    $region14: #{tpu_custom_call.1} parent=1 // pred_check
      _
    $region15: #{tpu_custom_call.1} parent=1 // pred_check_branch
      %60 = sbr.rel (0) target = $region17
    $region16: #{tpu_custom_call.1} parent=1 // pred_region
      %62 = vsyncadd [#allocation9], 0
      %s63 = sshll.u32 %s3, 4
      %s64 = int_to_ptr.hbm [resolvable:$true] %s63
      %s65 = sshll.u32 [#allocation8], 4
      %s66 = int_to_ptr.vmem [resolvable:$true] %s65
      %71 = dma.hbm_to_vmem [thread:$0]  %s64, 8192, %s66, [#allocation9], 128, 128, 8
    $region17: #{tpu_custom_call.1} parent=1 // pred_fallthru
      _
    // Predicated region
    $region18: #{tpu_custom_call.1} parent=1 // pred_check
      _
    $region19: #{tpu_custom_call.1} parent=1 // pred_check_branch
      %73 = sbr.rel (0) target = $region21
    $region20: #{tpu_custom_call.1} parent=1 // pred_region
      %75 = vsyncadd [#allocation9], 0
      %s76 = sshll.u32 %s4, 4
      %s77 = int_to_ptr.hbm [resolvable:$true] %s76
      %s78 = sshll.u32 [#allocation10], 4
      %s79 = int_to_ptr.vmem [resolvable:$true] %s78
      %84 = dma.hbm_to_vmem [thread:$0]  %s77, 2048, %s79, [#allocation9], 64, 64, 4
    $region21: #{tpu_custom_call.1} parent=1 // pred_fallthru
      _
    // Predicated region
    $region22: #{tpu_custom_call.1} parent=1 // pred_check
      _
    $region23: #{tpu_custom_call.1} parent=1 // pred_check_branch
      %86 = sbr.rel (0) target = $region25
    $region24: #{tpu_custom_call.1} parent=1 // pred_region
      %88 = vsyncadd [#allocation12], 0
      %s89 = sshll.u32 %s5, 4
      %s90 = int_to_ptr.hbm [resolvable:$true] %s89
      %s91 = sshll.u32 [#allocation11], 4
      %s92 = int_to_ptr.vmem [resolvable:$true] %s91
      %97 = dma.hbm_to_vmem [thread:$0]  %s90, 1024, %s92, [#allocation12], 64, 64, 4
    $region25: #{tpu_custom_call.1} parent=1 // pred_fallthru
      _
    // Predicated region
    $region26: #{tpu_custom_call.1} parent=1 // pred_check
      _
    $region27: #{tpu_custom_call.1} parent=1 // pred_check_branch
      %99 = sbr.rel (0) target = $region29
    $region28: #{tpu_custom_call.1} parent=1 // pred_region
      %101 = vsyncadd [#allocation12], 0
      %s102 = sshll.u32 %s6, 4
      %s103 = int_to_ptr.hbm [resolvable:$true] %s102
      %s104 = sshll.u32 [#allocation13], 4
      %s105 = int_to_ptr.vmem [resolvable:$true] %s104
      %110 = dma.hbm_to_vmem [thread:$0]  %s103, 1024, %s105, [#allocation12], 64, 64, 4
    $region29: #{tpu_custom_call.1} parent=1 // pred_fallthru
      _
    // Predicated region
    $region30: #{tpu_custom_call.1} parent=1 // pred_check
      _
    $region31: #{tpu_custom_call.1} parent=1 // pred_check_branch
      %112 = sbr.rel (0) target = $region33
    $region32: #{tpu_custom_call.1} parent=1 // pred_region
      %114 = vsyncadd [#allocation15], 0
      %s115 = sshll.u32 %s7, 4
      %s116 = int_to_ptr.hbm [resolvable:$true] %s115
      %s117 = sshll.u32 [#allocation14], 4
      %s118 = int_to_ptr.vmem [resolvable:$true] %s117
      %123 = dma.hbm_to_vmem [thread:$0]  %s116, 2048, %s118, [#allocation15], 128, 128, 8
    $region33: #{tpu_custom_call.1} parent=1 // pred_fallthru
      _
    // Predicated region
    $region34: #{tpu_custom_call.1} parent=1 // pred_check
      _
    $region35: #{tpu_custom_call.1} parent=1 // pred_check_branch
      %125 = sbr.rel (0) target = $region37
    $region36: #{tpu_custom_call.1} parent=1 // pred_region
      %127 = vsyncadd [#allocation15], 0
      %s128 = sshll.u32 %s8, 4
      %s129 = int_to_ptr.hbm [resolvable:$true] %s128
      %s130 = sshll.u32 [#allocation16], 4
      %s131 = int_to_ptr.vmem [resolvable:$true] %s130
      %136 = dma.hbm_to_vmem [thread:$0]  %s129, 8192, %s131, [#allocation15], 256, 256, 16
    $region37: #{tpu_custom_call.1} parent=1 // pred_fallthru
      _
    // Predicated region
    $region38: #{tpu_custom_call.1} parent=1 // pred_check
      _
    $region39: #{tpu_custom_call.1} parent=1 // pred_check_branch
      %138 = sbr.rel (0) target = $region41
    $region40: #{tpu_custom_call.1} parent=1 // pred_region
      %140 = vsyncadd [#allocation18], 0
      %s141 = sshll.u32 %s9, 4
      %s142 = int_to_ptr.hbm [resolvable:$true] %s141
      %s143 = sshll.u32 [#allocation17], 4
      %s144 = int_to_ptr.vmem [resolvable:$true] %s143
      %149 = dma.hbm_to_vmem [thread:$0]  %s142, 8192, %s144, [#allocation18], 128, 128, 8
    $region41: #{tpu_custom_call.1} parent=1 // pred_fallthru
      _
    // Predicated region
    $region42: #{tpu_custom_call.1} parent=1 // pred_check
      _
    $region43: #{tpu_custom_call.1} parent=1 // pred_check_branch
      %151 = sbr.rel (0) target = $region45
    $region44: #{tpu_custom_call.1} parent=1 // pred_region
      %153 = dma.done [#allocation3], 1024
    $region45: #{tpu_custom_call.1} parent=1 // pred_fallthru
      _
    // Predicated region
    $region46: #{tpu_custom_call.1} parent=1 // pred_check
      _
    $region47: #{tpu_custom_call.1} parent=1 // pred_check_branch
      %155 = sbr.rel (0) target = $region49
    $region48: #{tpu_custom_call.1} parent=1 // pred_region
      %157 = dma.done [#allocation6], 512
    $region49: #{tpu_custom_call.1} parent=1 // pred_fallthru
      _
    // Predicated region
    $region50: #{tpu_custom_call.1} parent=1 // pred_check
      _
    $region51: #{tpu_custom_call.1} parent=1 // pred_check_branch
      %159 = sbr.rel (0) target = $region53
    $region52: #{tpu_custom_call.1} parent=1 // pred_region
      %161 = dma.done [#allocation6], 6400
    $region53: #{tpu_custom_call.1} parent=1 // pred_fallthru
      _
    // Predicated region
    $region54: #{tpu_custom_call.1} parent=1 // pred_check
      _
    $region55: #{tpu_custom_call.1} parent=1 // pred_check_branch
      %163 = sbr.rel (0) target = $region57
    $region56: #{tpu_custom_call.1} parent=1 // pred_region
      %165 = dma.done [#allocation9], 8192
    $region57: #{tpu_custom_call.1} parent=1 // pred_fallthru
      _
    // Predicated region
    $region58: #{tpu_custom_call.1} parent=1 // pred_check
      _
    $region59: #{tpu_custom_call.1} parent=1 // pred_check_branch
      %167 = sbr.rel (0) target = $region61
    $region60: #{tpu_custom_call.1} parent=1 // pred_region
      %169 = dma.done [#allocation9], 2048
    $region61: #{tpu_custom_call.1} parent=1 // pred_fallthru
      _
    // Predicated region
    $region62: #{tpu_custom_call.1} parent=1 // pred_check
      _
    $region63: #{tpu_custom_call.1} parent=1 // pred_check_branch
      %171 = sbr.rel (0) target = $region65
    $region64: #{tpu_custom_call.1} parent=1 // pred_region
      %173 = dma.done [#allocation12], 1024
    $region65: #{tpu_custom_call.1} parent=1 // pred_fallthru
      _
    // Predicated region
    $region66: #{tpu_custom_call.1} parent=1 // pred_check
      _
    $region67: #{tpu_custom_call.1} parent=1 // pred_check_branch
      %175 = sbr.rel (0) target = $region69
    $region68: #{tpu_custom_call.1} parent=1 // pred_region
      %177 = dma.done [#allocation12], 1024
    $region69: #{tpu_custom_call.1} parent=1 // pred_fallthru
      _
    // Predicated region
    $region70: #{tpu_custom_call.1} parent=1 // pred_check
      _
    $region71: #{tpu_custom_call.1} parent=1 // pred_check_branch
      %179 = sbr.rel (0) target = $region73
    $region72: #{tpu_custom_call.1} parent=1 // pred_region
      %181 = dma.done [#allocation15], 2048
    $region73: #{tpu_custom_call.1} parent=1 // pred_fallthru
      _
    // Predicated region
    $region74: #{tpu_custom_call.1} parent=1 // pred_check
      _
    $region75: #{tpu_custom_call.1} parent=1 // pred_check_branch
      %183 = sbr.rel (0) target = $region77
    $region76: #{tpu_custom_call.1} parent=1 // pred_region
      %185 = dma.done [#allocation15], 8192
    $region77: #{tpu_custom_call.1} parent=1 // pred_fallthru
      _
    // Predicated region
    $region78: #{tpu_custom_call.1} parent=1 // pred_check
      _
    $region79: #{tpu_custom_call.1} parent=1 // pred_check_branch
      %187 = sbr.rel (0) target = $region81
    $region80: #{tpu_custom_call.1} parent=1 // pred_region
      %189 = dma.done [#allocation18], 8192
    $region81: #{tpu_custom_call.1} parent=1 // pred_fallthru
      _
    %v191 = vld [vmem:[#allocation2] sm:$0xff]
    %v192 = vld [vmem:[#allocation2 + $0x8] sm:$0xff]
    %v193 = vld [vmem:[#allocation2 + $0x10] sm:$0xff]
    %v194 = vld [vmem:[#allocation2 + $0x18] sm:$0xff]
    %v195 = vld [vmem:[#allocation2 + $0x20] sm:$0xff]
    %v196 = vld [vmem:[#allocation2 + $0x28] sm:$0xff]
    %v197 = vld [vmem:[#allocation2 + $0x30] sm:$0xff]
    %v198 = vld [vmem:[#allocation2 + $0x38] sm:$0xff]
    %v199 = vld [vmem:[#allocation7] sm:$0xff]
    %v200 = vld [vmem:[#allocation7 + $0x8] sm:$0xff]
    %v201 = vld [vmem:[#allocation7 + $0x10] sm:$0xff]
    %v202 = vld [vmem:[#allocation7 + $0x18] sm:$0xff]
    %v203 = vld [vmem:[#allocation7 + $0x20] sm:$0xff]
    %v204 = vld [vmem:[#allocation7 + $0x28] sm:$0xff]
    %v205 = vld [vmem:[#allocation7 + $0x30] sm:$0xff]
    %v206 = vld [vmem:[#allocation7 + $0x38] sm:$0xff]
    %v207 = vld [vmem:[#allocation7 + $0x40] sm:$0xff]
    %v208 = vld [vmem:[#allocation7 + $0x48] sm:$0xff]
    %v209 = vld [vmem:[#allocation7 + $0x50] sm:$0xff]
    %v210 = vld [vmem:[#allocation7 + $0x58] sm:$0xff]
    %v211 = vld [vmem:[#allocation7 + $0x60] sm:$0xff]
    %v212 = vld [vmem:[#allocation7 + $0x68] sm:$0xff]
    %v213 = vld [vmem:[#allocation7 + $0x70] sm:$0xff]
    %v214 = vld [vmem:[#allocation7 + $0x78] sm:$0xff]
    %v215 = vld [vmem:[#allocation7 + $0x80] sm:$0xff]
    %v216 = vld [vmem:[#allocation7 + $0x88] sm:$0xff]
    %v217 = vld [vmem:[#allocation7 + $0x90] sm:$0xff]
    %v218 = vld [vmem:[#allocation7 + $0x98] sm:$0xff]
    %v219 = vld [vmem:[#allocation7 + $0xa0] sm:$0xff]
    %v220 = vld [vmem:[#allocation7 + $0xa8] sm:$0xff]
    %v221 = vld [vmem:[#allocation7 + $0xb0] sm:$0xff]
    %v222 = vld [vmem:[#allocation7 + $0xb8] sm:$0xff]
    %v223 = vld [vmem:[#allocation7 + $0xc0] sm:$0xff]
    %v224 = vld [vmem:[#allocation7 + $0xc8] sm:$0xff]
    %v225 = vld [vmem:[#allocation7 + $0xd0] sm:$0xff]
    %v226 = vld [vmem:[#allocation7 + $0xd8] sm:$0xff]
    %v227 = vld [vmem:[#allocation7 + $0xe0] sm:$0xff]
    %v228 = vld [vmem:[#allocation7 + $0xe8] sm:$0xff]
    %v229 = vld [vmem:[#allocation7 + $0xf0] sm:$0xff]
    %v230 = vld [vmem:[#allocation7 + $0xf8] sm:$0xff]
    %v231 = vld [vmem:[#allocation7 + $0x100] sm:$0xff]
    %v232 = vld [vmem:[#allocation7 + $0x108] sm:$0xff]
    %v233 = vld [vmem:[#allocation7 + $0x110] sm:$0xff]
    %v234 = vld [vmem:[#allocation7 + $0x118] sm:$0xff]
    %v235 = vld [vmem:[#allocation7 + $0x120] sm:$0xff]
    %v236 = vld [vmem:[#allocation7 + $0x128] sm:$0xff]
    %v237 = vld [vmem:[#allocation7 + $0x130] sm:$0xff]
    %v238 = vld [vmem:[#allocation7 + $0x138] sm:$0xff]
    %v239 = vld [vmem:[#allocation7 + $0x140] sm:$0xff]
    %v240 = vld [vmem:[#allocation7 + $0x148] sm:$0xff]
    %v241 = vld [vmem:[#allocation7 + $0x150] sm:$0xff]
    %v242 = vld [vmem:[#allocation7 + $0x158] sm:$0xff]
    %v243 = vld [vmem:[#allocation7 + $0x160] sm:$0xff]
    %v244 = vld [vmem:[#allocation7 + $0x168] sm:$0xff]
    %v245 = vld [vmem:[#allocation7 + $0x170] sm:$0xff]
    %v246 = vld [vmem:[#allocation7 + $0x178] sm:$0xff]
    %v247 = vld [vmem:[#allocation7 + $0x180] sm:$0xff]
    %v248 = vld [vmem:[#allocation7 + $0x188] sm:$0xff]
    %v249 = vld [vmem:[#allocation5] ss:$8 sm:$0xf]
    %v251 = vperm.slane %v249, 0
    %v252 = vperm.slane %v249, 1
    %v253 = vperm.slane %v249, 2
    %v254 = vperm.slane %v249, 3
    %v259 = vpack.c.bf16 %v252, %v251
    %v260 = vpack.c.bf16 %v254, %v253
    %v265 = vunpack.c.l.b16 %v191
    %v266 = vunpack.c.h.b16 %v191
    %v267 = vunpack.c.l.b16 %v192
    %v268 = vunpack.c.h.b16 %v192
    %v269 = vunpack.c.l.b16 %v193
    %v270 = vunpack.c.h.b16 %v193
    %v271 = vunpack.c.l.b16 %v194
    %v272 = vunpack.c.h.b16 %v194
    %v273 = vpack.c.b16 %v267, %v265
    %v274 = vpack.c.b16 %v268, %v266
    %v275 = vpack.c.b16 %v271, %v269
    %v276 = vpack.c.b16 %v272, %v270
    %v329 = vunpack.c.l.b16 %v199
    %v330 = vunpack.c.h.b16 %v199
    %v331 = vunpack.c.l.b16 %v200
    %v332 = vunpack.c.h.b16 %v200
    %v333 = vunpack.c.l.b16 %v201
    %v334 = vunpack.c.h.b16 %v201
    %v335 = vunpack.c.l.b16 %v202
    %v336 = vunpack.c.h.b16 %v202
    %v337 = vunpack.c.l.b16 %v203
    %v338 = vunpack.c.h.b16 %v203
    %v339 = vunpack.c.l.b16 %v204
    %v340 = vunpack.c.h.b16 %v204
    %v341 = vunpack.c.l.b16 %v205
    %v342 = vunpack.c.h.b16 %v205
    %v343 = vunpack.c.l.b16 %v206
    %v344 = vunpack.c.h.b16 %v206
    %v345 = vunpack.c.l.b16 %v207
    %v346 = vunpack.c.h.b16 %v207
    %v347 = vunpack.c.l.b16 %v208
    %v348 = vunpack.c.h.b16 %v208
    %v349 = vunpack.c.l.b16 %v209
    %v350 = vunpack.c.h.b16 %v209
    %v351 = vunpack.c.l.b16 %v210
    %v352 = vunpack.c.h.b16 %v210
    %v353 = vunpack.c.l.b16 %v211
    %v354 = vunpack.c.h.b16 %v211
    %v355 = vunpack.c.l.b16 %v212
    %v356 = vunpack.c.h.b16 %v212
    %v357 = vunpack.c.l.b16 %v213
    %v358 = vunpack.c.h.b16 %v213
    %v359 = vunpack.c.l.b16 %v214
    %v360 = vunpack.c.h.b16 %v214
    %v361 = vunpack.c.l.b16 %v215
    %v362 = vunpack.c.h.b16 %v215
    %v363 = vunpack.c.l.b16 %v216
    %v364 = vunpack.c.h.b16 %v216
    %v365 = vunpack.c.l.b16 %v217
    %v366 = vunpack.c.h.b16 %v217
    %v367 = vunpack.c.l.b16 %v218
    %v368 = vunpack.c.h.b16 %v218
    %v369 = vunpack.c.l.b16 %v219
    %v370 = vunpack.c.h.b16 %v219
    %v371 = vunpack.c.l.b16 %v220
    %v372 = vunpack.c.h.b16 %v220
    %v373 = vunpack.c.l.b16 %v221
    %v374 = vunpack.c.h.b16 %v221
    %v375 = vunpack.c.l.b16 %v222
    %v376 = vunpack.c.h.b16 %v222
    %v377 = vunpack.c.l.b16 %v223
    %v378 = vunpack.c.h.b16 %v223
    %v379 = vunpack.c.l.b16 %v224
    %v380 = vunpack.c.h.b16 %v224
    %v381 = vunpack.c.l.b16 %v225
    %v382 = vunpack.c.h.b16 %v225
    %v383 = vunpack.c.l.b16 %v226
    %v384 = vunpack.c.h.b16 %v226
    %v385 = vunpack.c.l.b16 %v227
    %v386 = vunpack.c.h.b16 %v227
    %v387 = vunpack.c.l.b16 %v228
    %v388 = vunpack.c.h.b16 %v228
    %v389 = vunpack.c.l.b16 %v229
    %v390 = vunpack.c.h.b16 %v229
    %v391 = vunpack.c.l.b16 %v230
    %v392 = vunpack.c.h.b16 %v230
    %v393 = vunpack.c.l.b16 %v231
    %v394 = vunpack.c.h.b16 %v231
    %v395 = vunpack.c.l.b16 %v232
    %v396 = vunpack.c.h.b16 %v232
    %v397 = vunpack.c.l.b16 %v233
    %v398 = vunpack.c.h.b16 %v233
    %v399 = vunpack.c.l.b16 %v234
    %v400 = vunpack.c.h.b16 %v234
    %v401 = vunpack.c.l.b16 %v235
    %v402 = vunpack.c.h.b16 %v235
    %v403 = vunpack.c.l.b16 %v236
    %v404 = vunpack.c.h.b16 %v236
    %v405 = vunpack.c.l.b16 %v237
    %v406 = vunpack.c.h.b16 %v237
    %v407 = vunpack.c.l.b16 %v238
    %v408 = vunpack.c.h.b16 %v238
    %v409 = vunpack.c.l.b16 %v239
    %v410 = vunpack.c.h.b16 %v239
    %v411 = vunpack.c.l.b16 %v240
    %v412 = vunpack.c.h.b16 %v240
    %v413 = vunpack.c.l.b16 %v241
    %v414 = vunpack.c.h.b16 %v241
    %v415 = vunpack.c.l.b16 %v242
    %v416 = vunpack.c.h.b16 %v242
    %v417 = vunpack.c.l.b16 %v243
    %v418 = vunpack.c.h.b16 %v243
    %v419 = vunpack.c.l.b16 %v244
    %v420 = vunpack.c.h.b16 %v244
    %v421 = vunpack.c.l.b16 %v245
    %v422 = vunpack.c.h.b16 %v245
    %v423 = vunpack.c.l.b16 %v246
    %v424 = vunpack.c.h.b16 %v246
    %v425 = vunpack.c.l.b16 %v247
    %v426 = vunpack.c.h.b16 %v247
    %v427 = vunpack.c.l.b16 %v248
    %v428 = vunpack.c.h.b16 %v248
    %v429 = vpack.c.b16 %v333, %v329
    %v430 = vpack.c.b16 %v334, %v330
    %v431 = vpack.c.b16 %v335, %v331
    %v432 = vpack.c.b16 %v336, %v332
    %v433 = vpack.c.b16 %v341, %v337
    %v434 = vpack.c.b16 %v342, %v338
    %v435 = vpack.c.b16 %v343, %v339
    %v436 = vpack.c.b16 %v344, %v340
    %v437 = vpack.c.b16 %v349, %v345
    %v438 = vpack.c.b16 %v350, %v346
    %v439 = vpack.c.b16 %v351, %v347
    %v440 = vpack.c.b16 %v352, %v348
    %v441 = vpack.c.b16 %v357, %v353
    %v442 = vpack.c.b16 %v358, %v354
    %v443 = vpack.c.b16 %v359, %v355
    %v444 = vpack.c.b16 %v360, %v356
    %v445 = vpack.c.b16 %v365, %v361
    %v446 = vpack.c.b16 %v366, %v362
    %v447 = vpack.c.b16 %v367, %v363
    %v448 = vpack.c.b16 %v368, %v364
    %v449 = vpack.c.b16 %v373, %v369
    %v450 = vpack.c.b16 %v374, %v370
    %v451 = vpack.c.b16 %v375, %v371
    %v452 = vpack.c.b16 %v376, %v372
    %v453 = vpack.c.b16 %v381, %v377
    %v454 = vpack.c.b16 %v382, %v378
    %v455 = vpack.c.b16 %v383, %v379
    %v456 = vpack.c.b16 %v384, %v380
    %v457 = vpack.c.b16 %v389, %v385
    %v458 = vpack.c.b16 %v390, %v386
    %v459 = vpack.c.b16 %v391, %v387
    %v460 = vpack.c.b16 %v392, %v388
    %v461 = vpack.c.b16 %v397, %v393
    %v462 = vpack.c.b16 %v398, %v394
    %v463 = vpack.c.b16 %v399, %v395
    %v464 = vpack.c.b16 %v400, %v396
    %v465 = vpack.c.b16 %v405, %v401
    %v466 = vpack.c.b16 %v406, %v402
    %v467 = vpack.c.b16 %v407, %v403
    %v468 = vpack.c.b16 %v408, %v404
    %v469 = vpack.c.b16 %v413, %v409
    %v470 = vpack.c.b16 %v414, %v410
    %v471 = vpack.c.b16 %v415, %v411
    %v472 = vpack.c.b16 %v416, %v412
    %v473 = vpack.c.b16 %v421, %v417
    %v474 = vpack.c.b16 %v422, %v418
    %v475 = vpack.c.b16 %v423, %v419
    %v476 = vpack.c.b16 %v424, %v420
    %v477 = vpack.c.b16 %v425, %v425
    %v478 = vpack.c.b16 %v426, %v426
    %v479 = vpack.c.b16 %v427, %v427
    %v480 = vpack.c.b16 %v428, %v428
    %vm529 = vcmask 588800
    %v531 = vsel %vm529, %v274, 0
    %v534 = vsel %vm529, %v276, 0
    %vm536 = vcmask 1043456
    %v538 = vsel %vm536, %v477, 0
    %v541 = vsel %vm536, %v478, 0
    %v544 = vsel %vm536, %v479, 0
    %v547 = vsel %vm536, %v480, 0
    %549 = vmatpush.bf16.msra.mxu0 %v457
    %550 = vmatpush.bf16.msra.mxu0 %v453
    %551 = vmatpush.bf16.msra.mxu0 %v449
    %552 = vmatpush.bf16.msra.mxu0 %v445
    %553 = vmatpush.bf16.msra.mxu0 %v441
    %554 = vmatpush.bf16.msra.mxu0 %v437
    %555 = vmatpush.bf16.msra.mxu0 %v433
    %556 = vmatpush.bf16.msra.mxu0 %v429
    %557 = vmatmul.bf16.gmra.mxu0 %v273
    %v558 = vpop.f32.mrf.mxu0
    %v559 = vadd.f32 0.0, %v558
    %v560 = vpop.f32.mrf.mxu0
    %v561 = vadd.f32 0.0, %v560
    %562 = vmatmul.bf16.gmra.mxu0 %v275
    %v563 = vpop.f32.mrf.mxu0
    %v564 = vadd.f32 0.0, %v563
    %v565 = vpop.f32.mrf.mxu0
    %v566 = vadd.f32 0.0, %v565
    %567 = vdwg.mxu0
    %568 = vmatpush.bf16.msra.mxu0 0
    %569 = vmatpush.bf16.msra.mxu0 0
    %570 = vmatpush.bf16.msra.mxu0 0
    %571 = vmatpush.bf16.msra.mxu0 %v538
    %572 = vmatpush.bf16.msra.mxu0 %v473
    %573 = vmatpush.bf16.msra.mxu0 %v469
    %574 = vmatpush.bf16.msra.mxu0 %v465
    %575 = vmatpush.bf16.msra.mxu0 %v461
    %576 = vmatmul.bf16.gmra.mxu0 %v531
    %v577 = vpop.f32.mrf.mxu0
    %v578 = vadd.f32 %v559, %v577
    %v579 = vpop.f32.mrf.mxu0
    %v580 = vadd.f32 %v561, %v579
    %581 = vmatmul.bf16.gmra.mxu0 %v534
    %v582 = vpop.f32.mrf.mxu0
    %v583 = vadd.f32 %v564, %v582
    %v584 = vpop.f32.mrf.mxu0
    %v585 = vadd.f32 %v566, %v584
    %586 = vdwg.mxu0
    %587 = vmatpush.bf16.msra.mxu0 %v458
    %588 = vmatpush.bf16.msra.mxu0 %v454
    %589 = vmatpush.bf16.msra.mxu0 %v450
    %590 = vmatpush.bf16.msra.mxu0 %v446
    %591 = vmatpush.bf16.msra.mxu0 %v442
    %592 = vmatpush.bf16.msra.mxu0 %v438
    %593 = vmatpush.bf16.msra.mxu0 %v434
    %594 = vmatpush.bf16.msra.mxu0 %v430
    %595 = vmatmul.bf16.gmra.mxu0 %v273
    %v596 = vpop.f32.mrf.mxu0
    %v597 = vadd.f32 0.0, %v596
    %v598 = vpop.f32.mrf.mxu0
    %v599 = vadd.f32 0.0, %v598
    %600 = vmatmul.bf16.gmra.mxu0 %v275
    %v601 = vpop.f32.mrf.mxu0
    %v602 = vadd.f32 0.0, %v601
    %v603 = vpop.f32.mrf.mxu0
    %v604 = vadd.f32 0.0, %v603
    %605 = vdwg.mxu0
    %606 = vmatpush.bf16.msra.mxu0 0
    %607 = vmatpush.bf16.msra.mxu0 0
    %608 = vmatpush.bf16.msra.mxu0 0
    %609 = vmatpush.bf16.msra.mxu0 %v541
    %610 = vmatpush.bf16.msra.mxu0 %v474
    %611 = vmatpush.bf16.msra.mxu0 %v470
    %612 = vmatpush.bf16.msra.mxu0 %v466
    %613 = vmatpush.bf16.msra.mxu0 %v462
    %614 = vmatmul.bf16.gmra.mxu0 %v531
    %v615 = vpop.f32.mrf.mxu0
    %v616 = vadd.f32 %v597, %v615
    %v617 = vpop.f32.mrf.mxu0
    %v618 = vadd.f32 %v599, %v617
    %619 = vmatmul.bf16.gmra.mxu0 %v534
    %v620 = vpop.f32.mrf.mxu0
    %v621 = vadd.f32 %v602, %v620
    %v622 = vpop.f32.mrf.mxu0
    %v623 = vadd.f32 %v604, %v622
    %624 = vdwg.mxu0
    %625 = vmatpush.bf16.msra.mxu0 %v459
    %626 = vmatpush.bf16.msra.mxu0 %v455
    %627 = vmatpush.bf16.msra.mxu0 %v451
    %628 = vmatpush.bf16.msra.mxu0 %v447
    %629 = vmatpush.bf16.msra.mxu0 %v443
    %630 = vmatpush.bf16.msra.mxu0 %v439
    %631 = vmatpush.bf16.msra.mxu0 %v435
    %632 = vmatpush.bf16.msra.mxu0 %v431
    %633 = vmatmul.bf16.gmra.mxu0 %v273
    %v634 = vpop.f32.mrf.mxu0
    %v635 = vadd.f32 0.0, %v634
    %v636 = vpop.f32.mrf.mxu0
    %v637 = vadd.f32 0.0, %v636
    %638 = vmatmul.bf16.gmra.mxu0 %v275
    %v639 = vpop.f32.mrf.mxu0
    %v640 = vadd.f32 0.0, %v639
    %v641 = vpop.f32.mrf.mxu0
    %v642 = vadd.f32 0.0, %v641
    %643 = vdwg.mxu0
    %644 = vmatpush.bf16.msra.mxu0 0
    %645 = vmatpush.bf16.msra.mxu0 0
    %646 = vmatpush.bf16.msra.mxu0 0
    %647 = vmatpush.bf16.msra.mxu0 %v544
    %648 = vmatpush.bf16.msra.mxu0 %v475
    %649 = vmatpush.bf16.msra.mxu0 %v471
    %650 = vmatpush.bf16.msra.mxu0 %v467
    %651 = vmatpush.bf16.msra.mxu0 %v463
    %652 = vmatmul.bf16.gmra.mxu0 %v531
    %v653 = vpop.f32.mrf.mxu0
    %v654 = vadd.f32 %v635, %v653
    %v655 = vpop.f32.mrf.mxu0
    %v656 = vadd.f32 %v637, %v655
    %657 = vmatmul.bf16.gmra.mxu0 %v534
    %v658 = vpop.f32.mrf.mxu0
    %v659 = vadd.f32 %v640, %v658
    %v660 = vpop.f32.mrf.mxu0
    %v661 = vadd.f32 %v642, %v660
    %662 = vdwg.mxu0
    %663 = vmatpush.bf16.msra.mxu0 %v460
    %664 = vmatpush.bf16.msra.mxu0 %v456
    %665 = vmatpush.bf16.msra.mxu0 %v452
    %666 = vmatpush.bf16.msra.mxu0 %v448
    %667 = vmatpush.bf16.msra.mxu0 %v444
    %668 = vmatpush.bf16.msra.mxu0 %v440
    %669 = vmatpush.bf16.msra.mxu0 %v436
    %670 = vmatpush.bf16.msra.mxu0 %v432
    %671 = vmatmul.bf16.gmra.mxu0 %v273
    %v672 = vpop.f32.mrf.mxu0
    %v673 = vadd.f32 0.0, %v672
    %v674 = vpop.f32.mrf.mxu0
    %v675 = vadd.f32 0.0, %v674
    %676 = vmatmul.bf16.gmra.mxu0 %v275
    %v677 = vpop.f32.mrf.mxu0
    %v678 = vadd.f32 0.0, %v677
    %v679 = vpop.f32.mrf.mxu0
    %v680 = vadd.f32 0.0, %v679
    %681 = vdwg.mxu0
    %682 = vmatpush.bf16.msra.mxu0 0
    %683 = vmatpush.bf16.msra.mxu0 0
    %684 = vmatpush.bf16.msra.mxu0 0
    %685 = vmatpush.bf16.msra.mxu0 %v547
    %686 = vmatpush.bf16.msra.mxu0 %v476
    %687 = vmatpush.bf16.msra.mxu0 %v472
    %688 = vmatpush.bf16.msra.mxu0 %v468
    %689 = vmatpush.bf16.msra.mxu0 %v464
    %690 = vmatmul.bf16.gmra.mxu0 %v531
    %v691 = vpop.f32.mrf.mxu0
    %v692 = vadd.f32 %v673, %v691
    %v693 = vpop.f32.mrf.mxu0
    %v694 = vadd.f32 %v675, %v693
    %695 = vmatmul.bf16.gmra.mxu0 %v534
    %v696 = vpop.f32.mrf.mxu0
    %v697 = vadd.f32 %v678, %v696
    %v698 = vpop.f32.mrf.mxu0
    %v699 = vadd.f32 %v680, %v698
    %700 = vdwg.mxu0
    %v701 = vpack.c.bf16 %v616, %v578
    %v702 = vpack.c.bf16 %v692, %v654
    %v703 = vpack.c.bf16 %v618, %v580
    %v704 = vpack.c.bf16 %v694, %v656
    %v705 = vpack.c.bf16 %v621, %v583
    %v706 = vpack.c.bf16 %v697, %v659
    %v707 = vpack.c.bf16 %v623, %v585
    %v708 = vpack.c.bf16 %v699, %v661
    %v711 = vunpack.c.l.b16 %v259
    %v712 = vunpack.c.h.b16 %v259
    %v713 = vunpack.c.l.b16 %v260
    %v714 = vunpack.c.h.b16 %v260
    %v715 = vpack.c.b16 %v711, %v711
    %v716 = vpack.c.b16 %v712, %v712
    %v717 = vpack.c.b16 %v713, %v713
    %v718 = vpack.c.b16 %v714, %v714
    %v720 = vpack.i.b16 %v715, %v715
    %v722 = vperm.slane %v720, 0
    %v724 = vpack.i.b16 %v716, %v716
    %v726 = vperm.slane %v724, 0
    %v728 = vpack.i.b16 %v717, %v717
    %v730 = vperm.slane %v728, 0
    %v732 = vpack.i.b16 %v718, %v718
    %v734 = vperm.slane %v732, 0
    %v735 = vunpack.c.l.bf16 %v701
    %v736 = vunpack.c.h.bf16 %v701
    %v737 = vunpack.c.l.bf16 %v702
    %v738 = vunpack.c.h.bf16 %v702
    %v739 = vunpack.c.l.bf16 %v703
    %v740 = vunpack.c.h.bf16 %v703
    %v741 = vunpack.c.l.bf16 %v704
    %v742 = vunpack.c.h.bf16 %v704
    %v743 = vunpack.c.l.bf16 %v705
    %v744 = vunpack.c.h.bf16 %v705
    %v745 = vunpack.c.l.bf16 %v706
    %v746 = vunpack.c.h.bf16 %v706
    %v747 = vunpack.c.l.bf16 %v707
    %v748 = vunpack.c.h.bf16 %v707
    %v749 = vunpack.c.l.bf16 %v708
    %v750 = vunpack.c.h.bf16 %v708
    %v751 = vunpack.c.l.bf16 %v722
    %v752 = vunpack.c.l.bf16 %v726
    %v753 = vunpack.c.l.bf16 %v730
    %v754 = vunpack.c.l.bf16 %v734
    %v755 = vadd.f32 %v735, %v751
    %v756 = vadd.f32 %v736, %v752
    %v757 = vadd.f32 %v737, %v753
    %v758 = vadd.f32 %v738, %v754
    %v759 = vadd.f32 %v739, %v751
    %v760 = vadd.f32 %v740, %v752
    %v761 = vadd.f32 %v741, %v753
    %v762 = vadd.f32 %v742, %v754
    %v763 = vadd.f32 %v743, %v751
    %v764 = vadd.f32 %v744, %v752
    %v765 = vadd.f32 %v745, %v753
    %v766 = vadd.f32 %v746, %v754
    %v767 = vadd.f32 %v747, %v751
    %v768 = vadd.f32 %v748, %v752
    %v769 = vadd.f32 %v749, %v753
    %v770 = vadd.f32 %v750, %v754
    %v771 = vpack.c.bf16 %v756, %v755
    %v772 = vpack.c.bf16 %v758, %v757
    %v773 = vpack.c.bf16 %v760, %v759
    %v774 = vpack.c.bf16 %v762, %v761
    %v775 = vpack.c.bf16 %v764, %v763
    %v776 = vpack.c.bf16 %v766, %v765
    %v777 = vpack.c.bf16 %v768, %v767
    %v778 = vpack.c.bf16 %v770, %v769
    %v779 = vunpack.c.l.bf16 %v771
    %v780 = vunpack.c.h.bf16 %v771
    %v781 = vunpack.c.l.bf16 %v772
    %v782 = vunpack.c.h.bf16 %v772
    %v783 = vunpack.c.l.bf16 %v773
    %v784 = vunpack.c.h.bf16 %v773
    %v785 = vunpack.c.l.bf16 %v774
    %v786 = vunpack.c.h.bf16 %v774
    %v787 = vunpack.c.l.bf16 %v775
    %v788 = vunpack.c.h.bf16 %v775
    %v789 = vunpack.c.l.bf16 %v776
    %v790 = vunpack.c.h.bf16 %v776
    %v791 = vunpack.c.l.bf16 %v777
    %v792 = vunpack.c.h.bf16 %v777
    %v793 = vunpack.c.l.bf16 %v778
    %v794 = vunpack.c.h.bf16 %v778
    %v795 = vmax.f32 %v779, 0.0
    %v796 = vmax.f32 %v780, 0.0
    %v797 = vmax.f32 %v781, 0.0
    %v798 = vmax.f32 %v782, 0.0
    %v799 = vmax.f32 %v783, 0.0
    %v800 = vmax.f32 %v784, 0.0
    %v801 = vmax.f32 %v785, 0.0
    %v802 = vmax.f32 %v786, 0.0
    %v803 = vmax.f32 %v787, 0.0
    %v804 = vmax.f32 %v788, 0.0
    %v805 = vmax.f32 %v789, 0.0
    %v806 = vmax.f32 %v790, 0.0
    %v807 = vmax.f32 %v791, 0.0
    %v808 = vmax.f32 %v792, 0.0
    %v809 = vmax.f32 %v793, 0.0
    %v810 = vmax.f32 %v794, 0.0
    %v811 = vpack.c.bf16 %v799, %v795
    %v812 = vpack.c.bf16 %v800, %v796
    %v813 = vpack.c.bf16 %v801, %v797
    %v814 = vpack.c.bf16 %v802, %v798
    %v815 = vpack.c.bf16 %v807, %v803
    %v816 = vpack.c.bf16 %v808, %v804
    %v817 = vpack.c.bf16 %v809, %v805
    %v818 = vpack.c.bf16 %v810, %v806
    %v823 = vunpack.c.l.b16 %v195
    %v824 = vunpack.c.h.b16 %v195
    %v825 = vunpack.c.l.b16 %v196
    %v826 = vunpack.c.h.b16 %v196
    %v827 = vunpack.c.l.b16 %v197
    %v828 = vunpack.c.h.b16 %v197
    %v829 = vunpack.c.l.b16 %v198
    %v830 = vunpack.c.h.b16 %v198
    %v831 = vpack.c.b16 %v825, %v823
    %v832 = vpack.c.b16 %v826, %v824
    %v833 = vpack.c.b16 %v829, %v827
    %v834 = vpack.c.b16 %v830, %v828
    %v838 = vsel %vm529, %v832, 0
    %v841 = vsel %vm529, %v834, 0
    %843 = vmatpush.bf16.msra.mxu0 %v457
    %844 = vmatpush.bf16.msra.mxu0 %v453
    %845 = vmatpush.bf16.msra.mxu0 %v449
    %846 = vmatpush.bf16.msra.mxu0 %v445
    %847 = vmatpush.bf16.msra.mxu0 %v441
    %848 = vmatpush.bf16.msra.mxu0 %v437
    %849 = vmatpush.bf16.msra.mxu0 %v433
    %850 = vmatpush.bf16.msra.mxu0 %v429
    %851 = vmatmul.bf16.gmra.mxu0 %v831
    %v852 = vpop.f32.mrf.mxu0
    %v853 = vadd.f32 0.0, %v852
    %v854 = vpop.f32.mrf.mxu0
    %v855 = vadd.f32 0.0, %v854
    %856 = vmatmul.bf16.gmra.mxu0 %v833
    %v857 = vpop.f32.mrf.mxu0
    %v858 = vadd.f32 0.0, %v857
    %v859 = vpop.f32.mrf.mxu0
    %v860 = vadd.f32 0.0, %v859
    %861 = vdwg.mxu0
    %862 = vmatpush.bf16.msra.mxu0 0
    %863 = vmatpush.bf16.msra.mxu0 0
    %864 = vmatpush.bf16.msra.mxu0 0
    %865 = vmatpush.bf16.msra.mxu0 %v538
    %866 = vmatpush.bf16.msra.mxu0 %v473
    %867 = vmatpush.bf16.msra.mxu0 %v469
    %868 = vmatpush.bf16.msra.mxu0 %v465
    %869 = vmatpush.bf16.msra.mxu0 %v461
    %870 = vmatmul.bf16.gmra.mxu0 %v838
    %v871 = vpop.f32.mrf.mxu0
    %v872 = vadd.f32 %v853, %v871
    %v873 = vpop.f32.mrf.mxu0
    %v874 = vadd.f32 %v855, %v873
    %875 = vmatmul.bf16.gmra.mxu0 %v841
    %v876 = vpop.f32.mrf.mxu0
    %v877 = vadd.f32 %v858, %v876
    %v878 = vpop.f32.mrf.mxu0
    %v879 = vadd.f32 %v860, %v878
    %880 = vdwg.mxu0
    %881 = vmatpush.bf16.msra.mxu0 %v458
    %882 = vmatpush.bf16.msra.mxu0 %v454
    %883 = vmatpush.bf16.msra.mxu0 %v450
    %884 = vmatpush.bf16.msra.mxu0 %v446
    %885 = vmatpush.bf16.msra.mxu0 %v442
    %886 = vmatpush.bf16.msra.mxu0 %v438
    %887 = vmatpush.bf16.msra.mxu0 %v434
    %888 = vmatpush.bf16.msra.mxu0 %v430
    %889 = vmatmul.bf16.gmra.mxu0 %v831
    %v890 = vpop.f32.mrf.mxu0
    %v891 = vadd.f32 0.0, %v890
    %v892 = vpop.f32.mrf.mxu0
    %v893 = vadd.f32 0.0, %v892
    %894 = vmatmul.bf16.gmra.mxu0 %v833
    %v895 = vpop.f32.mrf.mxu0
    %v896 = vadd.f32 0.0, %v895
    %v897 = vpop.f32.mrf.mxu0
    %v898 = vadd.f32 0.0, %v897
    %899 = vdwg.mxu0
    %900 = vmatpush.bf16.msra.mxu0 0
    %901 = vmatpush.bf16.msra.mxu0 0
    %902 = vmatpush.bf16.msra.mxu0 0
    %903 = vmatpush.bf16.msra.mxu0 %v541
    %904 = vmatpush.bf16.msra.mxu0 %v474
    %905 = vmatpush.bf16.msra.mxu0 %v470
    %906 = vmatpush.bf16.msra.mxu0 %v466
    %907 = vmatpush.bf16.msra.mxu0 %v462
    %908 = vmatmul.bf16.gmra.mxu0 %v838
    %v909 = vpop.f32.mrf.mxu0
    %v910 = vadd.f32 %v891, %v909
    %v911 = vpop.f32.mrf.mxu0
    %v912 = vadd.f32 %v893, %v911
    %913 = vmatmul.bf16.gmra.mxu0 %v841
    %v914 = vpop.f32.mrf.mxu0
    %v915 = vadd.f32 %v896, %v914
    %v916 = vpop.f32.mrf.mxu0
    %v917 = vadd.f32 %v898, %v916
    %918 = vdwg.mxu0
    %919 = vmatpush.bf16.msra.mxu0 %v459
    %920 = vmatpush.bf16.msra.mxu0 %v455
    %921 = vmatpush.bf16.msra.mxu0 %v451
    %922 = vmatpush.bf16.msra.mxu0 %v447
    %923 = vmatpush.bf16.msra.mxu0 %v443
    %924 = vmatpush.bf16.msra.mxu0 %v439
    %925 = vmatpush.bf16.msra.mxu0 %v435
    %926 = vmatpush.bf16.msra.mxu0 %v431
    %927 = vmatmul.bf16.gmra.mxu0 %v831
    %v928 = vpop.f32.mrf.mxu0
    %v929 = vadd.f32 0.0, %v928
    %v930 = vpop.f32.mrf.mxu0
    %v931 = vadd.f32 0.0, %v930
    %932 = vmatmul.bf16.gmra.mxu0 %v833
    %v933 = vpop.f32.mrf.mxu0
    %v934 = vadd.f32 0.0, %v933
    %v935 = vpop.f32.mrf.mxu0
    %v936 = vadd.f32 0.0, %v935
    %937 = vdwg.mxu0
    %938 = vmatpush.bf16.msra.mxu0 0
    %939 = vmatpush.bf16.msra.mxu0 0
    %940 = vmatpush.bf16.msra.mxu0 0
    %941 = vmatpush.bf16.msra.mxu0 %v544
    %942 = vmatpush.bf16.msra.mxu0 %v475
    %943 = vmatpush.bf16.msra.mxu0 %v471
    %944 = vmatpush.bf16.msra.mxu0 %v467
    %945 = vmatpush.bf16.msra.mxu0 %v463
    %946 = vmatmul.bf16.gmra.mxu0 %v838
    %v947 = vpop.f32.mrf.mxu0
    %v948 = vadd.f32 %v929, %v947
    %v949 = vpop.f32.mrf.mxu0
    %v950 = vadd.f32 %v931, %v949
    %951 = vmatmul.bf16.gmra.mxu0 %v841
    %v952 = vpop.f32.mrf.mxu0
    %v953 = vadd.f32 %v934, %v952
    %v954 = vpop.f32.mrf.mxu0
    %v955 = vadd.f32 %v936, %v954
    %956 = vdwg.mxu0
    %957 = vmatpush.bf16.msra.mxu0 %v460
    %958 = vmatpush.bf16.msra.mxu0 %v456
    %959 = vmatpush.bf16.msra.mxu0 %v452
    %960 = vmatpush.bf16.msra.mxu0 %v448
    %961 = vmatpush.bf16.msra.mxu0 %v444
    %962 = vmatpush.bf16.msra.mxu0 %v440
    %963 = vmatpush.bf16.msra.mxu0 %v436
    %964 = vmatpush.bf16.msra.mxu0 %v432
    %965 = vmatmul.bf16.gmra.mxu0 %v831
    %v966 = vpop.f32.mrf.mxu0
    %v967 = vadd.f32 0.0, %v966
    %v968 = vpop.f32.mrf.mxu0
    %v969 = vadd.f32 0.0, %v968
    %970 = vmatmul.bf16.gmra.mxu0 %v833
    %v971 = vpop.f32.mrf.mxu0
    %v972 = vadd.f32 0.0, %v971
    %v973 = vpop.f32.mrf.mxu0
    %v974 = vadd.f32 0.0, %v973
    %975 = vdwg.mxu0
    %976 = vmatpush.bf16.msra.mxu0 0
    %977 = vmatpush.bf16.msra.mxu0 0
    %978 = vmatpush.bf16.msra.mxu0 0
    %979 = vmatpush.bf16.msra.mxu0 %v547
    %980 = vmatpush.bf16.msra.mxu0 %v476
    %981 = vmatpush.bf16.msra.mxu0 %v472
    %982 = vmatpush.bf16.msra.mxu0 %v468
    %983 = vmatpush.bf16.msra.mxu0 %v464
    %984 = vmatmul.bf16.gmra.mxu0 %v838
    %v985 = vpop.f32.mrf.mxu0
    %v986 = vadd.f32 %v967, %v985
    %v987 = vpop.f32.mrf.mxu0
    %v988 = vadd.f32 %v969, %v987
    %989 = vmatmul.bf16.gmra.mxu0 %v841
    %v990 = vpop.f32.mrf.mxu0
    %v991 = vadd.f32 %v972, %v990
    %v992 = vpop.f32.mrf.mxu0
    %v993 = vadd.f32 %v974, %v992
    %994 = vdwg.mxu0
    %v995 = vpack.c.bf16 %v910, %v872
    %v996 = vpack.c.bf16 %v986, %v948
    %v997 = vpack.c.bf16 %v912, %v874
    %v998 = vpack.c.bf16 %v988, %v950
    %v999 = vpack.c.bf16 %v915, %v877
    %v1000 = vpack.c.bf16 %v991, %v953
    %v1001 = vpack.c.bf16 %v917, %v879
    %v1002 = vpack.c.bf16 %v993, %v955
    %v1003 = vunpack.c.l.bf16 %v995
    %v1004 = vunpack.c.h.bf16 %v995
    %v1005 = vunpack.c.l.bf16 %v996
    %v1006 = vunpack.c.h.bf16 %v996
    %v1007 = vunpack.c.l.bf16 %v997
    %v1008 = vunpack.c.h.bf16 %v997
    %v1009 = vunpack.c.l.bf16 %v998
    %v1010 = vunpack.c.h.bf16 %v998
    %v1011 = vunpack.c.l.bf16 %v999
    %v1012 = vunpack.c.h.bf16 %v999
    %v1013 = vunpack.c.l.bf16 %v1000
    %v1014 = vunpack.c.h.bf16 %v1000
    %v1015 = vunpack.c.l.bf16 %v1001
    %v1016 = vunpack.c.h.bf16 %v1001
    %v1017 = vunpack.c.l.bf16 %v1002
    %v1018 = vunpack.c.h.bf16 %v1002
    %v1019 = vadd.f32 %v1003, %v751
    %v1020 = vadd.f32 %v1004, %v752
    %v1021 = vadd.f32 %v1005, %v753
    %v1022 = vadd.f32 %v1006, %v754
    %v1023 = vadd.f32 %v1007, %v751
    %v1024 = vadd.f32 %v1008, %v752
    %v1025 = vadd.f32 %v1009, %v753
    %v1026 = vadd.f32 %v1010, %v754
    %v1027 = vadd.f32 %v1011, %v751
    %v1028 = vadd.f32 %v1012, %v752
    %v1029 = vadd.f32 %v1013, %v753
    %v1030 = vadd.f32 %v1014, %v754
    %v1031 = vadd.f32 %v1015, %v751
    %v1032 = vadd.f32 %v1016, %v752
    %v1033 = vadd.f32 %v1017, %v753
    %v1034 = vadd.f32 %v1018, %v754
    %v1035 = vpack.c.bf16 %v1020, %v1019
    %v1036 = vpack.c.bf16 %v1022, %v1021
    %v1037 = vpack.c.bf16 %v1024, %v1023
    %v1038 = vpack.c.bf16 %v1026, %v1025
    %v1039 = vpack.c.bf16 %v1028, %v1027
    %v1040 = vpack.c.bf16 %v1030, %v1029
    %v1041 = vpack.c.bf16 %v1032, %v1031
    %v1042 = vpack.c.bf16 %v1034, %v1033
    %v1043 = vunpack.c.l.bf16 %v1035
    %v1044 = vunpack.c.h.bf16 %v1035
    %v1045 = vunpack.c.l.bf16 %v1036
    %v1046 = vunpack.c.h.bf16 %v1036
    %v1047 = vunpack.c.l.bf16 %v1037
    %v1048 = vunpack.c.h.bf16 %v1037
    %v1049 = vunpack.c.l.bf16 %v1038
    %v1050 = vunpack.c.h.bf16 %v1038
    %v1051 = vunpack.c.l.bf16 %v1039
    %v1052 = vunpack.c.h.bf16 %v1039
    %v1053 = vunpack.c.l.bf16 %v1040
    %v1054 = vunpack.c.h.bf16 %v1040
    %v1055 = vunpack.c.l.bf16 %v1041
    %v1056 = vunpack.c.h.bf16 %v1041
    %v1057 = vunpack.c.l.bf16 %v1042
    %v1058 = vunpack.c.h.bf16 %v1042
    %v1059 = vmax.f32 %v1043, 0.0
    %v1060 = vmax.f32 %v1044, 0.0
    %v1061 = vmax.f32 %v1045, 0.0
    %v1062 = vmax.f32 %v1046, 0.0
    %v1063 = vmax.f32 %v1047, 0.0
    %v1064 = vmax.f32 %v1048, 0.0
    %v1065 = vmax.f32 %v1049, 0.0
    %v1066 = vmax.f32 %v1050, 0.0
    %v1067 = vmax.f32 %v1051, 0.0
    %v1068 = vmax.f32 %v1052, 0.0
    %v1069 = vmax.f32 %v1053, 0.0
    %v1070 = vmax.f32 %v1054, 0.0
    %v1071 = vmax.f32 %v1055, 0.0
    %v1072 = vmax.f32 %v1056, 0.0
    %v1073 = vmax.f32 %v1057, 0.0
    %v1074 = vmax.f32 %v1058, 0.0
    %v1075 = vpack.c.bf16 %v1063, %v1059
    %v1076 = vpack.c.bf16 %v1064, %v1060
    %v1077 = vpack.c.bf16 %v1065, %v1061
    %v1078 = vpack.c.bf16 %v1066, %v1062
    %v1079 = vpack.c.bf16 %v1071, %v1067
    %v1080 = vpack.c.bf16 %v1072, %v1068
    %v1081 = vpack.c.bf16 %v1073, %v1069
    %v1082 = vpack.c.bf16 %v1074, %v1070
    %v1083 = vld [vmem:[#allocation8] sm:$0xff]
    %v1084 = vld [vmem:[#allocation8 + $0x8] sm:$0xff]
    %v1085 = vld [vmem:[#allocation8 + $0x10] sm:$0xff]
    %v1086 = vld [vmem:[#allocation8 + $0x18] sm:$0xff]
    %v1087 = vld [vmem:[#allocation8 + $0x20] sm:$0xff]
    %v1088 = vld [vmem:[#allocation8 + $0x28] sm:$0xff]
    %v1089 = vld [vmem:[#allocation8 + $0x30] sm:$0xff]
    %v1090 = vld [vmem:[#allocation8 + $0x38] sm:$0xff]
    %v1091 = vld [vmem:[#allocation8 + $0x40] sm:$0xff]
    %v1092 = vld [vmem:[#allocation8 + $0x48] sm:$0xff]
    %v1093 = vld [vmem:[#allocation8 + $0x50] sm:$0xff]
    %v1094 = vld [vmem:[#allocation8 + $0x58] sm:$0xff]
    %v1095 = vld [vmem:[#allocation8 + $0x60] sm:$0xff]
    %v1096 = vld [vmem:[#allocation8 + $0x68] sm:$0xff]
    %v1097 = vld [vmem:[#allocation8 + $0x70] sm:$0xff]
    %v1098 = vld [vmem:[#allocation8 + $0x78] sm:$0xff]
    %v1099 = vld [vmem:[#allocation8 + $0x80] sm:$0xff]
    %v1100 = vld [vmem:[#allocation8 + $0x88] sm:$0xff]
    %v1101 = vld [vmem:[#allocation8 + $0x90] sm:$0xff]
    %v1102 = vld [vmem:[#allocation8 + $0x98] sm:$0xff]
    %v1103 = vld [vmem:[#allocation8 + $0xa0] sm:$0xff]
    %v1104 = vld [vmem:[#allocation8 + $0xa8] sm:$0xff]
    %v1105 = vld [vmem:[#allocation8 + $0xb0] sm:$0xff]
    %v1106 = vld [vmem:[#allocation8 + $0xb8] sm:$0xff]
    %v1107 = vld [vmem:[#allocation8 + $0xc0] sm:$0xff]
    %v1108 = vld [vmem:[#allocation8 + $0xc8] sm:$0xff]
    %v1109 = vld [vmem:[#allocation8 + $0xd0] sm:$0xff]
    %v1110 = vld [vmem:[#allocation8 + $0xd8] sm:$0xff]
    %v1111 = vld [vmem:[#allocation8 + $0xe0] sm:$0xff]
    %v1112 = vld [vmem:[#allocation8 + $0xe8] sm:$0xff]
    %v1113 = vld [vmem:[#allocation8 + $0xf0] sm:$0xff]
    %v1114 = vld [vmem:[#allocation8 + $0xf8] sm:$0xff]
    %v1115 = vld [vmem:[#allocation8 + $0x100] sm:$0xff]
    %v1116 = vld [vmem:[#allocation8 + $0x108] sm:$0xff]
    %v1117 = vld [vmem:[#allocation8 + $0x110] sm:$0xff]
    %v1118 = vld [vmem:[#allocation8 + $0x118] sm:$0xff]
    %v1119 = vld [vmem:[#allocation8 + $0x120] sm:$0xff]
    %v1120 = vld [vmem:[#allocation8 + $0x128] sm:$0xff]
    %v1121 = vld [vmem:[#allocation8 + $0x130] sm:$0xff]
    %v1122 = vld [vmem:[#allocation8 + $0x138] sm:$0xff]
    %v1123 = vld [vmem:[#allocation8 + $0x140] sm:$0xff]
    %v1124 = vld [vmem:[#allocation8 + $0x148] sm:$0xff]
    %v1125 = vld [vmem:[#allocation8 + $0x150] sm:$0xff]
    %v1126 = vld [vmem:[#allocation8 + $0x158] sm:$0xff]
    %v1127 = vld [vmem:[#allocation8 + $0x160] sm:$0xff]
    %v1128 = vld [vmem:[#allocation8 + $0x168] sm:$0xff]
    %v1129 = vld [vmem:[#allocation8 + $0x170] sm:$0xff]
    %v1130 = vld [vmem:[#allocation8 + $0x178] sm:$0xff]
    %v1131 = vld [vmem:[#allocation8 + $0x180] sm:$0xff]
    %v1132 = vld [vmem:[#allocation8 + $0x188] sm:$0xff]
    %v1133 = vld [vmem:[#allocation8 + $0x190] sm:$0xff]
    %v1134 = vld [vmem:[#allocation8 + $0x198] sm:$0xff]
    %v1135 = vld [vmem:[#allocation8 + $0x1a0] sm:$0xff]
    %v1136 = vld [vmem:[#allocation8 + $0x1a8] sm:$0xff]
    %v1137 = vld [vmem:[#allocation8 + $0x1b0] sm:$0xff]
    %v1138 = vld [vmem:[#allocation8 + $0x1b8] sm:$0xff]
    %v1139 = vld [vmem:[#allocation8 + $0x1c0] sm:$0xff]
    %v1140 = vld [vmem:[#allocation8 + $0x1c8] sm:$0xff]
    %v1141 = vld [vmem:[#allocation8 + $0x1d0] sm:$0xff]
    %v1142 = vld [vmem:[#allocation8 + $0x1d8] sm:$0xff]
    %v1143 = vld [vmem:[#allocation8 + $0x1e0] sm:$0xff]
    %v1144 = vld [vmem:[#allocation8 + $0x1e8] sm:$0xff]
    %v1145 = vld [vmem:[#allocation8 + $0x1f0] sm:$0xff]
    %v1146 = vld [vmem:[#allocation8 + $0x1f8] sm:$0xff]
    %s1147 = scalar_lea.vmem [#allocation5], 1
    %v1148 = vld [vmem:[%s1147] ss:$8 sm:$0x3]
    %v1150 = vperm.slane %v1148, 0
    %v1151 = vperm.slane %v1148, 1
    %v1154 = vpack.c.bf16 %v1151, %v1150
    %v1219 = vunpack.c.l.b16 %v1083
    %v1220 = vunpack.c.h.b16 %v1083
    %v1221 = vunpack.c.l.b16 %v1084
    %v1222 = vunpack.c.h.b16 %v1084
    %v1223 = vunpack.c.l.b16 %v1085
    %v1224 = vunpack.c.h.b16 %v1085
    %v1225 = vunpack.c.l.b16 %v1086
    %v1226 = vunpack.c.h.b16 %v1086
    %v1227 = vunpack.c.l.b16 %v1087
    %v1228 = vunpack.c.h.b16 %v1087
    %v1229 = vunpack.c.l.b16 %v1088
    %v1230 = vunpack.c.h.b16 %v1088
    %v1231 = vunpack.c.l.b16 %v1089
    %v1232 = vunpack.c.h.b16 %v1089
    %v1233 = vunpack.c.l.b16 %v1090
    %v1234 = vunpack.c.h.b16 %v1090
    %v1235 = vunpack.c.l.b16 %v1091
    %v1236 = vunpack.c.h.b16 %v1091
    %v1237 = vunpack.c.l.b16 %v1092
    %v1238 = vunpack.c.h.b16 %v1092
    %v1239 = vunpack.c.l.b16 %v1093
    %v1240 = vunpack.c.h.b16 %v1093
    %v1241 = vunpack.c.l.b16 %v1094
    %v1242 = vunpack.c.h.b16 %v1094
    %v1243 = vunpack.c.l.b16 %v1095
    %v1244 = vunpack.c.h.b16 %v1095
    %v1245 = vunpack.c.l.b16 %v1096
    %v1246 = vunpack.c.h.b16 %v1096
    %v1247 = vunpack.c.l.b16 %v1097
    %v1248 = vunpack.c.h.b16 %v1097
    %v1249 = vunpack.c.l.b16 %v1098
    %v1250 = vunpack.c.h.b16 %v1098
    %v1251 = vunpack.c.l.b16 %v1099
    %v1252 = vunpack.c.h.b16 %v1099
    %v1253 = vunpack.c.l.b16 %v1100
    %v1254 = vunpack.c.h.b16 %v1100
    %v1255 = vunpack.c.l.b16 %v1101
    %v1256 = vunpack.c.h.b16 %v1101
    %v1257 = vunpack.c.l.b16 %v1102
    %v1258 = vunpack.c.h.b16 %v1102
    %v1259 = vunpack.c.l.b16 %v1103
    %v1260 = vunpack.c.h.b16 %v1103
    %v1261 = vunpack.c.l.b16 %v1104
    %v1262 = vunpack.c.h.b16 %v1104
    %v1263 = vunpack.c.l.b16 %v1105
    %v1264 = vunpack.c.h.b16 %v1105
    %v1265 = vunpack.c.l.b16 %v1106
    %v1266 = vunpack.c.h.b16 %v1106
    %v1267 = vunpack.c.l.b16 %v1107
    %v1268 = vunpack.c.h.b16 %v1107
    %v1269 = vunpack.c.l.b16 %v1108
    %v1270 = vunpack.c.h.b16 %v1108
    %v1271 = vunpack.c.l.b16 %v1109
    %v1272 = vunpack.c.h.b16 %v1109
    %v1273 = vunpack.c.l.b16 %v1110
    %v1274 = vunpack.c.h.b16 %v1110
    %v1275 = vunpack.c.l.b16 %v1111
    %v1276 = vunpack.c.h.b16 %v1111
    %v1277 = vunpack.c.l.b16 %v1112
    %v1278 = vunpack.c.h.b16 %v1112
    %v1279 = vunpack.c.l.b16 %v1113
    %v1280 = vunpack.c.h.b16 %v1113
    %v1281 = vunpack.c.l.b16 %v1114
    %v1282 = vunpack.c.h.b16 %v1114
    %v1283 = vunpack.c.l.b16 %v1115
    %v1284 = vunpack.c.h.b16 %v1115
    %v1285 = vunpack.c.l.b16 %v1116
    %v1286 = vunpack.c.h.b16 %v1116
    %v1287 = vunpack.c.l.b16 %v1117
    %v1288 = vunpack.c.h.b16 %v1117
    %v1289 = vunpack.c.l.b16 %v1118
    %v1290 = vunpack.c.h.b16 %v1118
    %v1291 = vunpack.c.l.b16 %v1119
    %v1292 = vunpack.c.h.b16 %v1119
    %v1293 = vunpack.c.l.b16 %v1120
    %v1294 = vunpack.c.h.b16 %v1120
    %v1295 = vunpack.c.l.b16 %v1121
    %v1296 = vunpack.c.h.b16 %v1121
    %v1297 = vunpack.c.l.b16 %v1122
    %v1298 = vunpack.c.h.b16 %v1122
    %v1299 = vunpack.c.l.b16 %v1123
    %v1300 = vunpack.c.h.b16 %v1123
    %v1301 = vunpack.c.l.b16 %v1124
    %v1302 = vunpack.c.h.b16 %v1124
    %v1303 = vunpack.c.l.b16 %v1125
    %v1304 = vunpack.c.h.b16 %v1125
    %v1305 = vunpack.c.l.b16 %v1126
    %v1306 = vunpack.c.h.b16 %v1126
    %v1307 = vunpack.c.l.b16 %v1127
    %v1308 = vunpack.c.h.b16 %v1127
    %v1309 = vunpack.c.l.b16 %v1128
    %v1310 = vunpack.c.h.b16 %v1128
    %v1311 = vunpack.c.l.b16 %v1129
    %v1312 = vunpack.c.h.b16 %v1129
    %v1313 = vunpack.c.l.b16 %v1130
    %v1314 = vunpack.c.h.b16 %v1130
    %v1315 = vunpack.c.l.b16 %v1131
    %v1316 = vunpack.c.h.b16 %v1131
    %v1317 = vunpack.c.l.b16 %v1132
    %v1318 = vunpack.c.h.b16 %v1132
    %v1319 = vunpack.c.l.b16 %v1133
    %v1320 = vunpack.c.h.b16 %v1133
    %v1321 = vunpack.c.l.b16 %v1134
    %v1322 = vunpack.c.h.b16 %v1134
    %v1323 = vunpack.c.l.b16 %v1135
    %v1324 = vunpack.c.h.b16 %v1135
    %v1325 = vunpack.c.l.b16 %v1136
    %v1326 = vunpack.c.h.b16 %v1136
    %v1327 = vunpack.c.l.b16 %v1137
    %v1328 = vunpack.c.h.b16 %v1137
    %v1329 = vunpack.c.l.b16 %v1138
    %v1330 = vunpack.c.h.b16 %v1138
    %v1331 = vunpack.c.l.b16 %v1139
    %v1332 = vunpack.c.h.b16 %v1139
    %v1333 = vunpack.c.l.b16 %v1140
    %v1334 = vunpack.c.h.b16 %v1140
    %v1335 = vunpack.c.l.b16 %v1141
    %v1336 = vunpack.c.h.b16 %v1141
    %v1337 = vunpack.c.l.b16 %v1142
    %v1338 = vunpack.c.h.b16 %v1142
    %v1339 = vunpack.c.l.b16 %v1143
    %v1340 = vunpack.c.h.b16 %v1143
    %v1341 = vunpack.c.l.b16 %v1144
    %v1342 = vunpack.c.h.b16 %v1144
    %v1343 = vunpack.c.l.b16 %v1145
    %v1344 = vunpack.c.h.b16 %v1145
    %v1345 = vunpack.c.l.b16 %v1146
    %v1346 = vunpack.c.h.b16 %v1146
    %v1347 = vpack.c.b16 %v1221, %v1219
    %v1348 = vpack.c.b16 %v1222, %v1220
    %v1349 = vpack.c.b16 %v1225, %v1223
    %v1350 = vpack.c.b16 %v1226, %v1224
    %v1351 = vpack.c.b16 %v1229, %v1227
    %v1352 = vpack.c.b16 %v1230, %v1228
    %v1353 = vpack.c.b16 %v1233, %v1231
    %v1354 = vpack.c.b16 %v1234, %v1232
    %v1355 = vpack.c.b16 %v1237, %v1235
    %v1356 = vpack.c.b16 %v1238, %v1236
    %v1357 = vpack.c.b16 %v1241, %v1239
    %v1358 = vpack.c.b16 %v1242, %v1240
    %v1359 = vpack.c.b16 %v1245, %v1243
    %v1360 = vpack.c.b16 %v1246, %v1244
    %v1361 = vpack.c.b16 %v1249, %v1247
    %v1362 = vpack.c.b16 %v1250, %v1248
    %v1363 = vpack.c.b16 %v1253, %v1251
    %v1364 = vpack.c.b16 %v1254, %v1252
    %v1365 = vpack.c.b16 %v1257, %v1255
    %v1366 = vpack.c.b16 %v1258, %v1256
    %v1367 = vpack.c.b16 %v1261, %v1259
    %v1368 = vpack.c.b16 %v1262, %v1260
    %v1369 = vpack.c.b16 %v1265, %v1263
    %v1370 = vpack.c.b16 %v1266, %v1264
    %v1371 = vpack.c.b16 %v1269, %v1267
    %v1372 = vpack.c.b16 %v1270, %v1268
    %v1373 = vpack.c.b16 %v1273, %v1271
    %v1374 = vpack.c.b16 %v1274, %v1272
    %v1375 = vpack.c.b16 %v1277, %v1275
    %v1376 = vpack.c.b16 %v1278, %v1276
    %v1377 = vpack.c.b16 %v1281, %v1279
    %v1378 = vpack.c.b16 %v1282, %v1280
    %v1379 = vpack.c.b16 %v1285, %v1283
    %v1380 = vpack.c.b16 %v1286, %v1284
    %v1381 = vpack.c.b16 %v1289, %v1287
    %v1382 = vpack.c.b16 %v1290, %v1288
    %v1383 = vpack.c.b16 %v1293, %v1291
    %v1384 = vpack.c.b16 %v1294, %v1292
    %v1385 = vpack.c.b16 %v1297, %v1295
    %v1386 = vpack.c.b16 %v1298, %v1296
    %v1387 = vpack.c.b16 %v1301, %v1299
    %v1388 = vpack.c.b16 %v1302, %v1300
    %v1389 = vpack.c.b16 %v1305, %v1303
    %v1390 = vpack.c.b16 %v1306, %v1304
    %v1391 = vpack.c.b16 %v1309, %v1307
    %v1392 = vpack.c.b16 %v1310, %v1308
    %v1393 = vpack.c.b16 %v1313, %v1311
    %v1394 = vpack.c.b16 %v1314, %v1312
    %v1395 = vpack.c.b16 %v1317, %v1315
    %v1396 = vpack.c.b16 %v1318, %v1316
    %v1397 = vpack.c.b16 %v1321, %v1319
    %v1398 = vpack.c.b16 %v1322, %v1320
    %v1399 = vpack.c.b16 %v1325, %v1323
    %v1400 = vpack.c.b16 %v1326, %v1324
    %v1401 = vpack.c.b16 %v1329, %v1327
    %v1402 = vpack.c.b16 %v1330, %v1328
    %v1403 = vpack.c.b16 %v1333, %v1331
    %v1404 = vpack.c.b16 %v1334, %v1332
    %v1405 = vpack.c.b16 %v1337, %v1335
    %v1406 = vpack.c.b16 %v1338, %v1336
    %v1407 = vpack.c.b16 %v1341, %v1339
    %v1408 = vpack.c.b16 %v1342, %v1340
    %v1409 = vpack.c.b16 %v1345, %v1343
    %v1410 = vpack.c.b16 %v1346, %v1344
    %1475 = vmatpush.bf16.msra.mxu0 %v1361
    %1476 = vmatpush.bf16.msra.mxu0 %v1359
    %1477 = vmatpush.bf16.msra.mxu0 %v1357
    %1478 = vmatpush.bf16.msra.mxu0 %v1355
    %1479 = vmatpush.bf16.msra.mxu0 %v1353
    %1480 = vmatpush.bf16.msra.mxu0 %v1351
    %1481 = vmatpush.bf16.msra.mxu0 %v1349
    %1482 = vmatpush.bf16.msra.mxu0 %v1347
    %1483 = vmatmul.bf16.gmra.mxu0 %v811
    %v1484 = vpop.f32.mrf.mxu0
    %v1485 = vadd.f32 0.0, %v1484
    %v1486 = vpop.f32.mrf.mxu0
    %v1487 = vadd.f32 0.0, %v1486
    %1488 = vmatmul.bf16.gmra.mxu0 %v815
    %v1489 = vpop.f32.mrf.mxu0
    %v1490 = vadd.f32 0.0, %v1489
    %v1491 = vpop.f32.mrf.mxu0
    %v1492 = vadd.f32 0.0, %v1491
    %1493 = vdwg.mxu0
    %1494 = vmatpush.bf16.msra.mxu0 %v1377
    %1495 = vmatpush.bf16.msra.mxu0 %v1375
    %1496 = vmatpush.bf16.msra.mxu0 %v1373
    %1497 = vmatpush.bf16.msra.mxu0 %v1371
    %1498 = vmatpush.bf16.msra.mxu0 %v1369
    %1499 = vmatpush.bf16.msra.mxu0 %v1367
    %1500 = vmatpush.bf16.msra.mxu0 %v1365
    %1501 = vmatpush.bf16.msra.mxu0 %v1363
    %1502 = vmatmul.bf16.gmra.mxu0 %v812
    %v1503 = vpop.f32.mrf.mxu0
    %v1504 = vadd.f32 %v1485, %v1503
    %v1505 = vpop.f32.mrf.mxu0
    %v1506 = vadd.f32 %v1487, %v1505
    %1507 = vmatmul.bf16.gmra.mxu0 %v816
    %v1508 = vpop.f32.mrf.mxu0
    %v1509 = vadd.f32 %v1490, %v1508
    %v1510 = vpop.f32.mrf.mxu0
    %v1511 = vadd.f32 %v1492, %v1510
    %1512 = vdwg.mxu0
    %1513 = vmatpush.bf16.msra.mxu0 %v1393
    %1514 = vmatpush.bf16.msra.mxu0 %v1391
    %1515 = vmatpush.bf16.msra.mxu0 %v1389
    %1516 = vmatpush.bf16.msra.mxu0 %v1387
    %1517 = vmatpush.bf16.msra.mxu0 %v1385
    %1518 = vmatpush.bf16.msra.mxu0 %v1383
    %1519 = vmatpush.bf16.msra.mxu0 %v1381
    %1520 = vmatpush.bf16.msra.mxu0 %v1379
    %1521 = vmatmul.bf16.gmra.mxu0 %v813
    %v1522 = vpop.f32.mrf.mxu0
    %v1523 = vadd.f32 %v1504, %v1522
    %v1524 = vpop.f32.mrf.mxu0
    %v1525 = vadd.f32 %v1506, %v1524
    %1526 = vmatmul.bf16.gmra.mxu0 %v817
    %v1527 = vpop.f32.mrf.mxu0
    %v1528 = vadd.f32 %v1509, %v1527
    %v1529 = vpop.f32.mrf.mxu0
    %v1530 = vadd.f32 %v1511, %v1529
    %1531 = vdwg.mxu0
    %1532 = vmatpush.bf16.msra.mxu0 %v1409
    %1533 = vmatpush.bf16.msra.mxu0 %v1407
    %1534 = vmatpush.bf16.msra.mxu0 %v1405
    %1535 = vmatpush.bf16.msra.mxu0 %v1403
    %1536 = vmatpush.bf16.msra.mxu0 %v1401
    %1537 = vmatpush.bf16.msra.mxu0 %v1399
    %1538 = vmatpush.bf16.msra.mxu0 %v1397
    %1539 = vmatpush.bf16.msra.mxu0 %v1395
    %1540 = vmatmul.bf16.gmra.mxu0 %v814
    %v1541 = vpop.f32.mrf.mxu0
    %v1542 = vadd.f32 %v1523, %v1541
    %v1543 = vpop.f32.mrf.mxu0
    %v1544 = vadd.f32 %v1525, %v1543
    %1545 = vmatmul.bf16.gmra.mxu0 %v818
    %v1546 = vpop.f32.mrf.mxu0
    %v1547 = vadd.f32 %v1528, %v1546
    %v1548 = vpop.f32.mrf.mxu0
    %v1549 = vadd.f32 %v1530, %v1548
    %1550 = vdwg.mxu0
    %1551 = vmatpush.bf16.msra.mxu0 %v1362
    %1552 = vmatpush.bf16.msra.mxu0 %v1360
    %1553 = vmatpush.bf16.msra.mxu0 %v1358
    %1554 = vmatpush.bf16.msra.mxu0 %v1356
    %1555 = vmatpush.bf16.msra.mxu0 %v1354
    %1556 = vmatpush.bf16.msra.mxu0 %v1352
    %1557 = vmatpush.bf16.msra.mxu0 %v1350
    %1558 = vmatpush.bf16.msra.mxu0 %v1348
    %1559 = vmatmul.bf16.gmra.mxu0 %v811
    %v1560 = vpop.f32.mrf.mxu0
    %v1561 = vadd.f32 0.0, %v1560
    %v1562 = vpop.f32.mrf.mxu0
    %v1563 = vadd.f32 0.0, %v1562
    %1564 = vmatmul.bf16.gmra.mxu0 %v815
    %v1565 = vpop.f32.mrf.mxu0
    %v1566 = vadd.f32 0.0, %v1565
    %v1567 = vpop.f32.mrf.mxu0
    %v1568 = vadd.f32 0.0, %v1567
    %1569 = vdwg.mxu0
    %1570 = vmatpush.bf16.msra.mxu0 %v1378
    %1571 = vmatpush.bf16.msra.mxu0 %v1376
    %1572 = vmatpush.bf16.msra.mxu0 %v1374
    %1573 = vmatpush.bf16.msra.mxu0 %v1372
    %1574 = vmatpush.bf16.msra.mxu0 %v1370
    %1575 = vmatpush.bf16.msra.mxu0 %v1368
    %1576 = vmatpush.bf16.msra.mxu0 %v1366
    %1577 = vmatpush.bf16.msra.mxu0 %v1364
    %1578 = vmatmul.bf16.gmra.mxu0 %v812
    %v1579 = vpop.f32.mrf.mxu0
    %v1580 = vadd.f32 %v1561, %v1579
    %v1581 = vpop.f32.mrf.mxu0
    %v1582 = vadd.f32 %v1563, %v1581
    %1583 = vmatmul.bf16.gmra.mxu0 %v816
    %v1584 = vpop.f32.mrf.mxu0
    %v1585 = vadd.f32 %v1566, %v1584
    %v1586 = vpop.f32.mrf.mxu0
    %v1587 = vadd.f32 %v1568, %v1586
    %1588 = vdwg.mxu0
    %1589 = vmatpush.bf16.msra.mxu0 %v1394
    %1590 = vmatpush.bf16.msra.mxu0 %v1392
    %1591 = vmatpush.bf16.msra.mxu0 %v1390
    %1592 = vmatpush.bf16.msra.mxu0 %v1388
    %1593 = vmatpush.bf16.msra.mxu0 %v1386
    %1594 = vmatpush.bf16.msra.mxu0 %v1384
    %1595 = vmatpush.bf16.msra.mxu0 %v1382
    %1596 = vmatpush.bf16.msra.mxu0 %v1380
    %1597 = vmatmul.bf16.gmra.mxu0 %v813
    %v1598 = vpop.f32.mrf.mxu0
    %v1599 = vadd.f32 %v1580, %v1598
    %v1600 = vpop.f32.mrf.mxu0
    %v1601 = vadd.f32 %v1582, %v1600
    %1602 = vmatmul.bf16.gmra.mxu0 %v817
    %v1603 = vpop.f32.mrf.mxu0
    %v1604 = vadd.f32 %v1585, %v1603
    %v1605 = vpop.f32.mrf.mxu0
    %v1606 = vadd.f32 %v1587, %v1605
    %1607 = vdwg.mxu0
    %1608 = vmatpush.bf16.msra.mxu0 %v1410
    %1609 = vmatpush.bf16.msra.mxu0 %v1408
    %1610 = vmatpush.bf16.msra.mxu0 %v1406
    %1611 = vmatpush.bf16.msra.mxu0 %v1404
    %1612 = vmatpush.bf16.msra.mxu0 %v1402
    %1613 = vmatpush.bf16.msra.mxu0 %v1400
    %1614 = vmatpush.bf16.msra.mxu0 %v1398
    %1615 = vmatpush.bf16.msra.mxu0 %v1396
    %1616 = vmatmul.bf16.gmra.mxu0 %v814
    %v1617 = vpop.f32.mrf.mxu0
    %v1618 = vadd.f32 %v1599, %v1617
    %v1619 = vpop.f32.mrf.mxu0
    %v1620 = vadd.f32 %v1601, %v1619
    %1621 = vmatmul.bf16.gmra.mxu0 %v818
    %v1622 = vpop.f32.mrf.mxu0
    %v1623 = vadd.f32 %v1604, %v1622
    %v1624 = vpop.f32.mrf.mxu0
    %v1625 = vadd.f32 %v1606, %v1624
    %1626 = vdwg.mxu0
    %v1627 = vpack.c.bf16 %v1618, %v1542
    %v1628 = vpack.c.bf16 %v1620, %v1544
    %v1629 = vpack.c.bf16 %v1623, %v1547
    %v1630 = vpack.c.bf16 %v1625, %v1549
    %v1632 = vunpack.c.l.b16 %v1154
    %v1633 = vunpack.c.h.b16 %v1154
    %v1634 = vpack.c.b16 %v1632, %v1632
    %v1635 = vpack.c.b16 %v1633, %v1633
    %v1637 = vpack.i.b16 %v1634, %v1634
    %v1639 = vperm.slane %v1637, 0
    %v1641 = vpack.i.b16 %v1635, %v1635
    %v1643 = vperm.slane %v1641, 0
    %v1644 = vunpack.c.l.bf16 %v1627
    %v1645 = vunpack.c.h.bf16 %v1627
    %v1646 = vunpack.c.l.bf16 %v1628
    %v1647 = vunpack.c.h.bf16 %v1628
    %v1648 = vunpack.c.l.bf16 %v1629
    %v1649 = vunpack.c.h.bf16 %v1629
    %v1650 = vunpack.c.l.bf16 %v1630
    %v1651 = vunpack.c.h.bf16 %v1630
    %v1652 = vunpack.c.l.bf16 %v1639
    %v1653 = vunpack.c.l.bf16 %v1643
    %v1654 = vadd.f32 %v1644, %v1652
    %v1655 = vadd.f32 %v1645, %v1653
    %v1656 = vadd.f32 %v1646, %v1652
    %v1657 = vadd.f32 %v1647, %v1653
    %v1658 = vadd.f32 %v1648, %v1652
    %v1659 = vadd.f32 %v1649, %v1653
    %v1660 = vadd.f32 %v1650, %v1652
    %v1661 = vadd.f32 %v1651, %v1653
    %v1662 = vpack.c.bf16 %v1655, %v1654
    %v1663 = vpack.c.bf16 %v1657, %v1656
    %v1664 = vpack.c.bf16 %v1659, %v1658
    %v1665 = vpack.c.bf16 %v1661, %v1660
    %v1666 = vunpack.c.l.bf16 %v1662
    %v1667 = vunpack.c.h.bf16 %v1662
    %v1668 = vunpack.c.l.bf16 %v1663
    %v1669 = vunpack.c.h.bf16 %v1663
    %v1670 = vunpack.c.l.bf16 %v1664
    %v1671 = vunpack.c.h.bf16 %v1664
    %v1672 = vunpack.c.l.bf16 %v1665
    %v1673 = vunpack.c.h.bf16 %v1665
    %v1674 = vmax.f32 %v1666, 0.0
    %v1675 = vmax.f32 %v1667, 0.0
    %v1676 = vmax.f32 %v1668, 0.0
    %v1677 = vmax.f32 %v1669, 0.0
    %v1678 = vmax.f32 %v1670, 0.0
    %v1679 = vmax.f32 %v1671, 0.0
    %v1680 = vmax.f32 %v1672, 0.0
    %v1681 = vmax.f32 %v1673, 0.0
    %v1682 = vpack.c.bf16 %v1676, %v1674
    %v1683 = vpack.c.bf16 %v1677, %v1675
    %v1684 = vpack.c.bf16 %v1680, %v1678
    %v1685 = vpack.c.bf16 %v1681, %v1679
    %1686 = vmatpush.bf16.msra.mxu0 %v1361
    %1687 = vmatpush.bf16.msra.mxu0 %v1359
    %1688 = vmatpush.bf16.msra.mxu0 %v1357
    %1689 = vmatpush.bf16.msra.mxu0 %v1355
    %1690 = vmatpush.bf16.msra.mxu0 %v1353
    %1691 = vmatpush.bf16.msra.mxu0 %v1351
    %1692 = vmatpush.bf16.msra.mxu0 %v1349
    %1693 = vmatpush.bf16.msra.mxu0 %v1347
    %1694 = vmatmul.bf16.gmra.mxu0 %v1075
    %v1695 = vpop.f32.mrf.mxu0
    %v1696 = vadd.f32 0.0, %v1695
    %v1697 = vpop.f32.mrf.mxu0
    %v1698 = vadd.f32 0.0, %v1697
    %1699 = vmatmul.bf16.gmra.mxu0 %v1079
    %v1700 = vpop.f32.mrf.mxu0
    %v1701 = vadd.f32 0.0, %v1700
    %v1702 = vpop.f32.mrf.mxu0
    %v1703 = vadd.f32 0.0, %v1702
    %1704 = vdwg.mxu0
    %1705 = vmatpush.bf16.msra.mxu0 %v1377
    %1706 = vmatpush.bf16.msra.mxu0 %v1375
    %1707 = vmatpush.bf16.msra.mxu0 %v1373
    %1708 = vmatpush.bf16.msra.mxu0 %v1371
    %1709 = vmatpush.bf16.msra.mxu0 %v1369
    %1710 = vmatpush.bf16.msra.mxu0 %v1367
    %1711 = vmatpush.bf16.msra.mxu0 %v1365
    %1712 = vmatpush.bf16.msra.mxu0 %v1363
    %1713 = vmatmul.bf16.gmra.mxu0 %v1076
    %v1714 = vpop.f32.mrf.mxu0
    %v1715 = vadd.f32 %v1696, %v1714
    %v1716 = vpop.f32.mrf.mxu0
    %v1717 = vadd.f32 %v1698, %v1716
    %1718 = vmatmul.bf16.gmra.mxu0 %v1080
    %v1719 = vpop.f32.mrf.mxu0
    %v1720 = vadd.f32 %v1701, %v1719
    %v1721 = vpop.f32.mrf.mxu0
    %v1722 = vadd.f32 %v1703, %v1721
    %1723 = vdwg.mxu0
    %1724 = vmatpush.bf16.msra.mxu0 %v1393
    %1725 = vmatpush.bf16.msra.mxu0 %v1391
    %1726 = vmatpush.bf16.msra.mxu0 %v1389
    %1727 = vmatpush.bf16.msra.mxu0 %v1387
    %1728 = vmatpush.bf16.msra.mxu0 %v1385
    %1729 = vmatpush.bf16.msra.mxu0 %v1383
    %1730 = vmatpush.bf16.msra.mxu0 %v1381
    %1731 = vmatpush.bf16.msra.mxu0 %v1379
    %1732 = vmatmul.bf16.gmra.mxu0 %v1077
    %v1733 = vpop.f32.mrf.mxu0
    %v1734 = vadd.f32 %v1715, %v1733
    %v1735 = vpop.f32.mrf.mxu0
    %v1736 = vadd.f32 %v1717, %v1735
    %1737 = vmatmul.bf16.gmra.mxu0 %v1081
    %v1738 = vpop.f32.mrf.mxu0
    %v1739 = vadd.f32 %v1720, %v1738
    %v1740 = vpop.f32.mrf.mxu0
    %v1741 = vadd.f32 %v1722, %v1740
    %1742 = vdwg.mxu0
    %1743 = vmatpush.bf16.msra.mxu0 %v1409
    %1744 = vmatpush.bf16.msra.mxu0 %v1407
    %1745 = vmatpush.bf16.msra.mxu0 %v1405
    %1746 = vmatpush.bf16.msra.mxu0 %v1403
    %1747 = vmatpush.bf16.msra.mxu0 %v1401
    %1748 = vmatpush.bf16.msra.mxu0 %v1399
    %1749 = vmatpush.bf16.msra.mxu0 %v1397
    %1750 = vmatpush.bf16.msra.mxu0 %v1395
    %1751 = vmatmul.bf16.gmra.mxu0 %v1078
    %v1752 = vpop.f32.mrf.mxu0
    %v1753 = vadd.f32 %v1734, %v1752
    %v1754 = vpop.f32.mrf.mxu0
    %v1755 = vadd.f32 %v1736, %v1754
    %1756 = vmatmul.bf16.gmra.mxu0 %v1082
    %v1757 = vpop.f32.mrf.mxu0
    %v1758 = vadd.f32 %v1739, %v1757
    %v1759 = vpop.f32.mrf.mxu0
    %v1760 = vadd.f32 %v1741, %v1759
    %1761 = vdwg.mxu0
    %1762 = vmatpush.bf16.msra.mxu0 %v1362
    %1763 = vmatpush.bf16.msra.mxu0 %v1360
    %1764 = vmatpush.bf16.msra.mxu0 %v1358
    %1765 = vmatpush.bf16.msra.mxu0 %v1356
    %1766 = vmatpush.bf16.msra.mxu0 %v1354
    %1767 = vmatpush.bf16.msra.mxu0 %v1352
    %1768 = vmatpush.bf16.msra.mxu0 %v1350
    %1769 = vmatpush.bf16.msra.mxu0 %v1348
    %1770 = vmatmul.bf16.gmra.mxu0 %v1075
    %v1771 = vpop.f32.mrf.mxu0
    %v1772 = vadd.f32 0.0, %v1771
    %v1773 = vpop.f32.mrf.mxu0
    %v1774 = vadd.f32 0.0, %v1773
    %1775 = vmatmul.bf16.gmra.mxu0 %v1079
    %v1776 = vpop.f32.mrf.mxu0
    %v1777 = vadd.f32 0.0, %v1776
    %v1778 = vpop.f32.mrf.mxu0
    %v1779 = vadd.f32 0.0, %v1778
    %1780 = vdwg.mxu0
    %1781 = vmatpush.bf16.msra.mxu0 %v1378
    %1782 = vmatpush.bf16.msra.mxu0 %v1376
    %1783 = vmatpush.bf16.msra.mxu0 %v1374
    %1784 = vmatpush.bf16.msra.mxu0 %v1372
    %1785 = vmatpush.bf16.msra.mxu0 %v1370
    %1786 = vmatpush.bf16.msra.mxu0 %v1368
    %1787 = vmatpush.bf16.msra.mxu0 %v1366
    %1788 = vmatpush.bf16.msra.mxu0 %v1364
    %1789 = vmatmul.bf16.gmra.mxu0 %v1076
    %v1790 = vpop.f32.mrf.mxu0
    %v1791 = vadd.f32 %v1772, %v1790
    %v1792 = vpop.f32.mrf.mxu0
    %v1793 = vadd.f32 %v1774, %v1792
    %1794 = vmatmul.bf16.gmra.mxu0 %v1080
    %v1795 = vpop.f32.mrf.mxu0
    %v1796 = vadd.f32 %v1777, %v1795
    %v1797 = vpop.f32.mrf.mxu0
    %v1798 = vadd.f32 %v1779, %v1797
    %1799 = vdwg.mxu0
    %1800 = vmatpush.bf16.msra.mxu0 %v1394
    %1801 = vmatpush.bf16.msra.mxu0 %v1392
    %1802 = vmatpush.bf16.msra.mxu0 %v1390
    %1803 = vmatpush.bf16.msra.mxu0 %v1388
    %1804 = vmatpush.bf16.msra.mxu0 %v1386
    %1805 = vmatpush.bf16.msra.mxu0 %v1384
    %1806 = vmatpush.bf16.msra.mxu0 %v1382
    %1807 = vmatpush.bf16.msra.mxu0 %v1380
    %1808 = vmatmul.bf16.gmra.mxu0 %v1077
    %v1809 = vpop.f32.mrf.mxu0
    %v1810 = vadd.f32 %v1791, %v1809
    %v1811 = vpop.f32.mrf.mxu0
    %v1812 = vadd.f32 %v1793, %v1811
    %1813 = vmatmul.bf16.gmra.mxu0 %v1081
    %v1814 = vpop.f32.mrf.mxu0
    %v1815 = vadd.f32 %v1796, %v1814
    %v1816 = vpop.f32.mrf.mxu0
    %v1817 = vadd.f32 %v1798, %v1816
    %1818 = vdwg.mxu0
    %1819 = vmatpush.bf16.msra.mxu0 %v1410
    %1820 = vmatpush.bf16.msra.mxu0 %v1408
    %1821 = vmatpush.bf16.msra.mxu0 %v1406
    %1822 = vmatpush.bf16.msra.mxu0 %v1404
    %1823 = vmatpush.bf16.msra.mxu0 %v1402
    %1824 = vmatpush.bf16.msra.mxu0 %v1400
    %1825 = vmatpush.bf16.msra.mxu0 %v1398
    %1826 = vmatpush.bf16.msra.mxu0 %v1396
    %1827 = vmatmul.bf16.gmra.mxu0 %v1078
    %v1828 = vpop.f32.mrf.mxu0
    %v1829 = vadd.f32 %v1810, %v1828
    %v1830 = vpop.f32.mrf.mxu0
    %v1831 = vadd.f32 %v1812, %v1830
    %1832 = vmatmul.bf16.gmra.mxu0 %v1082
    %v1833 = vpop.f32.mrf.mxu0
    %v1834 = vadd.f32 %v1815, %v1833
    %v1835 = vpop.f32.mrf.mxu0
    %v1836 = vadd.f32 %v1817, %v1835
    %1837 = vdwg.mxu0
    %v1838 = vpack.c.bf16 %v1829, %v1753
    %v1839 = vpack.c.bf16 %v1831, %v1755
    %v1840 = vpack.c.bf16 %v1834, %v1758
    %v1841 = vpack.c.bf16 %v1836, %v1760
    %v1842 = vunpack.c.l.bf16 %v1838
    %v1843 = vunpack.c.h.bf16 %v1838
    %v1844 = vunpack.c.l.bf16 %v1839
    %v1845 = vunpack.c.h.bf16 %v1839
    %v1846 = vunpack.c.l.bf16 %v1840
    %v1847 = vunpack.c.h.bf16 %v1840
    %v1848 = vunpack.c.l.bf16 %v1841
    %v1849 = vunpack.c.h.bf16 %v1841
    %v1850 = vadd.f32 %v1842, %v1652
    %v1851 = vadd.f32 %v1843, %v1653
    %v1852 = vadd.f32 %v1844, %v1652
    %v1853 = vadd.f32 %v1845, %v1653
    %v1854 = vadd.f32 %v1846, %v1652
    %v1855 = vadd.f32 %v1847, %v1653
    %v1856 = vadd.f32 %v1848, %v1652
    %v1857 = vadd.f32 %v1849, %v1653
    %v1858 = vpack.c.bf16 %v1851, %v1850
    %v1859 = vpack.c.bf16 %v1853, %v1852
    %v1860 = vpack.c.bf16 %v1855, %v1854
    %v1861 = vpack.c.bf16 %v1857, %v1856
    %v1862 = vunpack.c.l.bf16 %v1858
    %v1863 = vunpack.c.h.bf16 %v1858
    %v1864 = vunpack.c.l.bf16 %v1859
    %v1865 = vunpack.c.h.bf16 %v1859
    %v1866 = vunpack.c.l.bf16 %v1860
    %v1867 = vunpack.c.h.bf16 %v1860
    %v1868 = vunpack.c.l.bf16 %v1861
    %v1869 = vunpack.c.h.bf16 %v1861
    %v1870 = vmax.f32 %v1862, 0.0
    %v1871 = vmax.f32 %v1863, 0.0
    %v1872 = vmax.f32 %v1864, 0.0
    %v1873 = vmax.f32 %v1865, 0.0
    %v1874 = vmax.f32 %v1866, 0.0
    %v1875 = vmax.f32 %v1867, 0.0
    %v1876 = vmax.f32 %v1868, 0.0
    %v1877 = vmax.f32 %v1869, 0.0
    %v1878 = vpack.c.bf16 %v1872, %v1870
    %v1879 = vpack.c.bf16 %v1873, %v1871
    %v1880 = vpack.c.bf16 %v1876, %v1874
    %v1881 = vpack.c.bf16 %v1877, %v1875
    %v1882 = vld [vmem:[#allocation10] sm:$0xf]
    %v1883 = vld [vmem:[#allocation10 + $0x4] sm:$0xf]
    %v1884 = vld [vmem:[#allocation10 + $0x8] sm:$0xf]
    %v1885 = vld [vmem:[#allocation10 + $0xc] sm:$0xf]
    %v1886 = vld [vmem:[#allocation10 + $0x10] sm:$0xf]
    %v1887 = vld [vmem:[#allocation10 + $0x14] sm:$0xf]
    %v1888 = vld [vmem:[#allocation10 + $0x18] sm:$0xf]
    %v1889 = vld [vmem:[#allocation10 + $0x1c] sm:$0xf]
    %v1890 = vld [vmem:[#allocation10 + $0x20] sm:$0xf]
    %v1891 = vld [vmem:[#allocation10 + $0x24] sm:$0xf]
    %v1892 = vld [vmem:[#allocation10 + $0x28] sm:$0xf]
    %v1893 = vld [vmem:[#allocation10 + $0x2c] sm:$0xf]
    %v1894 = vld [vmem:[#allocation10 + $0x30] sm:$0xf]
    %v1895 = vld [vmem:[#allocation10 + $0x34] sm:$0xf]
    %v1896 = vld [vmem:[#allocation10 + $0x38] sm:$0xf]
    %v1897 = vld [vmem:[#allocation10 + $0x3c] sm:$0xf]
    %v1898 = vld [vmem:[#allocation10 + $0x40] sm:$0xf]
    %v1899 = vld [vmem:[#allocation10 + $0x44] sm:$0xf]
    %v1900 = vld [vmem:[#allocation10 + $0x48] sm:$0xf]
    %v1901 = vld [vmem:[#allocation10 + $0x4c] sm:$0xf]
    %v1902 = vld [vmem:[#allocation10 + $0x50] sm:$0xf]
    %v1903 = vld [vmem:[#allocation10 + $0x54] sm:$0xf]
    %v1904 = vld [vmem:[#allocation10 + $0x58] sm:$0xf]
    %v1905 = vld [vmem:[#allocation10 + $0x5c] sm:$0xf]
    %v1906 = vld [vmem:[#allocation10 + $0x60] sm:$0xf]
    %v1907 = vld [vmem:[#allocation10 + $0x64] sm:$0xf]
    %v1908 = vld [vmem:[#allocation10 + $0x68] sm:$0xf]
    %v1909 = vld [vmem:[#allocation10 + $0x6c] sm:$0xf]
    %v1910 = vld [vmem:[#allocation10 + $0x70] sm:$0xf]
    %v1911 = vld [vmem:[#allocation10 + $0x74] sm:$0xf]
    %v1912 = vld [vmem:[#allocation10 + $0x78] sm:$0xf]
    %v1913 = vld [vmem:[#allocation10 + $0x7c] sm:$0xf]
    %v1914 = vld [vmem:[#allocation5 + $0x2] ss:$0 sm:$0xff]
    %v1915 = vpack.c.bf16 %v1914, %v1914
    %v1948 = vunpack.c.l.b16 %v1882
    %v1949 = vunpack.c.l.b16 %v1883
    %v1950 = vunpack.c.l.b16 %v1884
    %v1951 = vunpack.c.l.b16 %v1885
    %v1952 = vunpack.c.l.b16 %v1886
    %v1953 = vunpack.c.l.b16 %v1887
    %v1954 = vunpack.c.l.b16 %v1888
    %v1955 = vunpack.c.l.b16 %v1889
    %v1956 = vunpack.c.l.b16 %v1890
    %v1957 = vunpack.c.l.b16 %v1891
    %v1958 = vunpack.c.l.b16 %v1892
    %v1959 = vunpack.c.l.b16 %v1893
    %v1960 = vunpack.c.l.b16 %v1894
    %v1961 = vunpack.c.l.b16 %v1895
    %v1962 = vunpack.c.l.b16 %v1896
    %v1963 = vunpack.c.l.b16 %v1897
    %v1964 = vunpack.c.l.b16 %v1898
    %v1965 = vunpack.c.l.b16 %v1899
    %v1966 = vunpack.c.l.b16 %v1900
    %v1967 = vunpack.c.l.b16 %v1901
    %v1968 = vunpack.c.l.b16 %v1902
    %v1969 = vunpack.c.l.b16 %v1903
    %v1970 = vunpack.c.l.b16 %v1904
    %v1971 = vunpack.c.l.b16 %v1905
    %v1972 = vunpack.c.l.b16 %v1906
    %v1973 = vunpack.c.l.b16 %v1907
    %v1974 = vunpack.c.l.b16 %v1908
    %v1975 = vunpack.c.l.b16 %v1909
    %v1976 = vunpack.c.l.b16 %v1910
    %v1977 = vunpack.c.l.b16 %v1911
    %v1978 = vunpack.c.l.b16 %v1912
    %v1979 = vunpack.c.l.b16 %v1913
    %v1980 = vpack.c.b16 %v1949, %v1948
    %v1981 = vpack.c.b16 %v1951, %v1950
    %v1982 = vpack.c.b16 %v1953, %v1952
    %v1983 = vpack.c.b16 %v1955, %v1954
    %v1984 = vpack.c.b16 %v1957, %v1956
    %v1985 = vpack.c.b16 %v1959, %v1958
    %v1986 = vpack.c.b16 %v1961, %v1960
    %v1987 = vpack.c.b16 %v1963, %v1962
    %v1988 = vpack.c.b16 %v1965, %v1964
    %v1989 = vpack.c.b16 %v1967, %v1966
    %v1990 = vpack.c.b16 %v1969, %v1968
    %v1991 = vpack.c.b16 %v1971, %v1970
    %v1992 = vpack.c.b16 %v1973, %v1972
    %v1993 = vpack.c.b16 %v1975, %v1974
    %v1994 = vpack.c.b16 %v1977, %v1976
    %v1995 = vpack.c.b16 %v1979, %v1978
    %2012 = vmatpush.bf16.msra.mxu0 %v1987
    %2013 = vmatpush.bf16.msra.mxu0 %v1986
    %2014 = vmatpush.bf16.msra.mxu0 %v1985
    %2015 = vmatpush.bf16.msra.mxu0 %v1984
    %2016 = vmatpush.bf16.msra.mxu0 %v1983
    %2017 = vmatpush.bf16.msra.mxu0 %v1982
    %2018 = vmatpush.bf16.msra.mxu0 %v1981
    %2019 = vmatpush.bf16.msra.mxu0 %v1980
    %2020 = vmatmul.bf16.gmra.mxu0 %v1682
    %v2021 = vpop.f32.mrf.mxu0
    %v2022 = vadd.f32 0.0, %v2021
    %v2023 = vpop.f32.mrf.mxu0
    %v2024 = vadd.f32 0.0, %v2023
    %2025 = vmatmul.bf16.gmra.mxu0 %v1684
    %v2026 = vpop.f32.mrf.mxu0
    %v2027 = vadd.f32 0.0, %v2026
    %v2028 = vpop.f32.mrf.mxu0
    %v2029 = vadd.f32 0.0, %v2028
    %2030 = vdwg.mxu0
    %2031 = vmatpush.bf16.msra.mxu0 %v1995
    %2032 = vmatpush.bf16.msra.mxu0 %v1994
    %2033 = vmatpush.bf16.msra.mxu0 %v1993
    %2034 = vmatpush.bf16.msra.mxu0 %v1992
    %2035 = vmatpush.bf16.msra.mxu0 %v1991
    %2036 = vmatpush.bf16.msra.mxu0 %v1990
    %2037 = vmatpush.bf16.msra.mxu0 %v1989
    %2038 = vmatpush.bf16.msra.mxu0 %v1988
    %2039 = vmatmul.bf16.gmra.mxu0 %v1683
    %v2040 = vpop.f32.mrf.mxu0
    %v2041 = vadd.f32 %v2022, %v2040
    %v2042 = vpop.f32.mrf.mxu0
    %v2043 = vadd.f32 %v2024, %v2042
    %2044 = vmatmul.bf16.gmra.mxu0 %v1685
    %v2045 = vpop.f32.mrf.mxu0
    %v2046 = vadd.f32 %v2027, %v2045
    %v2047 = vpop.f32.mrf.mxu0
    %v2048 = vadd.f32 %v2029, %v2047
    %2049 = vdwg.mxu0
    %v2050 = vpack.c.bf16 %v2041, %v2041
    %v2051 = vpack.c.bf16 %v2043, %v2043
    %v2052 = vpack.c.bf16 %v2046, %v2046
    %v2053 = vpack.c.bf16 %v2048, %v2048
    %v2054 = vunpack.c.l.bf16 %v2050
    %v2055 = vunpack.c.l.bf16 %v2051
    %v2056 = vunpack.c.l.bf16 %v2052
    %v2057 = vunpack.c.l.bf16 %v2053
    %v2058 = vunpack.c.l.bf16 %v1915
    %v2059 = vadd.f32 %v2054, %v2058
    %v2060 = vadd.f32 %v2055, %v2058
    %v2061 = vadd.f32 %v2056, %v2058
    %v2062 = vadd.f32 %v2057, %v2058
    %v2063 = vpack.c.bf16 %v2059, %v2059
    %v2064 = vpack.c.bf16 %v2060, %v2060
    %v2065 = vpack.c.bf16 %v2061, %v2061
    %v2066 = vpack.c.bf16 %v2062, %v2062
    %v2067 = vunpack.c.l.bf16 %v2063
    %v2068 = vunpack.c.l.bf16 %v2064
    %v2069 = vunpack.c.l.bf16 %v2065
    %v2070 = vunpack.c.l.bf16 %v2066
    %v2071 = vmax.f32 %v2067, 0.0
    %v2072 = vmax.f32 %v2068, 0.0
    %v2073 = vmax.f32 %v2069, 0.0
    %v2074 = vmax.f32 %v2070, 0.0
    %v2075 = vpack.c.bf16 %v2072, %v2071
    %v2076 = vpack.c.bf16 %v2074, %v2073
    %2077 = vmatpush.bf16.msra.mxu0 %v1987
    %2078 = vmatpush.bf16.msra.mxu0 %v1986
    %2079 = vmatpush.bf16.msra.mxu0 %v1985
    %2080 = vmatpush.bf16.msra.mxu0 %v1984
    %2081 = vmatpush.bf16.msra.mxu0 %v1983
    %2082 = vmatpush.bf16.msra.mxu0 %v1982
    %2083 = vmatpush.bf16.msra.mxu0 %v1981
    %2084 = vmatpush.bf16.msra.mxu0 %v1980
    %2085 = vmatmul.bf16.gmra.mxu0 %v1878
    %v2086 = vpop.f32.mrf.mxu0
    %v2087 = vadd.f32 0.0, %v2086
    %v2088 = vpop.f32.mrf.mxu0
    %v2089 = vadd.f32 0.0, %v2088
    %2090 = vmatmul.bf16.gmra.mxu0 %v1880
    %v2091 = vpop.f32.mrf.mxu0
    %v2092 = vadd.f32 0.0, %v2091
    %v2093 = vpop.f32.mrf.mxu0
    %v2094 = vadd.f32 0.0, %v2093
    %2095 = vdwg.mxu0
    %2096 = vmatpush.bf16.msra.mxu0 %v1995
    %2097 = vmatpush.bf16.msra.mxu0 %v1994
    %2098 = vmatpush.bf16.msra.mxu0 %v1993
    %2099 = vmatpush.bf16.msra.mxu0 %v1992
    %2100 = vmatpush.bf16.msra.mxu0 %v1991
    %2101 = vmatpush.bf16.msra.mxu0 %v1990
    %2102 = vmatpush.bf16.msra.mxu0 %v1989
    %2103 = vmatpush.bf16.msra.mxu0 %v1988
    %2104 = vmatmul.bf16.gmra.mxu0 %v1879
    %v2105 = vpop.f32.mrf.mxu0
    %v2106 = vadd.f32 %v2087, %v2105
    %v2107 = vpop.f32.mrf.mxu0
    %v2108 = vadd.f32 %v2089, %v2107
    %2109 = vmatmul.bf16.gmra.mxu0 %v1881
    %v2110 = vpop.f32.mrf.mxu0
    %v2111 = vadd.f32 %v2092, %v2110
    %v2112 = vpop.f32.mrf.mxu0
    %v2113 = vadd.f32 %v2094, %v2112
    %2114 = vdwg.mxu0
    %v2115 = vpack.c.bf16 %v2106, %v2106
    %v2116 = vpack.c.bf16 %v2108, %v2108
    %v2117 = vpack.c.bf16 %v2111, %v2111
    %v2118 = vpack.c.bf16 %v2113, %v2113
    %v2119 = vunpack.c.l.bf16 %v2115
    %v2120 = vunpack.c.l.bf16 %v2116
    %v2121 = vunpack.c.l.bf16 %v2117
    %v2122 = vunpack.c.l.bf16 %v2118
    %v2123 = vadd.f32 %v2119, %v2058
    %v2124 = vadd.f32 %v2120, %v2058
    %v2125 = vadd.f32 %v2121, %v2058
    %v2126 = vadd.f32 %v2122, %v2058
    %v2127 = vpack.c.bf16 %v2123, %v2123
    %v2128 = vpack.c.bf16 %v2124, %v2124
    %v2129 = vpack.c.bf16 %v2125, %v2125
    %v2130 = vpack.c.bf16 %v2126, %v2126
    %v2131 = vunpack.c.l.bf16 %v2127
    %v2132 = vunpack.c.l.bf16 %v2128
    %v2133 = vunpack.c.l.bf16 %v2129
    %v2134 = vunpack.c.l.bf16 %v2130
    %v2135 = vmax.f32 %v2131, 0.0
    %v2136 = vmax.f32 %v2132, 0.0
    %v2137 = vmax.f32 %v2133, 0.0
    %v2138 = vmax.f32 %v2134, 0.0
    %v2139 = vpack.c.bf16 %v2136, %v2135
    %v2140 = vpack.c.bf16 %v2138, %v2137
    %v2141 = vld [vmem:[#allocation11] sm:$0xf]
    %v2142 = vld [vmem:[#allocation11 + $0x4] sm:$0xf]
    %v2143 = vld [vmem:[#allocation11 + $0x8] sm:$0xf]
    %v2144 = vld [vmem:[#allocation11 + $0xc] sm:$0xf]
    %v2145 = vld [vmem:[#allocation11 + $0x10] sm:$0xf]
    %v2146 = vld [vmem:[#allocation11 + $0x14] sm:$0xf]
    %v2147 = vld [vmem:[#allocation11 + $0x18] sm:$0xf]
    %v2148 = vld [vmem:[#allocation11 + $0x1c] sm:$0xf]
    %v2149 = vld [vmem:[#allocation11 + $0x20] sm:$0xf]
    %v2150 = vld [vmem:[#allocation11 + $0x24] sm:$0xf]
    %v2151 = vld [vmem:[#allocation11 + $0x28] sm:$0xf]
    %v2152 = vld [vmem:[#allocation11 + $0x2c] sm:$0xf]
    %v2153 = vld [vmem:[#allocation11 + $0x30] sm:$0xf]
    %v2154 = vld [vmem:[#allocation11 + $0x34] sm:$0xf]
    %v2155 = vld [vmem:[#allocation11 + $0x38] sm:$0xf]
    %v2156 = vld [vmem:[#allocation11 + $0x3c] sm:$0xf]
    %v2157 = vld [vmem:[#allocation5 + $0x3] ss:$0 sm:$0xff]
    %v2158 = vpack.c.bf16 %v2157, %v2157
    %v2175 = vunpack.c.l.b16 %v2141
    %v2176 = vunpack.c.l.b16 %v2142
    %v2177 = vunpack.c.l.b16 %v2143
    %v2178 = vunpack.c.l.b16 %v2144
    %v2179 = vunpack.c.l.b16 %v2145
    %v2180 = vunpack.c.l.b16 %v2146
    %v2181 = vunpack.c.l.b16 %v2147
    %v2182 = vunpack.c.l.b16 %v2148
    %v2183 = vunpack.c.l.b16 %v2149
    %v2184 = vunpack.c.l.b16 %v2150
    %v2185 = vunpack.c.l.b16 %v2151
    %v2186 = vunpack.c.l.b16 %v2152
    %v2187 = vunpack.c.l.b16 %v2153
    %v2188 = vunpack.c.l.b16 %v2154
    %v2189 = vunpack.c.l.b16 %v2155
    %v2190 = vunpack.c.l.b16 %v2156
    %v2191 = vpack.c.b16 %v2176, %v2175
    %v2192 = vpack.c.b16 %v2178, %v2177
    %v2193 = vpack.c.b16 %v2180, %v2179
    %v2194 = vpack.c.b16 %v2182, %v2181
    %v2195 = vpack.c.b16 %v2184, %v2183
    %v2196 = vpack.c.b16 %v2186, %v2185
    %v2197 = vpack.c.b16 %v2188, %v2187
    %v2198 = vpack.c.b16 %v2190, %v2189
    %2207 = vmatpush.bf16.msra.mxu0 %v2198
    %2208 = vmatpush.bf16.msra.mxu0 %v2197
    %2209 = vmatpush.bf16.msra.mxu0 %v2196
    %2210 = vmatpush.bf16.msra.mxu0 %v2195
    %2211 = vmatpush.bf16.msra.mxu0 %v2194
    %2212 = vmatpush.bf16.msra.mxu0 %v2193
    %2213 = vmatpush.bf16.msra.mxu0 %v2192
    %2214 = vmatpush.bf16.msra.mxu0 %v2191
    %2215 = vmatmul.bf16.gmra.mxu0 %v2075
    %v2216 = vpop.f32.mrf.mxu0
    %v2217 = vadd.f32 0.0, %v2216
    %v2218 = vpop.f32.mrf.mxu0
    %v2219 = vadd.f32 0.0, %v2218
    %2220 = vmatmul.bf16.gmra.mxu0 %v2076
    %v2221 = vpop.f32.mrf.mxu0
    %v2222 = vadd.f32 0.0, %v2221
    %v2223 = vpop.f32.mrf.mxu0
    %v2224 = vadd.f32 0.0, %v2223
    %2225 = vdwg.mxu0
    %v2226 = vpack.c.bf16 %v2217, %v2217
    %v2227 = vpack.c.bf16 %v2219, %v2219
    %v2228 = vpack.c.bf16 %v2222, %v2222
    %v2229 = vpack.c.bf16 %v2224, %v2224
    %v2230 = vunpack.c.l.bf16 %v2226
    %v2231 = vunpack.c.l.bf16 %v2227
    %v2232 = vunpack.c.l.bf16 %v2228
    %v2233 = vunpack.c.l.bf16 %v2229
    %v2234 = vunpack.c.l.bf16 %v2158
    %v2235 = vadd.f32 %v2230, %v2234
    %v2236 = vadd.f32 %v2231, %v2234
    %v2237 = vadd.f32 %v2232, %v2234
    %v2238 = vadd.f32 %v2233, %v2234
    %v2239 = vpack.c.bf16 %v2235, %v2235
    %v2240 = vpack.c.bf16 %v2236, %v2236
    %v2241 = vpack.c.bf16 %v2237, %v2237
    %v2242 = vpack.c.bf16 %v2238, %v2238
    %v2243 = vunpack.c.l.bf16 %v2239
    %v2244 = vunpack.c.l.bf16 %v2240
    %v2245 = vunpack.c.l.bf16 %v2241
    %v2246 = vunpack.c.l.bf16 %v2242
    %v2247 = vmax.f32 %v2243, 0.0
    %v2248 = vmax.f32 %v2244, 0.0
    %v2249 = vmax.f32 %v2245, 0.0
    %v2250 = vmax.f32 %v2246, 0.0
    %v2251 = vpack.c.bf16 %v2248, %v2247
    %v2252 = vpack.c.bf16 %v2250, %v2249
    %2253 = vmatpush.bf16.msra.mxu0 %v2198
    %2254 = vmatpush.bf16.msra.mxu0 %v2197
    %2255 = vmatpush.bf16.msra.mxu0 %v2196
    %2256 = vmatpush.bf16.msra.mxu0 %v2195
    %2257 = vmatpush.bf16.msra.mxu0 %v2194
    %2258 = vmatpush.bf16.msra.mxu0 %v2193
    %2259 = vmatpush.bf16.msra.mxu0 %v2192
    %2260 = vmatpush.bf16.msra.mxu0 %v2191
    %2261 = vmatmul.bf16.gmra.mxu0 %v2139
    %v2262 = vpop.f32.mrf.mxu0
    %v2263 = vadd.f32 0.0, %v2262
    %v2264 = vpop.f32.mrf.mxu0
    %v2265 = vadd.f32 0.0, %v2264
    %2266 = vmatmul.bf16.gmra.mxu0 %v2140
    %v2267 = vpop.f32.mrf.mxu0
    %v2268 = vadd.f32 0.0, %v2267
    %v2269 = vpop.f32.mrf.mxu0
    %v2270 = vadd.f32 0.0, %v2269
    %2271 = vdwg.mxu0
    %v2272 = vpack.c.bf16 %v2263, %v2263
    %v2273 = vpack.c.bf16 %v2265, %v2265
    %v2274 = vpack.c.bf16 %v2268, %v2268
    %v2275 = vpack.c.bf16 %v2270, %v2270
    %v2276 = vunpack.c.l.bf16 %v2272
    %v2277 = vunpack.c.l.bf16 %v2273
    %v2278 = vunpack.c.l.bf16 %v2274
    %v2279 = vunpack.c.l.bf16 %v2275
    %v2280 = vadd.f32 %v2276, %v2234
    %v2281 = vadd.f32 %v2277, %v2234
    %v2282 = vadd.f32 %v2278, %v2234
    %v2283 = vadd.f32 %v2279, %v2234
    %v2284 = vpack.c.bf16 %v2280, %v2280
    %v2285 = vpack.c.bf16 %v2281, %v2281
    %v2286 = vpack.c.bf16 %v2282, %v2282
    %v2287 = vpack.c.bf16 %v2283, %v2283
    %v2288 = vunpack.c.l.bf16 %v2284
    %v2289 = vunpack.c.l.bf16 %v2285
    %v2290 = vunpack.c.l.bf16 %v2286
    %v2291 = vunpack.c.l.bf16 %v2287
    %v2292 = vmax.f32 %v2288, 0.0
    %v2293 = vmax.f32 %v2289, 0.0
    %v2294 = vmax.f32 %v2290, 0.0
    %v2295 = vmax.f32 %v2291, 0.0
    %v2296 = vpack.c.bf16 %v2293, %v2292
    %v2297 = vpack.c.bf16 %v2295, %v2294
    %v2298 = vld [vmem:[#allocation13] sm:$0xf]
    %v2299 = vld [vmem:[#allocation13 + $0x4] sm:$0xf]
    %v2300 = vld [vmem:[#allocation13 + $0x8] sm:$0xf]
    %v2301 = vld [vmem:[#allocation13 + $0xc] sm:$0xf]
    %v2302 = vld [vmem:[#allocation13 + $0x10] sm:$0xf]
    %v2303 = vld [vmem:[#allocation13 + $0x14] sm:$0xf]
    %v2304 = vld [vmem:[#allocation13 + $0x18] sm:$0xf]
    %v2305 = vld [vmem:[#allocation13 + $0x1c] sm:$0xf]
    %v2306 = vld [vmem:[#allocation13 + $0x20] sm:$0xf]
    %v2307 = vld [vmem:[#allocation13 + $0x24] sm:$0xf]
    %v2308 = vld [vmem:[#allocation13 + $0x28] sm:$0xf]
    %v2309 = vld [vmem:[#allocation13 + $0x2c] sm:$0xf]
    %v2310 = vld [vmem:[#allocation13 + $0x30] sm:$0xf]
    %v2311 = vld [vmem:[#allocation13 + $0x34] sm:$0xf]
    %v2312 = vld [vmem:[#allocation13 + $0x38] sm:$0xf]
    %v2313 = vld [vmem:[#allocation13 + $0x3c] sm:$0xf]
    %v2314 = vld [vmem:[#allocation5 + $0x4] ss:$0 sm:$0xff]
    %v2315 = vpack.c.bf16 %v2314, %v2314
    %v2332 = vunpack.c.l.b16 %v2298
    %v2333 = vunpack.c.l.b16 %v2299
    %v2334 = vunpack.c.l.b16 %v2300
    %v2335 = vunpack.c.l.b16 %v2301
    %v2336 = vunpack.c.l.b16 %v2302
    %v2337 = vunpack.c.l.b16 %v2303
    %v2338 = vunpack.c.l.b16 %v2304
    %v2339 = vunpack.c.l.b16 %v2305
    %v2340 = vunpack.c.l.b16 %v2306
    %v2341 = vunpack.c.l.b16 %v2307
    %v2342 = vunpack.c.l.b16 %v2308
    %v2343 = vunpack.c.l.b16 %v2309
    %v2344 = vunpack.c.l.b16 %v2310
    %v2345 = vunpack.c.l.b16 %v2311
    %v2346 = vunpack.c.l.b16 %v2312
    %v2347 = vunpack.c.l.b16 %v2313
    %v2348 = vpack.c.b16 %v2333, %v2332
    %v2349 = vpack.c.b16 %v2335, %v2334
    %v2350 = vpack.c.b16 %v2337, %v2336
    %v2351 = vpack.c.b16 %v2339, %v2338
    %v2352 = vpack.c.b16 %v2341, %v2340
    %v2353 = vpack.c.b16 %v2343, %v2342
    %v2354 = vpack.c.b16 %v2345, %v2344
    %v2355 = vpack.c.b16 %v2347, %v2346
    %2364 = vmatpush.bf16.msra.mxu0 %v2355
    %2365 = vmatpush.bf16.msra.mxu0 %v2354
    %2366 = vmatpush.bf16.msra.mxu0 %v2353
    %2367 = vmatpush.bf16.msra.mxu0 %v2352
    %2368 = vmatpush.bf16.msra.mxu0 %v2351
    %2369 = vmatpush.bf16.msra.mxu0 %v2350
    %2370 = vmatpush.bf16.msra.mxu0 %v2349
    %2371 = vmatpush.bf16.msra.mxu0 %v2348
    %2372 = vmatmul.bf16.gmra.mxu0 %v2251
    %v2373 = vpop.f32.mrf.mxu0
    %v2374 = vadd.f32 0.0, %v2373
    %v2375 = vpop.f32.mrf.mxu0
    %v2376 = vadd.f32 0.0, %v2375
    %2377 = vmatmul.bf16.gmra.mxu0 %v2252
    %v2378 = vpop.f32.mrf.mxu0
    %v2379 = vadd.f32 0.0, %v2378
    %v2380 = vpop.f32.mrf.mxu0
    %v2381 = vadd.f32 0.0, %v2380
    %2382 = vdwg.mxu0
    %v2383 = vpack.c.bf16 %v2374, %v2374
    %v2384 = vpack.c.bf16 %v2376, %v2376
    %v2385 = vpack.c.bf16 %v2379, %v2379
    %v2386 = vpack.c.bf16 %v2381, %v2381
    %v2387 = vunpack.c.l.bf16 %v2383
    %v2388 = vunpack.c.l.bf16 %v2384
    %v2389 = vunpack.c.l.bf16 %v2385
    %v2390 = vunpack.c.l.bf16 %v2386
    %v2391 = vunpack.c.l.bf16 %v2315
    %v2392 = vadd.f32 %v2387, %v2391
    %v2393 = vadd.f32 %v2388, %v2391
    %v2394 = vadd.f32 %v2389, %v2391
    %v2395 = vadd.f32 %v2390, %v2391
    %v2396 = vpack.c.bf16 %v2392, %v2392
    %v2397 = vpack.c.bf16 %v2393, %v2393
    %v2398 = vpack.c.bf16 %v2394, %v2394
    %v2399 = vpack.c.bf16 %v2395, %v2395
    %v2400 = vunpack.c.l.bf16 %v2396
    %v2401 = vunpack.c.l.bf16 %v2397
    %v2402 = vunpack.c.l.bf16 %v2398
    %v2403 = vunpack.c.l.bf16 %v2399
    %v2404 = vmax.f32 %v2400, 0.0
    %v2405 = vmax.f32 %v2401, 0.0
    %v2406 = vmax.f32 %v2402, 0.0
    %v2407 = vmax.f32 %v2403, 0.0
    %v2408 = vpack.c.bf16 %v2405, %v2404
    %v2409 = vpack.c.bf16 %v2407, %v2406
    %2410 = vmatpush.bf16.msra.mxu0 %v2355
    %2411 = vmatpush.bf16.msra.mxu0 %v2354
    %2412 = vmatpush.bf16.msra.mxu0 %v2353
    %2413 = vmatpush.bf16.msra.mxu0 %v2352
    %2414 = vmatpush.bf16.msra.mxu0 %v2351
    %2415 = vmatpush.bf16.msra.mxu0 %v2350
    %2416 = vmatpush.bf16.msra.mxu0 %v2349
    %2417 = vmatpush.bf16.msra.mxu0 %v2348
    %2418 = vmatmul.bf16.gmra.mxu0 %v2296
    %v2419 = vpop.f32.mrf.mxu0
    %v2420 = vadd.f32 0.0, %v2419
    %v2421 = vpop.f32.mrf.mxu0
    %v2422 = vadd.f32 0.0, %v2421
    %2423 = vmatmul.bf16.gmra.mxu0 %v2297
    %v2424 = vpop.f32.mrf.mxu0
    %v2425 = vadd.f32 0.0, %v2424
    %v2426 = vpop.f32.mrf.mxu0
    %v2427 = vadd.f32 0.0, %v2426
    %2428 = vdwg.mxu0
    %v2429 = vpack.c.bf16 %v2420, %v2420
    %v2430 = vpack.c.bf16 %v2422, %v2422
    %v2431 = vpack.c.bf16 %v2425, %v2425
    %v2432 = vpack.c.bf16 %v2427, %v2427
    %v2433 = vunpack.c.l.bf16 %v2429
    %v2434 = vunpack.c.l.bf16 %v2430
    %v2435 = vunpack.c.l.bf16 %v2431
    %v2436 = vunpack.c.l.bf16 %v2432
    %v2437 = vadd.f32 %v2433, %v2391
    %v2438 = vadd.f32 %v2434, %v2391
    %v2439 = vadd.f32 %v2435, %v2391
    %v2440 = vadd.f32 %v2436, %v2391
    %v2441 = vpack.c.bf16 %v2437, %v2437
    %v2442 = vpack.c.bf16 %v2438, %v2438
    %v2443 = vpack.c.bf16 %v2439, %v2439
    %v2444 = vpack.c.bf16 %v2440, %v2440
    %v2445 = vunpack.c.l.bf16 %v2441
    %v2446 = vunpack.c.l.bf16 %v2442
    %v2447 = vunpack.c.l.bf16 %v2443
    %v2448 = vunpack.c.l.bf16 %v2444
    %v2449 = vmax.f32 %v2445, 0.0
    %v2450 = vmax.f32 %v2446, 0.0
    %v2451 = vmax.f32 %v2447, 0.0
    %v2452 = vmax.f32 %v2448, 0.0
    %v2453 = vpack.c.bf16 %v2450, %v2449
    %v2454 = vpack.c.bf16 %v2452, %v2451
    %v2455 = vld [vmem:[#allocation14] sm:$0xff]
    %v2456 = vld [vmem:[#allocation14 + $0x8] sm:$0xff]
    %v2457 = vld [vmem:[#allocation14 + $0x10] sm:$0xff]
    %v2458 = vld [vmem:[#allocation14 + $0x18] sm:$0xff]
    %v2459 = vld [vmem:[#allocation14 + $0x20] sm:$0xff]
    %v2460 = vld [vmem:[#allocation14 + $0x28] sm:$0xff]
    %v2461 = vld [vmem:[#allocation14 + $0x30] sm:$0xff]
    %v2462 = vld [vmem:[#allocation14 + $0x38] sm:$0xff]
    %v2463 = vld [vmem:[#allocation14 + $0x40] sm:$0xff]
    %v2464 = vld [vmem:[#allocation14 + $0x48] sm:$0xff]
    %v2465 = vld [vmem:[#allocation14 + $0x50] sm:$0xff]
    %v2466 = vld [vmem:[#allocation14 + $0x58] sm:$0xff]
    %v2467 = vld [vmem:[#allocation14 + $0x60] sm:$0xff]
    %v2468 = vld [vmem:[#allocation14 + $0x68] sm:$0xff]
    %v2469 = vld [vmem:[#allocation14 + $0x70] sm:$0xff]
    %v2470 = vld [vmem:[#allocation14 + $0x78] sm:$0xff]
    %s2471 = scalar_lea.vmem [#allocation5], 5
    %v2472 = vld [vmem:[%s2471] ss:$8 sm:$0x3]
    %v2474 = vperm.slane %v2472, 0
    %v2475 = vperm.slane %v2472, 1
    %v2478 = vpack.c.bf16 %v2475, %v2474
    %v2495 = vunpack.c.l.b16 %v2455
    %v2496 = vunpack.c.h.b16 %v2455
    %v2497 = vunpack.c.l.b16 %v2456
    %v2498 = vunpack.c.h.b16 %v2456
    %v2499 = vunpack.c.l.b16 %v2457
    %v2500 = vunpack.c.h.b16 %v2457
    %v2501 = vunpack.c.l.b16 %v2458
    %v2502 = vunpack.c.h.b16 %v2458
    %v2503 = vunpack.c.l.b16 %v2459
    %v2504 = vunpack.c.h.b16 %v2459
    %v2505 = vunpack.c.l.b16 %v2460
    %v2506 = vunpack.c.h.b16 %v2460
    %v2507 = vunpack.c.l.b16 %v2461
    %v2508 = vunpack.c.h.b16 %v2461
    %v2509 = vunpack.c.l.b16 %v2462
    %v2510 = vunpack.c.h.b16 %v2462
    %v2511 = vunpack.c.l.b16 %v2463
    %v2512 = vunpack.c.h.b16 %v2463
    %v2513 = vunpack.c.l.b16 %v2464
    %v2514 = vunpack.c.h.b16 %v2464
    %v2515 = vunpack.c.l.b16 %v2465
    %v2516 = vunpack.c.h.b16 %v2465
    %v2517 = vunpack.c.l.b16 %v2466
    %v2518 = vunpack.c.h.b16 %v2466
    %v2519 = vunpack.c.l.b16 %v2467
    %v2520 = vunpack.c.h.b16 %v2467
    %v2521 = vunpack.c.l.b16 %v2468
    %v2522 = vunpack.c.h.b16 %v2468
    %v2523 = vunpack.c.l.b16 %v2469
    %v2524 = vunpack.c.h.b16 %v2469
    %v2525 = vunpack.c.l.b16 %v2470
    %v2526 = vunpack.c.h.b16 %v2470
    %v2527 = vpack.c.b16 %v2497, %v2495
    %v2528 = vpack.c.b16 %v2498, %v2496
    %v2529 = vpack.c.b16 %v2501, %v2499
    %v2530 = vpack.c.b16 %v2502, %v2500
    %v2531 = vpack.c.b16 %v2505, %v2503
    %v2532 = vpack.c.b16 %v2506, %v2504
    %v2533 = vpack.c.b16 %v2509, %v2507
    %v2534 = vpack.c.b16 %v2510, %v2508
    %v2535 = vpack.c.b16 %v2513, %v2511
    %v2536 = vpack.c.b16 %v2514, %v2512
    %v2537 = vpack.c.b16 %v2517, %v2515
    %v2538 = vpack.c.b16 %v2518, %v2516
    %v2539 = vpack.c.b16 %v2521, %v2519
    %v2540 = vpack.c.b16 %v2522, %v2520
    %v2541 = vpack.c.b16 %v2525, %v2523
    %v2542 = vpack.c.b16 %v2526, %v2524
    %2559 = vmatpush.bf16.msra.mxu0 %v2541
    %2560 = vmatpush.bf16.msra.mxu0 %v2539
    %2561 = vmatpush.bf16.msra.mxu0 %v2537
    %2562 = vmatpush.bf16.msra.mxu0 %v2535
    %2563 = vmatpush.bf16.msra.mxu0 %v2533
    %2564 = vmatpush.bf16.msra.mxu0 %v2531
    %2565 = vmatpush.bf16.msra.mxu0 %v2529
    %2566 = vmatpush.bf16.msra.mxu0 %v2527
    %2567 = vmatmul.bf16.gmra.mxu0 %v2408
    %v2568 = vpop.f32.mrf.mxu0
    %v2569 = vadd.f32 0.0, %v2568
    %v2570 = vpop.f32.mrf.mxu0
    %v2571 = vadd.f32 0.0, %v2570
    %2572 = vmatmul.bf16.gmra.mxu0 %v2409
    %v2573 = vpop.f32.mrf.mxu0
    %v2574 = vadd.f32 0.0, %v2573
    %v2575 = vpop.f32.mrf.mxu0
    %v2576 = vadd.f32 0.0, %v2575
    %2577 = vdwg.mxu0
    %2578 = vmatpush.bf16.msra.mxu0 %v2542
    %2579 = vmatpush.bf16.msra.mxu0 %v2540
    %2580 = vmatpush.bf16.msra.mxu0 %v2538
    %2581 = vmatpush.bf16.msra.mxu0 %v2536
    %2582 = vmatpush.bf16.msra.mxu0 %v2534
    %2583 = vmatpush.bf16.msra.mxu0 %v2532
    %2584 = vmatpush.bf16.msra.mxu0 %v2530
    %2585 = vmatpush.bf16.msra.mxu0 %v2528
    %2586 = vmatmul.bf16.gmra.mxu0 %v2408
    %v2587 = vpop.f32.mrf.mxu0
    %v2588 = vadd.f32 0.0, %v2587
    %v2589 = vpop.f32.mrf.mxu0
    %v2590 = vadd.f32 0.0, %v2589
    %2591 = vmatmul.bf16.gmra.mxu0 %v2409
    %v2592 = vpop.f32.mrf.mxu0
    %v2593 = vadd.f32 0.0, %v2592
    %v2594 = vpop.f32.mrf.mxu0
    %v2595 = vadd.f32 0.0, %v2594
    %2596 = vdwg.mxu0
    %v2597 = vpack.c.bf16 %v2588, %v2569
    %v2598 = vpack.c.bf16 %v2590, %v2571
    %v2599 = vpack.c.bf16 %v2593, %v2574
    %v2600 = vpack.c.bf16 %v2595, %v2576
    %v2602 = vunpack.c.l.b16 %v2478
    %v2603 = vunpack.c.h.b16 %v2478
    %v2604 = vpack.c.b16 %v2602, %v2602
    %v2605 = vpack.c.b16 %v2603, %v2603
    %v2607 = vpack.i.b16 %v2604, %v2604
    %v2609 = vperm.slane %v2607, 0
    %v2611 = vpack.i.b16 %v2605, %v2605
    %v2613 = vperm.slane %v2611, 0
    %v2614 = vunpack.c.l.bf16 %v2597
    %v2615 = vunpack.c.h.bf16 %v2597
    %v2616 = vunpack.c.l.bf16 %v2598
    %v2617 = vunpack.c.h.bf16 %v2598
    %v2618 = vunpack.c.l.bf16 %v2599
    %v2619 = vunpack.c.h.bf16 %v2599
    %v2620 = vunpack.c.l.bf16 %v2600
    %v2621 = vunpack.c.h.bf16 %v2600
    %v2622 = vunpack.c.l.bf16 %v2609
    %v2623 = vunpack.c.l.bf16 %v2613
    %v2624 = vadd.f32 %v2614, %v2622
    %v2625 = vadd.f32 %v2615, %v2623
    %v2626 = vadd.f32 %v2616, %v2622
    %v2627 = vadd.f32 %v2617, %v2623
    %v2628 = vadd.f32 %v2618, %v2622
    %v2629 = vadd.f32 %v2619, %v2623
    %v2630 = vadd.f32 %v2620, %v2622
    %v2631 = vadd.f32 %v2621, %v2623
    %v2632 = vpack.c.bf16 %v2625, %v2624
    %v2633 = vpack.c.bf16 %v2627, %v2626
    %v2634 = vpack.c.bf16 %v2629, %v2628
    %v2635 = vpack.c.bf16 %v2631, %v2630
    %v2636 = vunpack.c.l.bf16 %v2632
    %v2637 = vunpack.c.h.bf16 %v2632
    %v2638 = vunpack.c.l.bf16 %v2633
    %v2639 = vunpack.c.h.bf16 %v2633
    %v2640 = vunpack.c.l.bf16 %v2634
    %v2641 = vunpack.c.h.bf16 %v2634
    %v2642 = vunpack.c.l.bf16 %v2635
    %v2643 = vunpack.c.h.bf16 %v2635
    %v2644 = vmax.f32 %v2636, 0.0
    %v2645 = vmax.f32 %v2637, 0.0
    %v2646 = vmax.f32 %v2638, 0.0
    %v2647 = vmax.f32 %v2639, 0.0
    %v2648 = vmax.f32 %v2640, 0.0
    %v2649 = vmax.f32 %v2641, 0.0
    %v2650 = vmax.f32 %v2642, 0.0
    %v2651 = vmax.f32 %v2643, 0.0
    %v2652 = vpack.c.bf16 %v2646, %v2644
    %v2653 = vpack.c.bf16 %v2647, %v2645
    %v2654 = vpack.c.bf16 %v2650, %v2648
    %v2655 = vpack.c.bf16 %v2651, %v2649
    %2656 = vmatpush.bf16.msra.mxu0 %v2541
    %2657 = vmatpush.bf16.msra.mxu0 %v2539
    %2658 = vmatpush.bf16.msra.mxu0 %v2537
    %2659 = vmatpush.bf16.msra.mxu0 %v2535
    %2660 = vmatpush.bf16.msra.mxu0 %v2533
    %2661 = vmatpush.bf16.msra.mxu0 %v2531
    %2662 = vmatpush.bf16.msra.mxu0 %v2529
    %2663 = vmatpush.bf16.msra.mxu0 %v2527
    %2664 = vmatmul.bf16.gmra.mxu0 %v2453
    %v2665 = vpop.f32.mrf.mxu0
    %v2666 = vadd.f32 0.0, %v2665
    %v2667 = vpop.f32.mrf.mxu0
    %v2668 = vadd.f32 0.0, %v2667
    %2669 = vmatmul.bf16.gmra.mxu0 %v2454
    %v2670 = vpop.f32.mrf.mxu0
    %v2671 = vadd.f32 0.0, %v2670
    %v2672 = vpop.f32.mrf.mxu0
    %v2673 = vadd.f32 0.0, %v2672
    %2674 = vdwg.mxu0
    %2675 = vmatpush.bf16.msra.mxu0 %v2542
    %2676 = vmatpush.bf16.msra.mxu0 %v2540
    %2677 = vmatpush.bf16.msra.mxu0 %v2538
    %2678 = vmatpush.bf16.msra.mxu0 %v2536
    %2679 = vmatpush.bf16.msra.mxu0 %v2534
    %2680 = vmatpush.bf16.msra.mxu0 %v2532
    %2681 = vmatpush.bf16.msra.mxu0 %v2530
    %2682 = vmatpush.bf16.msra.mxu0 %v2528
    %2683 = vmatmul.bf16.gmra.mxu0 %v2453
    %v2684 = vpop.f32.mrf.mxu0
    %v2685 = vadd.f32 0.0, %v2684
    %v2686 = vpop.f32.mrf.mxu0
    %v2687 = vadd.f32 0.0, %v2686
    %2688 = vmatmul.bf16.gmra.mxu0 %v2454
    %v2689 = vpop.f32.mrf.mxu0
    %v2690 = vadd.f32 0.0, %v2689
    %v2691 = vpop.f32.mrf.mxu0
    %v2692 = vadd.f32 0.0, %v2691
    %2693 = vdwg.mxu0
    %v2694 = vpack.c.bf16 %v2685, %v2666
    %v2695 = vpack.c.bf16 %v2687, %v2668
    %v2696 = vpack.c.bf16 %v2690, %v2671
    %v2697 = vpack.c.bf16 %v2692, %v2673
    %v2698 = vunpack.c.l.bf16 %v2694
    %v2699 = vunpack.c.h.bf16 %v2694
    %v2700 = vunpack.c.l.bf16 %v2695
    %v2701 = vunpack.c.h.bf16 %v2695
    %v2702 = vunpack.c.l.bf16 %v2696
    %v2703 = vunpack.c.h.bf16 %v2696
    %v2704 = vunpack.c.l.bf16 %v2697
    %v2705 = vunpack.c.h.bf16 %v2697
    %v2706 = vadd.f32 %v2698, %v2622
    %v2707 = vadd.f32 %v2699, %v2623
    %v2708 = vadd.f32 %v2700, %v2622
    %v2709 = vadd.f32 %v2701, %v2623
    %v2710 = vadd.f32 %v2702, %v2622
    %v2711 = vadd.f32 %v2703, %v2623
    %v2712 = vadd.f32 %v2704, %v2622
    %v2713 = vadd.f32 %v2705, %v2623
    %v2714 = vpack.c.bf16 %v2707, %v2706
    %v2715 = vpack.c.bf16 %v2709, %v2708
    %v2716 = vpack.c.bf16 %v2711, %v2710
    %v2717 = vpack.c.bf16 %v2713, %v2712
    %v2718 = vunpack.c.l.bf16 %v2714
    %v2719 = vunpack.c.h.bf16 %v2714
    %v2720 = vunpack.c.l.bf16 %v2715
    %v2721 = vunpack.c.h.bf16 %v2715
    %v2722 = vunpack.c.l.bf16 %v2716
    %v2723 = vunpack.c.h.bf16 %v2716
    %v2724 = vunpack.c.l.bf16 %v2717
    %v2725 = vunpack.c.h.bf16 %v2717
    %v2726 = vmax.f32 %v2718, 0.0
    %v2727 = vmax.f32 %v2719, 0.0
    %v2728 = vmax.f32 %v2720, 0.0
    %v2729 = vmax.f32 %v2721, 0.0
    %v2730 = vmax.f32 %v2722, 0.0
    %v2731 = vmax.f32 %v2723, 0.0
    %v2732 = vmax.f32 %v2724, 0.0
    %v2733 = vmax.f32 %v2725, 0.0
    %v2734 = vpack.c.bf16 %v2728, %v2726
    %v2735 = vpack.c.bf16 %v2729, %v2727
    %v2736 = vpack.c.bf16 %v2732, %v2730
    %v2737 = vpack.c.bf16 %v2733, %v2731
    %v2738 = vld [vmem:[#allocation16] sm:$0xff]
    %v2739 = vld [vmem:[#allocation16 + $0x8] sm:$0xff]
    %v2740 = vld [vmem:[#allocation16 + $0x10] sm:$0xff]
    %v2741 = vld [vmem:[#allocation16 + $0x18] sm:$0xff]
    %v2742 = vld [vmem:[#allocation16 + $0x20] sm:$0xff]
    %v2743 = vld [vmem:[#allocation16 + $0x28] sm:$0xff]
    %v2744 = vld [vmem:[#allocation16 + $0x30] sm:$0xff]
    %v2745 = vld [vmem:[#allocation16 + $0x38] sm:$0xff]
    %v2746 = vld [vmem:[#allocation16 + $0x40] sm:$0xff]
    %v2747 = vld [vmem:[#allocation16 + $0x48] sm:$0xff]
    %v2748 = vld [vmem:[#allocation16 + $0x50] sm:$0xff]
    %v2749 = vld [vmem:[#allocation16 + $0x58] sm:$0xff]
    %v2750 = vld [vmem:[#allocation16 + $0x60] sm:$0xff]
    %v2751 = vld [vmem:[#allocation16 + $0x68] sm:$0xff]
    %v2752 = vld [vmem:[#allocation16 + $0x70] sm:$0xff]
    %v2753 = vld [vmem:[#allocation16 + $0x78] sm:$0xff]
    %v2754 = vld [vmem:[#allocation16 + $0x80] sm:$0xff]
    %v2755 = vld [vmem:[#allocation16 + $0x88] sm:$0xff]
    %v2756 = vld [vmem:[#allocation16 + $0x90] sm:$0xff]
    %v2757 = vld [vmem:[#allocation16 + $0x98] sm:$0xff]
    %v2758 = vld [vmem:[#allocation16 + $0xa0] sm:$0xff]
    %v2759 = vld [vmem:[#allocation16 + $0xa8] sm:$0xff]
    %v2760 = vld [vmem:[#allocation16 + $0xb0] sm:$0xff]
    %v2761 = vld [vmem:[#allocation16 + $0xb8] sm:$0xff]
    %v2762 = vld [vmem:[#allocation16 + $0xc0] sm:$0xff]
    %v2763 = vld [vmem:[#allocation16 + $0xc8] sm:$0xff]
    %v2764 = vld [vmem:[#allocation16 + $0xd0] sm:$0xff]
    %v2765 = vld [vmem:[#allocation16 + $0xd8] sm:$0xff]
    %v2766 = vld [vmem:[#allocation16 + $0xe0] sm:$0xff]
    %v2767 = vld [vmem:[#allocation16 + $0xe8] sm:$0xff]
    %v2768 = vld [vmem:[#allocation16 + $0xf0] sm:$0xff]
    %v2769 = vld [vmem:[#allocation16 + $0xf8] sm:$0xff]
    %v2770 = vld [vmem:[#allocation16 + $0x100] sm:$0xff]
    %v2771 = vld [vmem:[#allocation16 + $0x108] sm:$0xff]
    %v2772 = vld [vmem:[#allocation16 + $0x110] sm:$0xff]
    %v2773 = vld [vmem:[#allocation16 + $0x118] sm:$0xff]
    %v2774 = vld [vmem:[#allocation16 + $0x120] sm:$0xff]
    %v2775 = vld [vmem:[#allocation16 + $0x128] sm:$0xff]
    %v2776 = vld [vmem:[#allocation16 + $0x130] sm:$0xff]
    %v2777 = vld [vmem:[#allocation16 + $0x138] sm:$0xff]
    %v2778 = vld [vmem:[#allocation16 + $0x140] sm:$0xff]
    %v2779 = vld [vmem:[#allocation16 + $0x148] sm:$0xff]
    %v2780 = vld [vmem:[#allocation16 + $0x150] sm:$0xff]
    %v2781 = vld [vmem:[#allocation16 + $0x158] sm:$0xff]
    %v2782 = vld [vmem:[#allocation16 + $0x160] sm:$0xff]
    %v2783 = vld [vmem:[#allocation16 + $0x168] sm:$0xff]
    %v2784 = vld [vmem:[#allocation16 + $0x170] sm:$0xff]
    %v2785 = vld [vmem:[#allocation16 + $0x178] sm:$0xff]
    %v2786 = vld [vmem:[#allocation16 + $0x180] sm:$0xff]
    %v2787 = vld [vmem:[#allocation16 + $0x188] sm:$0xff]
    %v2788 = vld [vmem:[#allocation16 + $0x190] sm:$0xff]
    %v2789 = vld [vmem:[#allocation16 + $0x198] sm:$0xff]
    %v2790 = vld [vmem:[#allocation16 + $0x1a0] sm:$0xff]
    %v2791 = vld [vmem:[#allocation16 + $0x1a8] sm:$0xff]
    %v2792 = vld [vmem:[#allocation16 + $0x1b0] sm:$0xff]
    %v2793 = vld [vmem:[#allocation16 + $0x1b8] sm:$0xff]
    %v2794 = vld [vmem:[#allocation16 + $0x1c0] sm:$0xff]
    %v2795 = vld [vmem:[#allocation16 + $0x1c8] sm:$0xff]
    %v2796 = vld [vmem:[#allocation16 + $0x1d0] sm:$0xff]
    %v2797 = vld [vmem:[#allocation16 + $0x1d8] sm:$0xff]
    %v2798 = vld [vmem:[#allocation16 + $0x1e0] sm:$0xff]
    %v2799 = vld [vmem:[#allocation16 + $0x1e8] sm:$0xff]
    %v2800 = vld [vmem:[#allocation16 + $0x1f0] sm:$0xff]
    %v2801 = vld [vmem:[#allocation16 + $0x1f8] sm:$0xff]
    %s2802 = scalar_lea.vmem [#allocation5], 6
    %v2803 = vld [vmem:[%s2802] ss:$8 sm:$0xf]
    %v2805 = vperm.slane %v2803, 0
    %v2806 = vperm.slane %v2803, 1
    %v2807 = vperm.slane %v2803, 2
    %v2808 = vperm.slane %v2803, 3
    %v2813 = vpack.c.bf16 %v2806, %v2805
    %v2814 = vpack.c.bf16 %v2808, %v2807
    %v2879 = vunpack.c.l.b16 %v2738
    %v2880 = vunpack.c.h.b16 %v2738
    %v2881 = vunpack.c.l.b16 %v2739
    %v2882 = vunpack.c.h.b16 %v2739
    %v2883 = vunpack.c.l.b16 %v2740
    %v2884 = vunpack.c.h.b16 %v2740
    %v2885 = vunpack.c.l.b16 %v2741
    %v2886 = vunpack.c.h.b16 %v2741
    %v2887 = vunpack.c.l.b16 %v2742
    %v2888 = vunpack.c.h.b16 %v2742
    %v2889 = vunpack.c.l.b16 %v2743
    %v2890 = vunpack.c.h.b16 %v2743
    %v2891 = vunpack.c.l.b16 %v2744
    %v2892 = vunpack.c.h.b16 %v2744
    %v2893 = vunpack.c.l.b16 %v2745
    %v2894 = vunpack.c.h.b16 %v2745
    %v2895 = vunpack.c.l.b16 %v2746
    %v2896 = vunpack.c.h.b16 %v2746
    %v2897 = vunpack.c.l.b16 %v2747
    %v2898 = vunpack.c.h.b16 %v2747
    %v2899 = vunpack.c.l.b16 %v2748
    %v2900 = vunpack.c.h.b16 %v2748
    %v2901 = vunpack.c.l.b16 %v2749
    %v2902 = vunpack.c.h.b16 %v2749
    %v2903 = vunpack.c.l.b16 %v2750
    %v2904 = vunpack.c.h.b16 %v2750
    %v2905 = vunpack.c.l.b16 %v2751
    %v2906 = vunpack.c.h.b16 %v2751
    %v2907 = vunpack.c.l.b16 %v2752
    %v2908 = vunpack.c.h.b16 %v2752
    %v2909 = vunpack.c.l.b16 %v2753
    %v2910 = vunpack.c.h.b16 %v2753
    %v2911 = vunpack.c.l.b16 %v2754
    %v2912 = vunpack.c.h.b16 %v2754
    %v2913 = vunpack.c.l.b16 %v2755
    %v2914 = vunpack.c.h.b16 %v2755
    %v2915 = vunpack.c.l.b16 %v2756
    %v2916 = vunpack.c.h.b16 %v2756
    %v2917 = vunpack.c.l.b16 %v2757
    %v2918 = vunpack.c.h.b16 %v2757
    %v2919 = vunpack.c.l.b16 %v2758
    %v2920 = vunpack.c.h.b16 %v2758
    %v2921 = vunpack.c.l.b16 %v2759
    %v2922 = vunpack.c.h.b16 %v2759
    %v2923 = vunpack.c.l.b16 %v2760
    %v2924 = vunpack.c.h.b16 %v2760
    %v2925 = vunpack.c.l.b16 %v2761
    %v2926 = vunpack.c.h.b16 %v2761
    %v2927 = vunpack.c.l.b16 %v2762
    %v2928 = vunpack.c.h.b16 %v2762
    %v2929 = vunpack.c.l.b16 %v2763
    %v2930 = vunpack.c.h.b16 %v2763
    %v2931 = vunpack.c.l.b16 %v2764
    %v2932 = vunpack.c.h.b16 %v2764
    %v2933 = vunpack.c.l.b16 %v2765
    %v2934 = vunpack.c.h.b16 %v2765
    %v2935 = vunpack.c.l.b16 %v2766
    %v2936 = vunpack.c.h.b16 %v2766
    %v2937 = vunpack.c.l.b16 %v2767
    %v2938 = vunpack.c.h.b16 %v2767
    %v2939 = vunpack.c.l.b16 %v2768
    %v2940 = vunpack.c.h.b16 %v2768
    %v2941 = vunpack.c.l.b16 %v2769
    %v2942 = vunpack.c.h.b16 %v2769
    %v2943 = vunpack.c.l.b16 %v2770
    %v2944 = vunpack.c.h.b16 %v2770
    %v2945 = vunpack.c.l.b16 %v2771
    %v2946 = vunpack.c.h.b16 %v2771
    %v2947 = vunpack.c.l.b16 %v2772
    %v2948 = vunpack.c.h.b16 %v2772
    %v2949 = vunpack.c.l.b16 %v2773
    %v2950 = vunpack.c.h.b16 %v2773
    %v2951 = vunpack.c.l.b16 %v2774
    %v2952 = vunpack.c.h.b16 %v2774
    %v2953 = vunpack.c.l.b16 %v2775
    %v2954 = vunpack.c.h.b16 %v2775
    %v2955 = vunpack.c.l.b16 %v2776
    %v2956 = vunpack.c.h.b16 %v2776
    %v2957 = vunpack.c.l.b16 %v2777
    %v2958 = vunpack.c.h.b16 %v2777
    %v2959 = vunpack.c.l.b16 %v2778
    %v2960 = vunpack.c.h.b16 %v2778
    %v2961 = vunpack.c.l.b16 %v2779
    %v2962 = vunpack.c.h.b16 %v2779
    %v2963 = vunpack.c.l.b16 %v2780
    %v2964 = vunpack.c.h.b16 %v2780
    %v2965 = vunpack.c.l.b16 %v2781
    %v2966 = vunpack.c.h.b16 %v2781
    %v2967 = vunpack.c.l.b16 %v2782
    %v2968 = vunpack.c.h.b16 %v2782
    %v2969 = vunpack.c.l.b16 %v2783
    %v2970 = vunpack.c.h.b16 %v2783
    %v2971 = vunpack.c.l.b16 %v2784
    %v2972 = vunpack.c.h.b16 %v2784
    %v2973 = vunpack.c.l.b16 %v2785
    %v2974 = vunpack.c.h.b16 %v2785
    %v2975 = vunpack.c.l.b16 %v2786
    %v2976 = vunpack.c.h.b16 %v2786
    %v2977 = vunpack.c.l.b16 %v2787
    %v2978 = vunpack.c.h.b16 %v2787
    %v2979 = vunpack.c.l.b16 %v2788
    %v2980 = vunpack.c.h.b16 %v2788
    %v2981 = vunpack.c.l.b16 %v2789
    %v2982 = vunpack.c.h.b16 %v2789
    %v2983 = vunpack.c.l.b16 %v2790
    %v2984 = vunpack.c.h.b16 %v2790
    %v2985 = vunpack.c.l.b16 %v2791
    %v2986 = vunpack.c.h.b16 %v2791
    %v2987 = vunpack.c.l.b16 %v2792
    %v2988 = vunpack.c.h.b16 %v2792
    %v2989 = vunpack.c.l.b16 %v2793
    %v2990 = vunpack.c.h.b16 %v2793
    %v2991 = vunpack.c.l.b16 %v2794
    %v2992 = vunpack.c.h.b16 %v2794
    %v2993 = vunpack.c.l.b16 %v2795
    %v2994 = vunpack.c.h.b16 %v2795
    %v2995 = vunpack.c.l.b16 %v2796
    %v2996 = vunpack.c.h.b16 %v2796
    %v2997 = vunpack.c.l.b16 %v2797
    %v2998 = vunpack.c.h.b16 %v2797
    %v2999 = vunpack.c.l.b16 %v2798
    %v3000 = vunpack.c.h.b16 %v2798
    %v3001 = vunpack.c.l.b16 %v2799
    %v3002 = vunpack.c.h.b16 %v2799
    %v3003 = vunpack.c.l.b16 %v2800
    %v3004 = vunpack.c.h.b16 %v2800
    %v3005 = vunpack.c.l.b16 %v2801
    %v3006 = vunpack.c.h.b16 %v2801
    %v3007 = vpack.c.b16 %v2883, %v2879
    %v3008 = vpack.c.b16 %v2884, %v2880
    %v3009 = vpack.c.b16 %v2885, %v2881
    %v3010 = vpack.c.b16 %v2886, %v2882
    %v3011 = vpack.c.b16 %v2891, %v2887
    %v3012 = vpack.c.b16 %v2892, %v2888
    %v3013 = vpack.c.b16 %v2893, %v2889
    %v3014 = vpack.c.b16 %v2894, %v2890
    %v3015 = vpack.c.b16 %v2899, %v2895
    %v3016 = vpack.c.b16 %v2900, %v2896
    %v3017 = vpack.c.b16 %v2901, %v2897
    %v3018 = vpack.c.b16 %v2902, %v2898
    %v3019 = vpack.c.b16 %v2907, %v2903
    %v3020 = vpack.c.b16 %v2908, %v2904
    %v3021 = vpack.c.b16 %v2909, %v2905
    %v3022 = vpack.c.b16 %v2910, %v2906
    %v3023 = vpack.c.b16 %v2915, %v2911
    %v3024 = vpack.c.b16 %v2916, %v2912
    %v3025 = vpack.c.b16 %v2917, %v2913
    %v3026 = vpack.c.b16 %v2918, %v2914
    %v3027 = vpack.c.b16 %v2923, %v2919
    %v3028 = vpack.c.b16 %v2924, %v2920
    %v3029 = vpack.c.b16 %v2925, %v2921
    %v3030 = vpack.c.b16 %v2926, %v2922
    %v3031 = vpack.c.b16 %v2931, %v2927
    %v3032 = vpack.c.b16 %v2932, %v2928
    %v3033 = vpack.c.b16 %v2933, %v2929
    %v3034 = vpack.c.b16 %v2934, %v2930
    %v3035 = vpack.c.b16 %v2939, %v2935
    %v3036 = vpack.c.b16 %v2940, %v2936
    %v3037 = vpack.c.b16 %v2941, %v2937
    %v3038 = vpack.c.b16 %v2942, %v2938
    %v3039 = vpack.c.b16 %v2947, %v2943
    %v3040 = vpack.c.b16 %v2948, %v2944
    %v3041 = vpack.c.b16 %v2949, %v2945
    %v3042 = vpack.c.b16 %v2950, %v2946
    %v3043 = vpack.c.b16 %v2955, %v2951
    %v3044 = vpack.c.b16 %v2956, %v2952
    %v3045 = vpack.c.b16 %v2957, %v2953
    %v3046 = vpack.c.b16 %v2958, %v2954
    %v3047 = vpack.c.b16 %v2963, %v2959
    %v3048 = vpack.c.b16 %v2964, %v2960
    %v3049 = vpack.c.b16 %v2965, %v2961
    %v3050 = vpack.c.b16 %v2966, %v2962
    %v3051 = vpack.c.b16 %v2971, %v2967
    %v3052 = vpack.c.b16 %v2972, %v2968
    %v3053 = vpack.c.b16 %v2973, %v2969
    %v3054 = vpack.c.b16 %v2974, %v2970
    %v3055 = vpack.c.b16 %v2979, %v2975
    %v3056 = vpack.c.b16 %v2980, %v2976
    %v3057 = vpack.c.b16 %v2981, %v2977
    %v3058 = vpack.c.b16 %v2982, %v2978
    %v3059 = vpack.c.b16 %v2987, %v2983
    %v3060 = vpack.c.b16 %v2988, %v2984
    %v3061 = vpack.c.b16 %v2989, %v2985
    %v3062 = vpack.c.b16 %v2990, %v2986
    %v3063 = vpack.c.b16 %v2995, %v2991
    %v3064 = vpack.c.b16 %v2996, %v2992
    %v3065 = vpack.c.b16 %v2997, %v2993
    %v3066 = vpack.c.b16 %v2998, %v2994
    %v3067 = vpack.c.b16 %v3003, %v2999
    %v3068 = vpack.c.b16 %v3004, %v3000
    %v3069 = vpack.c.b16 %v3005, %v3001
    %v3070 = vpack.c.b16 %v3006, %v3002
    %3135 = vmatpush.bf16.msra.mxu0 %v3035
    %3136 = vmatpush.bf16.msra.mxu0 %v3031
    %3137 = vmatpush.bf16.msra.mxu0 %v3027
    %3138 = vmatpush.bf16.msra.mxu0 %v3023
    %3139 = vmatpush.bf16.msra.mxu0 %v3019
    %3140 = vmatpush.bf16.msra.mxu0 %v3015
    %3141 = vmatpush.bf16.msra.mxu0 %v3011
    %3142 = vmatpush.bf16.msra.mxu0 %v3007
    %3143 = vmatmul.bf16.gmra.mxu0 %v2652
    %v3144 = vpop.f32.mrf.mxu0
    %v3145 = vadd.f32 0.0, %v3144
    %v3146 = vpop.f32.mrf.mxu0
    %v3147 = vadd.f32 0.0, %v3146
    %3148 = vmatmul.bf16.gmra.mxu0 %v2654
    %v3149 = vpop.f32.mrf.mxu0
    %v3150 = vadd.f32 0.0, %v3149
    %v3151 = vpop.f32.mrf.mxu0
    %v3152 = vadd.f32 0.0, %v3151
    %3153 = vdwg.mxu0
    %3154 = vmatpush.bf16.msra.mxu0 %v3067
    %3155 = vmatpush.bf16.msra.mxu0 %v3063
    %3156 = vmatpush.bf16.msra.mxu0 %v3059
    %3157 = vmatpush.bf16.msra.mxu0 %v3055
    %3158 = vmatpush.bf16.msra.mxu0 %v3051
    %3159 = vmatpush.bf16.msra.mxu0 %v3047
    %3160 = vmatpush.bf16.msra.mxu0 %v3043
    %3161 = vmatpush.bf16.msra.mxu0 %v3039
    %3162 = vmatmul.bf16.gmra.mxu0 %v2653
    %v3163 = vpop.f32.mrf.mxu0
    %v3164 = vadd.f32 %v3145, %v3163
    %v3165 = vpop.f32.mrf.mxu0
    %v3166 = vadd.f32 %v3147, %v3165
    %3167 = vmatmul.bf16.gmra.mxu0 %v2655
    %v3168 = vpop.f32.mrf.mxu0
    %v3169 = vadd.f32 %v3150, %v3168
    %v3170 = vpop.f32.mrf.mxu0
    %v3171 = vadd.f32 %v3152, %v3170
    %3172 = vdwg.mxu0
    %3173 = vmatpush.bf16.msra.mxu0 %v3036
    %3174 = vmatpush.bf16.msra.mxu0 %v3032
    %3175 = vmatpush.bf16.msra.mxu0 %v3028
    %3176 = vmatpush.bf16.msra.mxu0 %v3024
    %3177 = vmatpush.bf16.msra.mxu0 %v3020
    %3178 = vmatpush.bf16.msra.mxu0 %v3016
    %3179 = vmatpush.bf16.msra.mxu0 %v3012
    %3180 = vmatpush.bf16.msra.mxu0 %v3008
    %3181 = vmatmul.bf16.gmra.mxu0 %v2652
    %v3182 = vpop.f32.mrf.mxu0
    %v3183 = vadd.f32 0.0, %v3182
    %v3184 = vpop.f32.mrf.mxu0
    %v3185 = vadd.f32 0.0, %v3184
    %3186 = vmatmul.bf16.gmra.mxu0 %v2654
    %v3187 = vpop.f32.mrf.mxu0
    %v3188 = vadd.f32 0.0, %v3187
    %v3189 = vpop.f32.mrf.mxu0
    %v3190 = vadd.f32 0.0, %v3189
    %3191 = vdwg.mxu0
    %3192 = vmatpush.bf16.msra.mxu0 %v3068
    %3193 = vmatpush.bf16.msra.mxu0 %v3064
    %3194 = vmatpush.bf16.msra.mxu0 %v3060
    %3195 = vmatpush.bf16.msra.mxu0 %v3056
    %3196 = vmatpush.bf16.msra.mxu0 %v3052
    %3197 = vmatpush.bf16.msra.mxu0 %v3048
    %3198 = vmatpush.bf16.msra.mxu0 %v3044
    %3199 = vmatpush.bf16.msra.mxu0 %v3040
    %3200 = vmatmul.bf16.gmra.mxu0 %v2653
    %v3201 = vpop.f32.mrf.mxu0
    %v3202 = vadd.f32 %v3183, %v3201
    %v3203 = vpop.f32.mrf.mxu0
    %v3204 = vadd.f32 %v3185, %v3203
    %3205 = vmatmul.bf16.gmra.mxu0 %v2655
    %v3206 = vpop.f32.mrf.mxu0
    %v3207 = vadd.f32 %v3188, %v3206
    %v3208 = vpop.f32.mrf.mxu0
    %v3209 = vadd.f32 %v3190, %v3208
    %3210 = vdwg.mxu0
    %3211 = vmatpush.bf16.msra.mxu0 %v3037
    %3212 = vmatpush.bf16.msra.mxu0 %v3033
    %3213 = vmatpush.bf16.msra.mxu0 %v3029
    %3214 = vmatpush.bf16.msra.mxu0 %v3025
    %3215 = vmatpush.bf16.msra.mxu0 %v3021
    %3216 = vmatpush.bf16.msra.mxu0 %v3017
    %3217 = vmatpush.bf16.msra.mxu0 %v3013
    %3218 = vmatpush.bf16.msra.mxu0 %v3009
    %3219 = vmatmul.bf16.gmra.mxu0 %v2652
    %v3220 = vpop.f32.mrf.mxu0
    %v3221 = vadd.f32 0.0, %v3220
    %v3222 = vpop.f32.mrf.mxu0
    %v3223 = vadd.f32 0.0, %v3222
    %3224 = vmatmul.bf16.gmra.mxu0 %v2654
    %v3225 = vpop.f32.mrf.mxu0
    %v3226 = vadd.f32 0.0, %v3225
    %v3227 = vpop.f32.mrf.mxu0
    %v3228 = vadd.f32 0.0, %v3227
    %3229 = vdwg.mxu0
    %3230 = vmatpush.bf16.msra.mxu0 %v3069
    %3231 = vmatpush.bf16.msra.mxu0 %v3065
    %3232 = vmatpush.bf16.msra.mxu0 %v3061
    %3233 = vmatpush.bf16.msra.mxu0 %v3057
    %3234 = vmatpush.bf16.msra.mxu0 %v3053
    %3235 = vmatpush.bf16.msra.mxu0 %v3049
    %3236 = vmatpush.bf16.msra.mxu0 %v3045
    %3237 = vmatpush.bf16.msra.mxu0 %v3041
    %3238 = vmatmul.bf16.gmra.mxu0 %v2653
    %v3239 = vpop.f32.mrf.mxu0
    %v3240 = vadd.f32 %v3221, %v3239
    %v3241 = vpop.f32.mrf.mxu0
    %v3242 = vadd.f32 %v3223, %v3241
    %3243 = vmatmul.bf16.gmra.mxu0 %v2655
    %v3244 = vpop.f32.mrf.mxu0
    %v3245 = vadd.f32 %v3226, %v3244
    %v3246 = vpop.f32.mrf.mxu0
    %v3247 = vadd.f32 %v3228, %v3246
    %3248 = vdwg.mxu0
    %3249 = vmatpush.bf16.msra.mxu0 %v3038
    %3250 = vmatpush.bf16.msra.mxu0 %v3034
    %3251 = vmatpush.bf16.msra.mxu0 %v3030
    %3252 = vmatpush.bf16.msra.mxu0 %v3026
    %3253 = vmatpush.bf16.msra.mxu0 %v3022
    %3254 = vmatpush.bf16.msra.mxu0 %v3018
    %3255 = vmatpush.bf16.msra.mxu0 %v3014
    %3256 = vmatpush.bf16.msra.mxu0 %v3010
    %3257 = vmatmul.bf16.gmra.mxu0 %v2652
    %v3258 = vpop.f32.mrf.mxu0
    %v3259 = vadd.f32 0.0, %v3258
    %v3260 = vpop.f32.mrf.mxu0
    %v3261 = vadd.f32 0.0, %v3260
    %3262 = vmatmul.bf16.gmra.mxu0 %v2654
    %v3263 = vpop.f32.mrf.mxu0
    %v3264 = vadd.f32 0.0, %v3263
    %v3265 = vpop.f32.mrf.mxu0
    %v3266 = vadd.f32 0.0, %v3265
    %3267 = vdwg.mxu0
    %3268 = vmatpush.bf16.msra.mxu0 %v3070
    %3269 = vmatpush.bf16.msra.mxu0 %v3066
    %3270 = vmatpush.bf16.msra.mxu0 %v3062
    %3271 = vmatpush.bf16.msra.mxu0 %v3058
    %3272 = vmatpush.bf16.msra.mxu0 %v3054
    %3273 = vmatpush.bf16.msra.mxu0 %v3050
    %3274 = vmatpush.bf16.msra.mxu0 %v3046
    %3275 = vmatpush.bf16.msra.mxu0 %v3042
    %3276 = vmatmul.bf16.gmra.mxu0 %v2653
    %v3277 = vpop.f32.mrf.mxu0
    %v3278 = vadd.f32 %v3259, %v3277
    %v3279 = vpop.f32.mrf.mxu0
    %v3280 = vadd.f32 %v3261, %v3279
    %3281 = vmatmul.bf16.gmra.mxu0 %v2655
    %v3282 = vpop.f32.mrf.mxu0
    %v3283 = vadd.f32 %v3264, %v3282
    %v3284 = vpop.f32.mrf.mxu0
    %v3285 = vadd.f32 %v3266, %v3284
    %3286 = vdwg.mxu0
    %v3287 = vpack.c.bf16 %v3202, %v3164
    %v3288 = vpack.c.bf16 %v3278, %v3240
    %v3289 = vpack.c.bf16 %v3204, %v3166
    %v3290 = vpack.c.bf16 %v3280, %v3242
    %v3291 = vpack.c.bf16 %v3207, %v3169
    %v3292 = vpack.c.bf16 %v3283, %v3245
    %v3293 = vpack.c.bf16 %v3209, %v3171
    %v3294 = vpack.c.bf16 %v3285, %v3247
    %v3297 = vunpack.c.l.b16 %v2813
    %v3298 = vunpack.c.h.b16 %v2813
    %v3299 = vunpack.c.l.b16 %v2814
    %v3300 = vunpack.c.h.b16 %v2814
    %v3301 = vpack.c.b16 %v3297, %v3297
    %v3302 = vpack.c.b16 %v3298, %v3298
    %v3303 = vpack.c.b16 %v3299, %v3299
    %v3304 = vpack.c.b16 %v3300, %v3300
    %v3306 = vpack.i.b16 %v3301, %v3301
    %v3308 = vperm.slane %v3306, 0
    %v3310 = vpack.i.b16 %v3302, %v3302
    %v3312 = vperm.slane %v3310, 0
    %v3314 = vpack.i.b16 %v3303, %v3303
    %v3316 = vperm.slane %v3314, 0
    %v3318 = vpack.i.b16 %v3304, %v3304
    %v3320 = vperm.slane %v3318, 0
    %v3321 = vunpack.c.l.bf16 %v3287
    %v3322 = vunpack.c.h.bf16 %v3287
    %v3323 = vunpack.c.l.bf16 %v3288
    %v3324 = vunpack.c.h.bf16 %v3288
    %v3325 = vunpack.c.l.bf16 %v3289
    %v3326 = vunpack.c.h.bf16 %v3289
    %v3327 = vunpack.c.l.bf16 %v3290
    %v3328 = vunpack.c.h.bf16 %v3290
    %v3329 = vunpack.c.l.bf16 %v3291
    %v3330 = vunpack.c.h.bf16 %v3291
    %v3331 = vunpack.c.l.bf16 %v3292
    %v3332 = vunpack.c.h.bf16 %v3292
    %v3333 = vunpack.c.l.bf16 %v3293
    %v3334 = vunpack.c.h.bf16 %v3293
    %v3335 = vunpack.c.l.bf16 %v3294
    %v3336 = vunpack.c.h.bf16 %v3294
    %v3337 = vunpack.c.l.bf16 %v3308
    %v3338 = vunpack.c.l.bf16 %v3312
    %v3339 = vunpack.c.l.bf16 %v3316
    %v3340 = vunpack.c.l.bf16 %v3320
    %v3341 = vadd.f32 %v3321, %v3337
    %v3342 = vadd.f32 %v3322, %v3338
    %v3343 = vadd.f32 %v3323, %v3339
    %v3344 = vadd.f32 %v3324, %v3340
    %v3345 = vadd.f32 %v3325, %v3337
    %v3346 = vadd.f32 %v3326, %v3338
    %v3347 = vadd.f32 %v3327, %v3339
    %v3348 = vadd.f32 %v3328, %v3340
    %v3349 = vadd.f32 %v3329, %v3337
    %v3350 = vadd.f32 %v3330, %v3338
    %v3351 = vadd.f32 %v3331, %v3339
    %v3352 = vadd.f32 %v3332, %v3340
    %v3353 = vadd.f32 %v3333, %v3337
    %v3354 = vadd.f32 %v3334, %v3338
    %v3355 = vadd.f32 %v3335, %v3339
    %v3356 = vadd.f32 %v3336, %v3340
    %v3357 = vpack.c.bf16 %v3342, %v3341
    %v3358 = vpack.c.bf16 %v3344, %v3343
    %v3359 = vpack.c.bf16 %v3346, %v3345
    %v3360 = vpack.c.bf16 %v3348, %v3347
    %v3361 = vpack.c.bf16 %v3350, %v3349
    %v3362 = vpack.c.bf16 %v3352, %v3351
    %v3363 = vpack.c.bf16 %v3354, %v3353
    %v3364 = vpack.c.bf16 %v3356, %v3355
    %v3365 = vunpack.c.l.bf16 %v3357
    %v3366 = vunpack.c.h.bf16 %v3357
    %v3367 = vunpack.c.l.bf16 %v3358
    %v3368 = vunpack.c.h.bf16 %v3358
    %v3369 = vunpack.c.l.bf16 %v3359
    %v3370 = vunpack.c.h.bf16 %v3359
    %v3371 = vunpack.c.l.bf16 %v3360
    %v3372 = vunpack.c.h.bf16 %v3360
    %v3373 = vunpack.c.l.bf16 %v3361
    %v3374 = vunpack.c.h.bf16 %v3361
    %v3375 = vunpack.c.l.bf16 %v3362
    %v3376 = vunpack.c.h.bf16 %v3362
    %v3377 = vunpack.c.l.bf16 %v3363
    %v3378 = vunpack.c.h.bf16 %v3363
    %v3379 = vunpack.c.l.bf16 %v3364
    %v3380 = vunpack.c.h.bf16 %v3364
    %v3381 = vmax.f32 %v3365, 0.0
    %v3382 = vmax.f32 %v3366, 0.0
    %v3383 = vmax.f32 %v3367, 0.0
    %v3384 = vmax.f32 %v3368, 0.0
    %v3385 = vmax.f32 %v3369, 0.0
    %v3386 = vmax.f32 %v3370, 0.0
    %v3387 = vmax.f32 %v3371, 0.0
    %v3388 = vmax.f32 %v3372, 0.0
    %v3389 = vmax.f32 %v3373, 0.0
    %v3390 = vmax.f32 %v3374, 0.0
    %v3391 = vmax.f32 %v3375, 0.0
    %v3392 = vmax.f32 %v3376, 0.0
    %v3393 = vmax.f32 %v3377, 0.0
    %v3394 = vmax.f32 %v3378, 0.0
    %v3395 = vmax.f32 %v3379, 0.0
    %v3396 = vmax.f32 %v3380, 0.0
    %v3397 = vpack.c.bf16 %v3385, %v3381
    %v3398 = vpack.c.bf16 %v3386, %v3382
    %v3399 = vpack.c.bf16 %v3387, %v3383
    %v3400 = vpack.c.bf16 %v3388, %v3384
    %v3401 = vpack.c.bf16 %v3393, %v3389
    %v3402 = vpack.c.bf16 %v3394, %v3390
    %v3403 = vpack.c.bf16 %v3395, %v3391
    %v3404 = vpack.c.bf16 %v3396, %v3392
    %3405 = vmatpush.bf16.msra.mxu0 %v3035
    %3406 = vmatpush.bf16.msra.mxu0 %v3031
    %3407 = vmatpush.bf16.msra.mxu0 %v3027
    %3408 = vmatpush.bf16.msra.mxu0 %v3023
    %3409 = vmatpush.bf16.msra.mxu0 %v3019
    %3410 = vmatpush.bf16.msra.mxu0 %v3015
    %3411 = vmatpush.bf16.msra.mxu0 %v3011
    %3412 = vmatpush.bf16.msra.mxu0 %v3007
    %3413 = vmatmul.bf16.gmra.mxu0 %v2734
    %v3414 = vpop.f32.mrf.mxu0
    %v3415 = vadd.f32 0.0, %v3414
    %v3416 = vpop.f32.mrf.mxu0
    %v3417 = vadd.f32 0.0, %v3416
    %3418 = vmatmul.bf16.gmra.mxu0 %v2736
    %v3419 = vpop.f32.mrf.mxu0
    %v3420 = vadd.f32 0.0, %v3419
    %v3421 = vpop.f32.mrf.mxu0
    %v3422 = vadd.f32 0.0, %v3421
    %3423 = vdwg.mxu0
    %3424 = vmatpush.bf16.msra.mxu0 %v3067
    %3425 = vmatpush.bf16.msra.mxu0 %v3063
    %3426 = vmatpush.bf16.msra.mxu0 %v3059
    %3427 = vmatpush.bf16.msra.mxu0 %v3055
    %3428 = vmatpush.bf16.msra.mxu0 %v3051
    %3429 = vmatpush.bf16.msra.mxu0 %v3047
    %3430 = vmatpush.bf16.msra.mxu0 %v3043
    %3431 = vmatpush.bf16.msra.mxu0 %v3039
    %3432 = vmatmul.bf16.gmra.mxu0 %v2735
    %v3433 = vpop.f32.mrf.mxu0
    %v3434 = vadd.f32 %v3415, %v3433
    %v3435 = vpop.f32.mrf.mxu0
    %v3436 = vadd.f32 %v3417, %v3435
    %3437 = vmatmul.bf16.gmra.mxu0 %v2737
    %v3438 = vpop.f32.mrf.mxu0
    %v3439 = vadd.f32 %v3420, %v3438
    %v3440 = vpop.f32.mrf.mxu0
    %v3441 = vadd.f32 %v3422, %v3440
    %3442 = vdwg.mxu0
    %3443 = vmatpush.bf16.msra.mxu0 %v3036
    %3444 = vmatpush.bf16.msra.mxu0 %v3032
    %3445 = vmatpush.bf16.msra.mxu0 %v3028
    %3446 = vmatpush.bf16.msra.mxu0 %v3024
    %3447 = vmatpush.bf16.msra.mxu0 %v3020
    %3448 = vmatpush.bf16.msra.mxu0 %v3016
    %3449 = vmatpush.bf16.msra.mxu0 %v3012
    %3450 = vmatpush.bf16.msra.mxu0 %v3008
    %3451 = vmatmul.bf16.gmra.mxu0 %v2734
    %v3452 = vpop.f32.mrf.mxu0
    %v3453 = vadd.f32 0.0, %v3452
    %v3454 = vpop.f32.mrf.mxu0
    %v3455 = vadd.f32 0.0, %v3454
    %3456 = vmatmul.bf16.gmra.mxu0 %v2736
    %v3457 = vpop.f32.mrf.mxu0
    %v3458 = vadd.f32 0.0, %v3457
    %v3459 = vpop.f32.mrf.mxu0
    %v3460 = vadd.f32 0.0, %v3459
    %3461 = vdwg.mxu0
    %3462 = vmatpush.bf16.msra.mxu0 %v3068
    %3463 = vmatpush.bf16.msra.mxu0 %v3064
    %3464 = vmatpush.bf16.msra.mxu0 %v3060
    %3465 = vmatpush.bf16.msra.mxu0 %v3056
    %3466 = vmatpush.bf16.msra.mxu0 %v3052
    %3467 = vmatpush.bf16.msra.mxu0 %v3048
    %3468 = vmatpush.bf16.msra.mxu0 %v3044
    %3469 = vmatpush.bf16.msra.mxu0 %v3040
    %3470 = vmatmul.bf16.gmra.mxu0 %v2735
    %v3471 = vpop.f32.mrf.mxu0
    %v3472 = vadd.f32 %v3453, %v3471
    %v3473 = vpop.f32.mrf.mxu0
    %v3474 = vadd.f32 %v3455, %v3473
    %3475 = vmatmul.bf16.gmra.mxu0 %v2737
    %v3476 = vpop.f32.mrf.mxu0
    %v3477 = vadd.f32 %v3458, %v3476
    %v3478 = vpop.f32.mrf.mxu0
    %v3479 = vadd.f32 %v3460, %v3478
    %3480 = vdwg.mxu0
    %3481 = vmatpush.bf16.msra.mxu0 %v3037
    %3482 = vmatpush.bf16.msra.mxu0 %v3033
    %3483 = vmatpush.bf16.msra.mxu0 %v3029
    %3484 = vmatpush.bf16.msra.mxu0 %v3025
    %3485 = vmatpush.bf16.msra.mxu0 %v3021
    %3486 = vmatpush.bf16.msra.mxu0 %v3017
    %3487 = vmatpush.bf16.msra.mxu0 %v3013
    %3488 = vmatpush.bf16.msra.mxu0 %v3009
    %3489 = vmatmul.bf16.gmra.mxu0 %v2734
    %v3490 = vpop.f32.mrf.mxu0
    %v3491 = vadd.f32 0.0, %v3490
    %v3492 = vpop.f32.mrf.mxu0
    %v3493 = vadd.f32 0.0, %v3492
    %3494 = vmatmul.bf16.gmra.mxu0 %v2736
    %v3495 = vpop.f32.mrf.mxu0
    %v3496 = vadd.f32 0.0, %v3495
    %v3497 = vpop.f32.mrf.mxu0
    %v3498 = vadd.f32 0.0, %v3497
    %3499 = vdwg.mxu0
    %3500 = vmatpush.bf16.msra.mxu0 %v3069
    %3501 = vmatpush.bf16.msra.mxu0 %v3065
    %3502 = vmatpush.bf16.msra.mxu0 %v3061
    %3503 = vmatpush.bf16.msra.mxu0 %v3057
    %3504 = vmatpush.bf16.msra.mxu0 %v3053
    %3505 = vmatpush.bf16.msra.mxu0 %v3049
    %3506 = vmatpush.bf16.msra.mxu0 %v3045
    %3507 = vmatpush.bf16.msra.mxu0 %v3041
    %3508 = vmatmul.bf16.gmra.mxu0 %v2735
    %v3509 = vpop.f32.mrf.mxu0
    %v3510 = vadd.f32 %v3491, %v3509
    %v3511 = vpop.f32.mrf.mxu0
    %v3512 = vadd.f32 %v3493, %v3511
    %3513 = vmatmul.bf16.gmra.mxu0 %v2737
    %v3514 = vpop.f32.mrf.mxu0
    %v3515 = vadd.f32 %v3496, %v3514
    %v3516 = vpop.f32.mrf.mxu0
    %v3517 = vadd.f32 %v3498, %v3516
    %3518 = vdwg.mxu0
    %3519 = vmatpush.bf16.msra.mxu0 %v3038
    %3520 = vmatpush.bf16.msra.mxu0 %v3034
    %3521 = vmatpush.bf16.msra.mxu0 %v3030
    %3522 = vmatpush.bf16.msra.mxu0 %v3026
    %3523 = vmatpush.bf16.msra.mxu0 %v3022
    %3524 = vmatpush.bf16.msra.mxu0 %v3018
    %3525 = vmatpush.bf16.msra.mxu0 %v3014
    %3526 = vmatpush.bf16.msra.mxu0 %v3010
    %3527 = vmatmul.bf16.gmra.mxu0 %v2734
    %v3528 = vpop.f32.mrf.mxu0
    %v3529 = vadd.f32 0.0, %v3528
    %v3530 = vpop.f32.mrf.mxu0
    %v3531 = vadd.f32 0.0, %v3530
    %3532 = vmatmul.bf16.gmra.mxu0 %v2736
    %v3533 = vpop.f32.mrf.mxu0
    %v3534 = vadd.f32 0.0, %v3533
    %v3535 = vpop.f32.mrf.mxu0
    %v3536 = vadd.f32 0.0, %v3535
    %3537 = vdwg.mxu0
    %3538 = vmatpush.bf16.msra.mxu0 %v3070
    %3539 = vmatpush.bf16.msra.mxu0 %v3066
    %3540 = vmatpush.bf16.msra.mxu0 %v3062
    %3541 = vmatpush.bf16.msra.mxu0 %v3058
    %3542 = vmatpush.bf16.msra.mxu0 %v3054
    %3543 = vmatpush.bf16.msra.mxu0 %v3050
    %3544 = vmatpush.bf16.msra.mxu0 %v3046
    %3545 = vmatpush.bf16.msra.mxu0 %v3042
    %3546 = vmatmul.bf16.gmra.mxu0 %v2735
    %v3547 = vpop.f32.mrf.mxu0
    %v3548 = vadd.f32 %v3529, %v3547
    %v3549 = vpop.f32.mrf.mxu0
    %v3550 = vadd.f32 %v3531, %v3549
    %3551 = vmatmul.bf16.gmra.mxu0 %v2737
    %v3552 = vpop.f32.mrf.mxu0
    %v3553 = vadd.f32 %v3534, %v3552
    %v3554 = vpop.f32.mrf.mxu0
    %v3555 = vadd.f32 %v3536, %v3554
    %3556 = vdwg.mxu0
    %v3557 = vpack.c.bf16 %v3472, %v3434
    %v3558 = vpack.c.bf16 %v3548, %v3510
    %v3559 = vpack.c.bf16 %v3474, %v3436
    %v3560 = vpack.c.bf16 %v3550, %v3512
    %v3561 = vpack.c.bf16 %v3477, %v3439
    %v3562 = vpack.c.bf16 %v3553, %v3515
    %v3563 = vpack.c.bf16 %v3479, %v3441
    %v3564 = vpack.c.bf16 %v3555, %v3517
    %v3565 = vunpack.c.l.bf16 %v3557
    %v3566 = vunpack.c.h.bf16 %v3557
    %v3567 = vunpack.c.l.bf16 %v3558
    %v3568 = vunpack.c.h.bf16 %v3558
    %v3569 = vunpack.c.l.bf16 %v3559
    %v3570 = vunpack.c.h.bf16 %v3559
    %v3571 = vunpack.c.l.bf16 %v3560
    %v3572 = vunpack.c.h.bf16 %v3560
    %v3573 = vunpack.c.l.bf16 %v3561
    %v3574 = vunpack.c.h.bf16 %v3561
    %v3575 = vunpack.c.l.bf16 %v3562
    %v3576 = vunpack.c.h.bf16 %v3562
    %v3577 = vunpack.c.l.bf16 %v3563
    %v3578 = vunpack.c.h.bf16 %v3563
    %v3579 = vunpack.c.l.bf16 %v3564
    %v3580 = vunpack.c.h.bf16 %v3564
    %v3581 = vadd.f32 %v3565, %v3337
    %v3582 = vadd.f32 %v3566, %v3338
    %v3583 = vadd.f32 %v3567, %v3339
    %v3584 = vadd.f32 %v3568, %v3340
    %v3585 = vadd.f32 %v3569, %v3337
    %v3586 = vadd.f32 %v3570, %v3338
    %v3587 = vadd.f32 %v3571, %v3339
    %v3588 = vadd.f32 %v3572, %v3340
    %v3589 = vadd.f32 %v3573, %v3337
    %v3590 = vadd.f32 %v3574, %v3338
    %v3591 = vadd.f32 %v3575, %v3339
    %v3592 = vadd.f32 %v3576, %v3340
    %v3593 = vadd.f32 %v3577, %v3337
    %v3594 = vadd.f32 %v3578, %v3338
    %v3595 = vadd.f32 %v3579, %v3339
    %v3596 = vadd.f32 %v3580, %v3340
    %v3597 = vpack.c.bf16 %v3582, %v3581
    %v3598 = vpack.c.bf16 %v3584, %v3583
    %v3599 = vpack.c.bf16 %v3586, %v3585
    %v3600 = vpack.c.bf16 %v3588, %v3587
    %v3601 = vpack.c.bf16 %v3590, %v3589
    %v3602 = vpack.c.bf16 %v3592, %v3591
    %v3603 = vpack.c.bf16 %v3594, %v3593
    %v3604 = vpack.c.bf16 %v3596, %v3595
    %v3605 = vunpack.c.l.bf16 %v3597
    %v3606 = vunpack.c.h.bf16 %v3597
    %v3607 = vunpack.c.l.bf16 %v3598
    %v3608 = vunpack.c.h.bf16 %v3598
    %v3609 = vunpack.c.l.bf16 %v3599
    %v3610 = vunpack.c.h.bf16 %v3599
    %v3611 = vunpack.c.l.bf16 %v3600
    %v3612 = vunpack.c.h.bf16 %v3600
    %v3613 = vunpack.c.l.bf16 %v3601
    %v3614 = vunpack.c.h.bf16 %v3601
    %v3615 = vunpack.c.l.bf16 %v3602
    %v3616 = vunpack.c.h.bf16 %v3602
    %v3617 = vunpack.c.l.bf16 %v3603
    %v3618 = vunpack.c.h.bf16 %v3603
    %v3619 = vunpack.c.l.bf16 %v3604
    %v3620 = vunpack.c.h.bf16 %v3604
    %v3621 = vmax.f32 %v3605, 0.0
    %v3622 = vmax.f32 %v3606, 0.0
    %v3623 = vmax.f32 %v3607, 0.0
    %v3624 = vmax.f32 %v3608, 0.0
    %v3625 = vmax.f32 %v3609, 0.0
    %v3626 = vmax.f32 %v3610, 0.0
    %v3627 = vmax.f32 %v3611, 0.0
    %v3628 = vmax.f32 %v3612, 0.0
    %v3629 = vmax.f32 %v3613, 0.0
    %v3630 = vmax.f32 %v3614, 0.0
    %v3631 = vmax.f32 %v3615, 0.0
    %v3632 = vmax.f32 %v3616, 0.0
    %v3633 = vmax.f32 %v3617, 0.0
    %v3634 = vmax.f32 %v3618, 0.0
    %v3635 = vmax.f32 %v3619, 0.0
    %v3636 = vmax.f32 %v3620, 0.0
    %v3637 = vpack.c.bf16 %v3625, %v3621
    %v3638 = vpack.c.bf16 %v3626, %v3622
    %v3639 = vpack.c.bf16 %v3627, %v3623
    %v3640 = vpack.c.bf16 %v3628, %v3624
    %v3641 = vpack.c.bf16 %v3633, %v3629
    %v3642 = vpack.c.bf16 %v3634, %v3630
    %v3643 = vpack.c.bf16 %v3635, %v3631
    %v3644 = vpack.c.bf16 %v3636, %v3632
    %v3645 = vld [vmem:[#allocation17] sm:$0xff]
    %v3646 = vld [vmem:[#allocation17 + $0x8] sm:$0xff]
    %v3647 = vld [vmem:[#allocation17 + $0x10] sm:$0xff]
    %v3648 = vld [vmem:[#allocation17 + $0x18] sm:$0xff]
    %v3649 = vld [vmem:[#allocation17 + $0x20] sm:$0xff]
    %v3650 = vld [vmem:[#allocation17 + $0x28] sm:$0xff]
    %v3651 = vld [vmem:[#allocation17 + $0x30] sm:$0xff]
    %v3652 = vld [vmem:[#allocation17 + $0x38] sm:$0xff]
    %v3653 = vld [vmem:[#allocation17 + $0x40] sm:$0xff]
    %v3654 = vld [vmem:[#allocation17 + $0x48] sm:$0xff]
    %v3655 = vld [vmem:[#allocation17 + $0x50] sm:$0xff]
    %v3656 = vld [vmem:[#allocation17 + $0x58] sm:$0xff]
    %v3657 = vld [vmem:[#allocation17 + $0x60] sm:$0xff]
    %v3658 = vld [vmem:[#allocation17 + $0x68] sm:$0xff]
    %v3659 = vld [vmem:[#allocation17 + $0x70] sm:$0xff]
    %v3660 = vld [vmem:[#allocation17 + $0x78] sm:$0xff]
    %v3661 = vld [vmem:[#allocation17 + $0x80] sm:$0xff]
    %v3662 = vld [vmem:[#allocation17 + $0x88] sm:$0xff]
    %v3663 = vld [vmem:[#allocation17 + $0x90] sm:$0xff]
    %v3664 = vld [vmem:[#allocation17 + $0x98] sm:$0xff]
    %v3665 = vld [vmem:[#allocation17 + $0xa0] sm:$0xff]
    %v3666 = vld [vmem:[#allocation17 + $0xa8] sm:$0xff]
    %v3667 = vld [vmem:[#allocation17 + $0xb0] sm:$0xff]
    %v3668 = vld [vmem:[#allocation17 + $0xb8] sm:$0xff]
    %v3669 = vld [vmem:[#allocation17 + $0xc0] sm:$0xff]
    %v3670 = vld [vmem:[#allocation17 + $0xc8] sm:$0xff]
    %v3671 = vld [vmem:[#allocation17 + $0xd0] sm:$0xff]
    %v3672 = vld [vmem:[#allocation17 + $0xd8] sm:$0xff]
    %v3673 = vld [vmem:[#allocation17 + $0xe0] sm:$0xff]
    %v3674 = vld [vmem:[#allocation17 + $0xe8] sm:$0xff]
    %v3675 = vld [vmem:[#allocation17 + $0xf0] sm:$0xff]
    %v3676 = vld [vmem:[#allocation17 + $0xf8] sm:$0xff]
    %v3677 = vld [vmem:[#allocation17 + $0x100] sm:$0xff]
    %v3678 = vld [vmem:[#allocation17 + $0x108] sm:$0xff]
    %v3679 = vld [vmem:[#allocation17 + $0x110] sm:$0xff]
    %v3680 = vld [vmem:[#allocation17 + $0x118] sm:$0xff]
    %v3681 = vld [vmem:[#allocation17 + $0x120] sm:$0xff]
    %v3682 = vld [vmem:[#allocation17 + $0x128] sm:$0xff]
    %v3683 = vld [vmem:[#allocation17 + $0x130] sm:$0xff]
    %v3684 = vld [vmem:[#allocation17 + $0x138] sm:$0xff]
    %v3685 = vld [vmem:[#allocation17 + $0x140] sm:$0xff]
    %v3686 = vld [vmem:[#allocation17 + $0x148] sm:$0xff]
    %v3687 = vld [vmem:[#allocation17 + $0x150] sm:$0xff]
    %v3688 = vld [vmem:[#allocation17 + $0x158] sm:$0xff]
    %v3689 = vld [vmem:[#allocation17 + $0x160] sm:$0xff]
    %v3690 = vld [vmem:[#allocation17 + $0x168] sm:$0xff]
    %v3691 = vld [vmem:[#allocation17 + $0x170] sm:$0xff]
    %v3692 = vld [vmem:[#allocation17 + $0x178] sm:$0xff]
    %v3693 = vld [vmem:[#allocation17 + $0x180] sm:$0xff]
    %v3694 = vld [vmem:[#allocation17 + $0x188] sm:$0xff]
    %v3695 = vld [vmem:[#allocation17 + $0x190] sm:$0xff]
    %v3696 = vld [vmem:[#allocation17 + $0x198] sm:$0xff]
    %v3697 = vld [vmem:[#allocation17 + $0x1a0] sm:$0xff]
    %v3698 = vld [vmem:[#allocation17 + $0x1a8] sm:$0xff]
    %v3699 = vld [vmem:[#allocation17 + $0x1b0] sm:$0xff]
    %v3700 = vld [vmem:[#allocation17 + $0x1b8] sm:$0xff]
    %v3701 = vld [vmem:[#allocation17 + $0x1c0] sm:$0xff]
    %v3702 = vld [vmem:[#allocation17 + $0x1c8] sm:$0xff]
    %v3703 = vld [vmem:[#allocation17 + $0x1d0] sm:$0xff]
    %v3704 = vld [vmem:[#allocation17 + $0x1d8] sm:$0xff]
    %v3705 = vld [vmem:[#allocation17 + $0x1e0] sm:$0xff]
    %v3706 = vld [vmem:[#allocation17 + $0x1e8] sm:$0xff]
    %v3707 = vld [vmem:[#allocation17 + $0x1f0] sm:$0xff]
    %v3708 = vld [vmem:[#allocation17 + $0x1f8] sm:$0xff]
    %s3709 = scalar_lea.vmem [#allocation5], 7
    %v3710 = vld [vmem:[%s3709] ss:$8 sm:$0x3]
    %v3712 = vperm.slane %v3710, 0
    %v3713 = vperm.slane %v3710, 1
    %v3780 = vunpack.c.l.b16 %v3645
    %v3781 = vunpack.c.h.b16 %v3645
    %v3782 = vunpack.c.l.b16 %v3646
    %v3783 = vunpack.c.h.b16 %v3646
    %v3784 = vunpack.c.l.b16 %v3647
    %v3785 = vunpack.c.h.b16 %v3647
    %v3786 = vunpack.c.l.b16 %v3648
    %v3787 = vunpack.c.h.b16 %v3648
    %v3788 = vunpack.c.l.b16 %v3649
    %v3789 = vunpack.c.h.b16 %v3649
    %v3790 = vunpack.c.l.b16 %v3650
    %v3791 = vunpack.c.h.b16 %v3650
    %v3792 = vunpack.c.l.b16 %v3651
    %v3793 = vunpack.c.h.b16 %v3651
    %v3794 = vunpack.c.l.b16 %v3652
    %v3795 = vunpack.c.h.b16 %v3652
    %v3796 = vunpack.c.l.b16 %v3653
    %v3797 = vunpack.c.h.b16 %v3653
    %v3798 = vunpack.c.l.b16 %v3654
    %v3799 = vunpack.c.h.b16 %v3654
    %v3800 = vunpack.c.l.b16 %v3655
    %v3801 = vunpack.c.h.b16 %v3655
    %v3802 = vunpack.c.l.b16 %v3656
    %v3803 = vunpack.c.h.b16 %v3656
    %v3804 = vunpack.c.l.b16 %v3657
    %v3805 = vunpack.c.h.b16 %v3657
    %v3806 = vunpack.c.l.b16 %v3658
    %v3807 = vunpack.c.h.b16 %v3658
    %v3808 = vunpack.c.l.b16 %v3659
    %v3809 = vunpack.c.h.b16 %v3659
    %v3810 = vunpack.c.l.b16 %v3660
    %v3811 = vunpack.c.h.b16 %v3660
    %v3812 = vunpack.c.l.b16 %v3661
    %v3813 = vunpack.c.h.b16 %v3661
    %v3814 = vunpack.c.l.b16 %v3662
    %v3815 = vunpack.c.h.b16 %v3662
    %v3816 = vunpack.c.l.b16 %v3663
    %v3817 = vunpack.c.h.b16 %v3663
    %v3818 = vunpack.c.l.b16 %v3664
    %v3819 = vunpack.c.h.b16 %v3664
    %v3820 = vunpack.c.l.b16 %v3665
    %v3821 = vunpack.c.h.b16 %v3665
    %v3822 = vunpack.c.l.b16 %v3666
    %v3823 = vunpack.c.h.b16 %v3666
    %v3824 = vunpack.c.l.b16 %v3667
    %v3825 = vunpack.c.h.b16 %v3667
    %v3826 = vunpack.c.l.b16 %v3668
    %v3827 = vunpack.c.h.b16 %v3668
    %v3828 = vunpack.c.l.b16 %v3669
    %v3829 = vunpack.c.h.b16 %v3669
    %v3830 = vunpack.c.l.b16 %v3670
    %v3831 = vunpack.c.h.b16 %v3670
    %v3832 = vunpack.c.l.b16 %v3671
    %v3833 = vunpack.c.h.b16 %v3671
    %v3834 = vunpack.c.l.b16 %v3672
    %v3835 = vunpack.c.h.b16 %v3672
    %v3836 = vunpack.c.l.b16 %v3673
    %v3837 = vunpack.c.h.b16 %v3673
    %v3838 = vunpack.c.l.b16 %v3674
    %v3839 = vunpack.c.h.b16 %v3674
    %v3840 = vunpack.c.l.b16 %v3675
    %v3841 = vunpack.c.h.b16 %v3675
    %v3842 = vunpack.c.l.b16 %v3676
    %v3843 = vunpack.c.h.b16 %v3676
    %v3844 = vunpack.c.l.b16 %v3677
    %v3845 = vunpack.c.h.b16 %v3677
    %v3846 = vunpack.c.l.b16 %v3678
    %v3847 = vunpack.c.h.b16 %v3678
    %v3848 = vunpack.c.l.b16 %v3679
    %v3849 = vunpack.c.h.b16 %v3679
    %v3850 = vunpack.c.l.b16 %v3680
    %v3851 = vunpack.c.h.b16 %v3680
    %v3852 = vunpack.c.l.b16 %v3681
    %v3853 = vunpack.c.h.b16 %v3681
    %v3854 = vunpack.c.l.b16 %v3682
    %v3855 = vunpack.c.h.b16 %v3682
    %v3856 = vunpack.c.l.b16 %v3683
    %v3857 = vunpack.c.h.b16 %v3683
    %v3858 = vunpack.c.l.b16 %v3684
    %v3859 = vunpack.c.h.b16 %v3684
    %v3860 = vunpack.c.l.b16 %v3685
    %v3861 = vunpack.c.h.b16 %v3685
    %v3862 = vunpack.c.l.b16 %v3686
    %v3863 = vunpack.c.h.b16 %v3686
    %v3864 = vunpack.c.l.b16 %v3687
    %v3865 = vunpack.c.h.b16 %v3687
    %v3866 = vunpack.c.l.b16 %v3688
    %v3867 = vunpack.c.h.b16 %v3688
    %v3868 = vunpack.c.l.b16 %v3689
    %v3869 = vunpack.c.h.b16 %v3689
    %v3870 = vunpack.c.l.b16 %v3690
    %v3871 = vunpack.c.h.b16 %v3690
    %v3872 = vunpack.c.l.b16 %v3691
    %v3873 = vunpack.c.h.b16 %v3691
    %v3874 = vunpack.c.l.b16 %v3692
    %v3875 = vunpack.c.h.b16 %v3692
    %v3876 = vunpack.c.l.b16 %v3693
    %v3877 = vunpack.c.h.b16 %v3693
    %v3878 = vunpack.c.l.b16 %v3694
    %v3879 = vunpack.c.h.b16 %v3694
    %v3880 = vunpack.c.l.b16 %v3695
    %v3881 = vunpack.c.h.b16 %v3695
    %v3882 = vunpack.c.l.b16 %v3696
    %v3883 = vunpack.c.h.b16 %v3696
    %v3884 = vunpack.c.l.b16 %v3697
    %v3885 = vunpack.c.h.b16 %v3697
    %v3886 = vunpack.c.l.b16 %v3698
    %v3887 = vunpack.c.h.b16 %v3698
    %v3888 = vunpack.c.l.b16 %v3699
    %v3889 = vunpack.c.h.b16 %v3699
    %v3890 = vunpack.c.l.b16 %v3700
    %v3891 = vunpack.c.h.b16 %v3700
    %v3892 = vunpack.c.l.b16 %v3701
    %v3893 = vunpack.c.h.b16 %v3701
    %v3894 = vunpack.c.l.b16 %v3702
    %v3895 = vunpack.c.h.b16 %v3702
    %v3896 = vunpack.c.l.b16 %v3703
    %v3897 = vunpack.c.h.b16 %v3703
    %v3898 = vunpack.c.l.b16 %v3704
    %v3899 = vunpack.c.h.b16 %v3704
    %v3900 = vunpack.c.l.b16 %v3705
    %v3901 = vunpack.c.h.b16 %v3705
    %v3902 = vunpack.c.l.b16 %v3706
    %v3903 = vunpack.c.h.b16 %v3706
    %v3904 = vunpack.c.l.b16 %v3707
    %v3905 = vunpack.c.h.b16 %v3707
    %v3906 = vunpack.c.l.b16 %v3708
    %v3907 = vunpack.c.h.b16 %v3708
    %v3908 = vpack.c.b16 %v3782, %v3780
    %v3909 = vpack.c.b16 %v3783, %v3781
    %v3910 = vpack.c.b16 %v3786, %v3784
    %v3911 = vpack.c.b16 %v3787, %v3785
    %v3912 = vpack.c.b16 %v3790, %v3788
    %v3913 = vpack.c.b16 %v3791, %v3789
    %v3914 = vpack.c.b16 %v3794, %v3792
    %v3915 = vpack.c.b16 %v3795, %v3793
    %v3916 = vpack.c.b16 %v3798, %v3796
    %v3917 = vpack.c.b16 %v3799, %v3797
    %v3918 = vpack.c.b16 %v3802, %v3800
    %v3919 = vpack.c.b16 %v3803, %v3801
    %v3920 = vpack.c.b16 %v3806, %v3804
    %v3921 = vpack.c.b16 %v3807, %v3805
    %v3922 = vpack.c.b16 %v3810, %v3808
    %v3923 = vpack.c.b16 %v3811, %v3809
    %v3924 = vpack.c.b16 %v3814, %v3812
    %v3925 = vpack.c.b16 %v3815, %v3813
    %v3926 = vpack.c.b16 %v3818, %v3816
    %v3927 = vpack.c.b16 %v3819, %v3817
    %v3928 = vpack.c.b16 %v3822, %v3820
    %v3929 = vpack.c.b16 %v3823, %v3821
    %v3930 = vpack.c.b16 %v3826, %v3824
    %v3931 = vpack.c.b16 %v3827, %v3825
    %v3932 = vpack.c.b16 %v3830, %v3828
    %v3933 = vpack.c.b16 %v3831, %v3829
    %v3934 = vpack.c.b16 %v3834, %v3832
    %v3935 = vpack.c.b16 %v3835, %v3833
    %v3936 = vpack.c.b16 %v3838, %v3836
    %v3937 = vpack.c.b16 %v3839, %v3837
    %v3938 = vpack.c.b16 %v3842, %v3840
    %v3939 = vpack.c.b16 %v3843, %v3841
    %v3940 = vpack.c.b16 %v3846, %v3844
    %v3941 = vpack.c.b16 %v3847, %v3845
    %v3942 = vpack.c.b16 %v3850, %v3848
    %v3943 = vpack.c.b16 %v3851, %v3849
    %v3944 = vpack.c.b16 %v3854, %v3852
    %v3945 = vpack.c.b16 %v3855, %v3853
    %v3946 = vpack.c.b16 %v3858, %v3856
    %v3947 = vpack.c.b16 %v3859, %v3857
    %v3948 = vpack.c.b16 %v3862, %v3860
    %v3949 = vpack.c.b16 %v3863, %v3861
    %v3950 = vpack.c.b16 %v3866, %v3864
    %v3951 = vpack.c.b16 %v3867, %v3865
    %v3952 = vpack.c.b16 %v3870, %v3868
    %v3953 = vpack.c.b16 %v3871, %v3869
    %v3954 = vpack.c.b16 %v3874, %v3872
    %v3955 = vpack.c.b16 %v3875, %v3873
    %v3956 = vpack.c.b16 %v3878, %v3876
    %v3957 = vpack.c.b16 %v3879, %v3877
    %v3958 = vpack.c.b16 %v3882, %v3880
    %v3959 = vpack.c.b16 %v3883, %v3881
    %v3960 = vpack.c.b16 %v3886, %v3884
    %v3961 = vpack.c.b16 %v3887, %v3885
    %v3962 = vpack.c.b16 %v3890, %v3888
    %v3963 = vpack.c.b16 %v3891, %v3889
    %v3964 = vpack.c.b16 %v3894, %v3892
    %v3965 = vpack.c.b16 %v3895, %v3893
    %v3966 = vpack.c.b16 %v3898, %v3896
    %v3967 = vpack.c.b16 %v3899, %v3897
    %v3968 = vpack.c.b16 %v3902, %v3900
    %v3969 = vpack.c.b16 %v3903, %v3901
    %v3970 = vpack.c.b16 %v3906, %v3904
    %v3971 = vpack.c.b16 %v3907, %v3905
    %4036 = vmatpush.bf16.msra.mxu0 %v3922
    %4037 = vmatpush.bf16.msra.mxu0 %v3920
    %4038 = vmatpush.bf16.msra.mxu0 %v3918
    %4039 = vmatpush.bf16.msra.mxu0 %v3916
    %4040 = vmatpush.bf16.msra.mxu0 %v3914
    %4041 = vmatpush.bf16.msra.mxu0 %v3912
    %4042 = vmatpush.bf16.msra.mxu0 %v3910
    %4043 = vmatpush.bf16.msra.mxu0 %v3908
    %4044 = vmatmul.bf16.gmra.mxu0 %v3397
    %v4045 = vpop.f32.mrf.mxu0
    %v4046 = vadd.f32 %v3712, %v4045
    %v4047 = vpop.f32.mrf.mxu0
    %v4048 = vadd.f32 %v3712, %v4047
    %4049 = vmatmul.bf16.gmra.mxu0 %v3401
    %v4050 = vpop.f32.mrf.mxu0
    %v4051 = vadd.f32 %v3712, %v4050
    %v4052 = vpop.f32.mrf.mxu0
    %v4053 = vadd.f32 %v3712, %v4052
    %4054 = vdwg.mxu0
    %4055 = vmatpush.bf16.msra.mxu0 %v3938
    %4056 = vmatpush.bf16.msra.mxu0 %v3936
    %4057 = vmatpush.bf16.msra.mxu0 %v3934
    %4058 = vmatpush.bf16.msra.mxu0 %v3932
    %4059 = vmatpush.bf16.msra.mxu0 %v3930
    %4060 = vmatpush.bf16.msra.mxu0 %v3928
    %4061 = vmatpush.bf16.msra.mxu0 %v3926
    %4062 = vmatpush.bf16.msra.mxu0 %v3924
    %4063 = vmatmul.bf16.gmra.mxu0 %v3398
    %v4064 = vpop.f32.mrf.mxu0
    %v4065 = vadd.f32 %v4046, %v4064
    %v4066 = vpop.f32.mrf.mxu0
    %v4067 = vadd.f32 %v4048, %v4066
    %4068 = vmatmul.bf16.gmra.mxu0 %v3402
    %v4069 = vpop.f32.mrf.mxu0
    %v4070 = vadd.f32 %v4051, %v4069
    %v4071 = vpop.f32.mrf.mxu0
    %v4072 = vadd.f32 %v4053, %v4071
    %4073 = vdwg.mxu0
    %4074 = vmatpush.bf16.msra.mxu0 %v3954
    %4075 = vmatpush.bf16.msra.mxu0 %v3952
    %4076 = vmatpush.bf16.msra.mxu0 %v3950
    %4077 = vmatpush.bf16.msra.mxu0 %v3948
    %4078 = vmatpush.bf16.msra.mxu0 %v3946
    %4079 = vmatpush.bf16.msra.mxu0 %v3944
    %4080 = vmatpush.bf16.msra.mxu0 %v3942
    %4081 = vmatpush.bf16.msra.mxu0 %v3940
    %4082 = vmatmul.bf16.gmra.mxu0 %v3399
    %v4083 = vpop.f32.mrf.mxu0
    %v4084 = vadd.f32 %v4065, %v4083
    %v4085 = vpop.f32.mrf.mxu0
    %v4086 = vadd.f32 %v4067, %v4085
    %4087 = vmatmul.bf16.gmra.mxu0 %v3403
    %v4088 = vpop.f32.mrf.mxu0
    %v4089 = vadd.f32 %v4070, %v4088
    %v4090 = vpop.f32.mrf.mxu0
    %v4091 = vadd.f32 %v4072, %v4090
    %4092 = vdwg.mxu0
    %4093 = vmatpush.bf16.msra.mxu0 %v3970
    %4094 = vmatpush.bf16.msra.mxu0 %v3968
    %4095 = vmatpush.bf16.msra.mxu0 %v3966
    %4096 = vmatpush.bf16.msra.mxu0 %v3964
    %4097 = vmatpush.bf16.msra.mxu0 %v3962
    %4098 = vmatpush.bf16.msra.mxu0 %v3960
    %4099 = vmatpush.bf16.msra.mxu0 %v3958
    %4100 = vmatpush.bf16.msra.mxu0 %v3956
    %4101 = vmatmul.bf16.gmra.mxu0 %v3400
    %v4102 = vpop.f32.mrf.mxu0
    %v4103 = vadd.f32 %v4084, %v4102
    %v4104 = vpop.f32.mrf.mxu0
    %v4105 = vadd.f32 %v4086, %v4104
    %4106 = vmatmul.bf16.gmra.mxu0 %v3404
    %v4107 = vpop.f32.mrf.mxu0
    %v4108 = vadd.f32 %v4089, %v4107
    %v4109 = vpop.f32.mrf.mxu0
    %v4110 = vadd.f32 %v4091, %v4109
    %4111 = vdwg.mxu0
    %4112 = vmatpush.bf16.msra.mxu0 %v3923
    %4113 = vmatpush.bf16.msra.mxu0 %v3921
    %4114 = vmatpush.bf16.msra.mxu0 %v3919
    %4115 = vmatpush.bf16.msra.mxu0 %v3917
    %4116 = vmatpush.bf16.msra.mxu0 %v3915
    %4117 = vmatpush.bf16.msra.mxu0 %v3913
    %4118 = vmatpush.bf16.msra.mxu0 %v3911
    %4119 = vmatpush.bf16.msra.mxu0 %v3909
    %4120 = vmatmul.bf16.gmra.mxu0 %v3397
    %v4121 = vpop.f32.mrf.mxu0
    %v4122 = vadd.f32 %v3713, %v4121
    %v4123 = vpop.f32.mrf.mxu0
    %v4124 = vadd.f32 %v3713, %v4123
    %4125 = vmatmul.bf16.gmra.mxu0 %v3401
    %v4126 = vpop.f32.mrf.mxu0
    %v4127 = vadd.f32 %v3713, %v4126
    %v4128 = vpop.f32.mrf.mxu0
    %v4129 = vadd.f32 %v3713, %v4128
    %4130 = vdwg.mxu0
    %4131 = vmatpush.bf16.msra.mxu0 %v3939
    %4132 = vmatpush.bf16.msra.mxu0 %v3937
    %4133 = vmatpush.bf16.msra.mxu0 %v3935
    %4134 = vmatpush.bf16.msra.mxu0 %v3933
    %4135 = vmatpush.bf16.msra.mxu0 %v3931
    %4136 = vmatpush.bf16.msra.mxu0 %v3929
    %4137 = vmatpush.bf16.msra.mxu0 %v3927
    %4138 = vmatpush.bf16.msra.mxu0 %v3925
    %4139 = vmatmul.bf16.gmra.mxu0 %v3398
    %v4140 = vpop.f32.mrf.mxu0
    %v4141 = vadd.f32 %v4122, %v4140
    %v4142 = vpop.f32.mrf.mxu0
    %v4143 = vadd.f32 %v4124, %v4142
    %4144 = vmatmul.bf16.gmra.mxu0 %v3402
    %v4145 = vpop.f32.mrf.mxu0
    %v4146 = vadd.f32 %v4127, %v4145
    %v4147 = vpop.f32.mrf.mxu0
    %v4148 = vadd.f32 %v4129, %v4147
    %4149 = vdwg.mxu0
    %4150 = vmatpush.bf16.msra.mxu0 %v3955
    %4151 = vmatpush.bf16.msra.mxu0 %v3953
    %4152 = vmatpush.bf16.msra.mxu0 %v3951
    %4153 = vmatpush.bf16.msra.mxu0 %v3949
    %4154 = vmatpush.bf16.msra.mxu0 %v3947
    %4155 = vmatpush.bf16.msra.mxu0 %v3945
    %4156 = vmatpush.bf16.msra.mxu0 %v3943
    %4157 = vmatpush.bf16.msra.mxu0 %v3941
    %4158 = vmatmul.bf16.gmra.mxu0 %v3399
    %v4159 = vpop.f32.mrf.mxu0
    %v4160 = vadd.f32 %v4141, %v4159
    %v4161 = vpop.f32.mrf.mxu0
    %v4162 = vadd.f32 %v4143, %v4161
    %4163 = vmatmul.bf16.gmra.mxu0 %v3403
    %v4164 = vpop.f32.mrf.mxu0
    %v4165 = vadd.f32 %v4146, %v4164
    %v4166 = vpop.f32.mrf.mxu0
    %v4167 = vadd.f32 %v4148, %v4166
    %4168 = vdwg.mxu0
    %4169 = vmatpush.bf16.msra.mxu0 %v3971
    %4170 = vmatpush.bf16.msra.mxu0 %v3969
    %4171 = vmatpush.bf16.msra.mxu0 %v3967
    %4172 = vmatpush.bf16.msra.mxu0 %v3965
    %4173 = vmatpush.bf16.msra.mxu0 %v3963
    %4174 = vmatpush.bf16.msra.mxu0 %v3961
    %4175 = vmatpush.bf16.msra.mxu0 %v3959
    %4176 = vmatpush.bf16.msra.mxu0 %v3957
    %4177 = vmatmul.bf16.gmra.mxu0 %v3400
    %v4178 = vpop.f32.mrf.mxu0
    %v4179 = vadd.f32 %v4160, %v4178
    %v4180 = vpop.f32.mrf.mxu0
    %v4181 = vadd.f32 %v4162, %v4180
    %4182 = vmatmul.bf16.gmra.mxu0 %v3404
    %v4183 = vpop.f32.mrf.mxu0
    %v4184 = vadd.f32 %v4165, %v4183
    %v4185 = vpop.f32.mrf.mxu0
    %v4186 = vadd.f32 %v4167, %v4185
    %4187 = vdwg.mxu0
    %v4188 = vsub.f32 0.0, %v4103
    %v4189 = vsub.f32 0.0, %v4179
    %v4190 = vsub.f32 0.0, %v4105
    %v4191 = vsub.f32 0.0, %v4181
    %v4192 = vsub.f32 0.0, %v4108
    %v4193 = vsub.f32 0.0, %v4184
    %v4194 = vsub.f32 0.0, %v4110
    %v4195 = vsub.f32 0.0, %v4186
    %v4196 = vmul.f32 %v4188, 1.442695
    %v4197 = vpow.pop %v4196
    %v4198 = vmul.f32 %v4189, 1.442695
    %v4199 = vpow.pop %v4198
    %v4200 = vmul.f32 %v4190, 1.442695
    %v4201 = vpow.pop %v4200
    %v4202 = vmul.f32 %v4191, 1.442695
    %v4203 = vpow.pop %v4202
    %v4204 = vmul.f32 %v4192, 1.442695
    %v4205 = vpow.pop %v4204
    %v4206 = vmul.f32 %v4193, 1.442695
    %v4207 = vpow.pop %v4206
    %v4208 = vmul.f32 %v4194, 1.442695
    %v4209 = vpow.pop %v4208
    %v4210 = vmul.f32 %v4195, 1.442695
    %v4211 = vpow.pop %v4210
    %v4212 = vadd.f32 %v4197, 1.0
    %v4213 = vadd.f32 %v4199, 1.0
    %v4214 = vadd.f32 %v4201, 1.0
    %v4215 = vadd.f32 %v4203, 1.0
    %v4216 = vadd.f32 %v4205, 1.0
    %v4217 = vadd.f32 %v4207, 1.0
    %v4218 = vadd.f32 %v4209, 1.0
    %v4219 = vadd.f32 %v4211, 1.0
    %v4220 = vrcp.pop %v4212
    %v4221 = vrcp.pop %v4213
    %v4222 = vrcp.pop %v4214
    %v4223 = vrcp.pop %v4215
    %v4224 = vrcp.pop %v4216
    %v4225 = vrcp.pop %v4217
    %v4226 = vrcp.pop %v4218
    %v4227 = vrcp.pop %v4219
    %4228 = vmatpush.bf16.msra.mxu0 %v3922
    %4229 = vmatpush.bf16.msra.mxu0 %v3920
    %4230 = vmatpush.bf16.msra.mxu0 %v3918
    %4231 = vmatpush.bf16.msra.mxu0 %v3916
    %4232 = vmatpush.bf16.msra.mxu0 %v3914
    %4233 = vmatpush.bf16.msra.mxu0 %v3912
    %4234 = vmatpush.bf16.msra.mxu0 %v3910
    %4235 = vmatpush.bf16.msra.mxu0 %v3908
    %4236 = vmatmul.bf16.gmra.mxu0 %v3637
    %v4237 = vpop.f32.mrf.mxu0
    %v4238 = vadd.f32 %v3712, %v4237
    %v4239 = vpop.f32.mrf.mxu0
    %v4240 = vadd.f32 %v3712, %v4239
    %4241 = vmatmul.bf16.gmra.mxu0 %v3641
    %v4242 = vpop.f32.mrf.mxu0
    %v4243 = vadd.f32 %v3712, %v4242
    %v4244 = vpop.f32.mrf.mxu0
    %v4245 = vadd.f32 %v3712, %v4244
    %4246 = vdwg.mxu0
    %4247 = vmatpush.bf16.msra.mxu0 %v3938
    %4248 = vmatpush.bf16.msra.mxu0 %v3936
    %4249 = vmatpush.bf16.msra.mxu0 %v3934
    %4250 = vmatpush.bf16.msra.mxu0 %v3932
    %4251 = vmatpush.bf16.msra.mxu0 %v3930
    %4252 = vmatpush.bf16.msra.mxu0 %v3928
    %4253 = vmatpush.bf16.msra.mxu0 %v3926
    %4254 = vmatpush.bf16.msra.mxu0 %v3924
    %4255 = vmatmul.bf16.gmra.mxu0 %v3638
    %v4256 = vpop.f32.mrf.mxu0
    %v4257 = vadd.f32 %v4238, %v4256
    %v4258 = vpop.f32.mrf.mxu0
    %v4259 = vadd.f32 %v4240, %v4258
    %4260 = vmatmul.bf16.gmra.mxu0 %v3642
    %v4261 = vpop.f32.mrf.mxu0
    %v4262 = vadd.f32 %v4243, %v4261
    %v4263 = vpop.f32.mrf.mxu0
    %v4264 = vadd.f32 %v4245, %v4263
    %4265 = vdwg.mxu0
    %4266 = vmatpush.bf16.msra.mxu0 %v3954
    %4267 = vmatpush.bf16.msra.mxu0 %v3952
    %4268 = vmatpush.bf16.msra.mxu0 %v3950
    %4269 = vmatpush.bf16.msra.mxu0 %v3948
    %4270 = vmatpush.bf16.msra.mxu0 %v3946
    %4271 = vmatpush.bf16.msra.mxu0 %v3944
    %4272 = vmatpush.bf16.msra.mxu0 %v3942
    %4273 = vmatpush.bf16.msra.mxu0 %v3940
    %4274 = vmatmul.bf16.gmra.mxu0 %v3639
    %v4275 = vpop.f32.mrf.mxu0
    %v4276 = vadd.f32 %v4257, %v4275
    %v4277 = vpop.f32.mrf.mxu0
    %v4278 = vadd.f32 %v4259, %v4277
    %4279 = vmatmul.bf16.gmra.mxu0 %v3643
    %v4280 = vpop.f32.mrf.mxu0
    %v4281 = vadd.f32 %v4262, %v4280
    %v4282 = vpop.f32.mrf.mxu0
    %v4283 = vadd.f32 %v4264, %v4282
    %4284 = vdwg.mxu0
    %4285 = vmatpush.bf16.msra.mxu0 %v3970
    %4286 = vmatpush.bf16.msra.mxu0 %v3968
    %4287 = vmatpush.bf16.msra.mxu0 %v3966
    %4288 = vmatpush.bf16.msra.mxu0 %v3964
    %4289 = vmatpush.bf16.msra.mxu0 %v3962
    %4290 = vmatpush.bf16.msra.mxu0 %v3960
    %4291 = vmatpush.bf16.msra.mxu0 %v3958
    %4292 = vmatpush.bf16.msra.mxu0 %v3956
    %4293 = vmatmul.bf16.gmra.mxu0 %v3640
    %v4294 = vpop.f32.mrf.mxu0
    %v4295 = vadd.f32 %v4276, %v4294
    %v4296 = vpop.f32.mrf.mxu0
    %v4297 = vadd.f32 %v4278, %v4296
    %4298 = vmatmul.bf16.gmra.mxu0 %v3644
    %v4299 = vpop.f32.mrf.mxu0
    %v4300 = vadd.f32 %v4281, %v4299
    %v4301 = vpop.f32.mrf.mxu0
    %v4302 = vadd.f32 %v4283, %v4301
    %4303 = vdwg.mxu0
    %4304 = vmatpush.bf16.msra.mxu0 %v3923
    %4305 = vmatpush.bf16.msra.mxu0 %v3921
    %4306 = vmatpush.bf16.msra.mxu0 %v3919
    %4307 = vmatpush.bf16.msra.mxu0 %v3917
    %4308 = vmatpush.bf16.msra.mxu0 %v3915
    %4309 = vmatpush.bf16.msra.mxu0 %v3913
    %4310 = vmatpush.bf16.msra.mxu0 %v3911
    %4311 = vmatpush.bf16.msra.mxu0 %v3909
    %4312 = vmatmul.bf16.gmra.mxu0 %v3637
    %v4313 = vpop.f32.mrf.mxu0
    %v4314 = vadd.f32 %v3713, %v4313
    %v4315 = vpop.f32.mrf.mxu0
    %v4316 = vadd.f32 %v3713, %v4315
    %4317 = vmatmul.bf16.gmra.mxu0 %v3641
    %v4318 = vpop.f32.mrf.mxu0
    %v4319 = vadd.f32 %v3713, %v4318
    %v4320 = vpop.f32.mrf.mxu0
    %v4321 = vadd.f32 %v3713, %v4320
    %4322 = vdwg.mxu0
    %4323 = vmatpush.bf16.msra.mxu0 %v3939
    %4324 = vmatpush.bf16.msra.mxu0 %v3937
    %4325 = vmatpush.bf16.msra.mxu0 %v3935
    %4326 = vmatpush.bf16.msra.mxu0 %v3933
    %4327 = vmatpush.bf16.msra.mxu0 %v3931
    %4328 = vmatpush.bf16.msra.mxu0 %v3929
    %4329 = vmatpush.bf16.msra.mxu0 %v3927
    %4330 = vmatpush.bf16.msra.mxu0 %v3925
    %4331 = vmatmul.bf16.gmra.mxu0 %v3638
    %v4332 = vpop.f32.mrf.mxu0
    %v4333 = vadd.f32 %v4314, %v4332
    %v4334 = vpop.f32.mrf.mxu0
    %v4335 = vadd.f32 %v4316, %v4334
    %4336 = vmatmul.bf16.gmra.mxu0 %v3642
    %v4337 = vpop.f32.mrf.mxu0
    %v4338 = vadd.f32 %v4319, %v4337
    %v4339 = vpop.f32.mrf.mxu0
    %v4340 = vadd.f32 %v4321, %v4339
    %4341 = vdwg.mxu0
    %4342 = vmatpush.bf16.msra.mxu0 %v3955
    %4343 = vmatpush.bf16.msra.mxu0 %v3953
    %4344 = vmatpush.bf16.msra.mxu0 %v3951
    %4345 = vmatpush.bf16.msra.mxu0 %v3949
    %4346 = vmatpush.bf16.msra.mxu0 %v3947
    %4347 = vmatpush.bf16.msra.mxu0 %v3945
    %4348 = vmatpush.bf16.msra.mxu0 %v3943
    %4349 = vmatpush.bf16.msra.mxu0 %v3941
    %4350 = vmatmul.bf16.gmra.mxu0 %v3639
    %v4351 = vpop.f32.mrf.mxu0
    %v4352 = vadd.f32 %v4333, %v4351
    %v4353 = vpop.f32.mrf.mxu0
    %v4354 = vadd.f32 %v4335, %v4353
    %4355 = vmatmul.bf16.gmra.mxu0 %v3643
    %v4356 = vpop.f32.mrf.mxu0
    %v4357 = vadd.f32 %v4338, %v4356
    %v4358 = vpop.f32.mrf.mxu0
    %v4359 = vadd.f32 %v4340, %v4358
    %4360 = vdwg.mxu0
    %4361 = vmatpush.bf16.msra.mxu0 %v3971
    %4362 = vmatpush.bf16.msra.mxu0 %v3969
    %4363 = vmatpush.bf16.msra.mxu0 %v3967
    %4364 = vmatpush.bf16.msra.mxu0 %v3965
    %4365 = vmatpush.bf16.msra.mxu0 %v3963
    %4366 = vmatpush.bf16.msra.mxu0 %v3961
    %4367 = vmatpush.bf16.msra.mxu0 %v3959
    %4368 = vmatpush.bf16.msra.mxu0 %v3957
    %4369 = vmatmul.bf16.gmra.mxu0 %v3640
    %v4370 = vpop.f32.mrf.mxu0
    %v4371 = vadd.f32 %v4352, %v4370
    %v4372 = vpop.f32.mrf.mxu0
    %v4373 = vadd.f32 %v4354, %v4372
    %4374 = vmatmul.bf16.gmra.mxu0 %v3644
    %v4375 = vpop.f32.mrf.mxu0
    %v4376 = vadd.f32 %v4357, %v4375
    %v4377 = vpop.f32.mrf.mxu0
    %v4378 = vadd.f32 %v4359, %v4377
    %4379 = vdwg.mxu0
    %v4380 = vsub.f32 0.0, %v4295
    %v4381 = vsub.f32 0.0, %v4371
    %v4382 = vsub.f32 0.0, %v4297
    %v4383 = vsub.f32 0.0, %v4373
    %v4384 = vsub.f32 0.0, %v4300
    %v4385 = vsub.f32 0.0, %v4376
    %v4386 = vsub.f32 0.0, %v4302
    %v4387 = vsub.f32 0.0, %v4378
    %v4388 = vmul.f32 %v4380, 1.442695
    %v4389 = vpow.pop %v4388
    %v4390 = vmul.f32 %v4381, 1.442695
    %v4391 = vpow.pop %v4390
    %v4392 = vmul.f32 %v4382, 1.442695
    %v4393 = vpow.pop %v4392
    %v4394 = vmul.f32 %v4383, 1.442695
    %v4395 = vpow.pop %v4394
    %v4396 = vmul.f32 %v4384, 1.442695
    %v4397 = vpow.pop %v4396
    %v4398 = vmul.f32 %v4385, 1.442695
    %v4399 = vpow.pop %v4398
    %v4400 = vmul.f32 %v4386, 1.442695
    %v4401 = vpow.pop %v4400
    %v4402 = vmul.f32 %v4387, 1.442695
    %v4403 = vpow.pop %v4402
    %v4404 = vadd.f32 %v4389, 1.0
    %v4405 = vadd.f32 %v4391, 1.0
    %v4406 = vadd.f32 %v4393, 1.0
    %v4407 = vadd.f32 %v4395, 1.0
    %v4408 = vadd.f32 %v4397, 1.0
    %v4409 = vadd.f32 %v4399, 1.0
    %v4410 = vadd.f32 %v4401, 1.0
    %v4411 = vadd.f32 %v4403, 1.0
    %v4412 = vrcp.pop %v4404
    %v4413 = vrcp.pop %v4405
    %v4414 = vrcp.pop %v4406
    %v4415 = vrcp.pop %v4407
    %v4416 = vrcp.pop %v4408
    %v4417 = vrcp.pop %v4409
    %v4418 = vrcp.pop %v4410
    %v4419 = vrcp.pop %v4411
    %4420 = vst [vmem:[#allocation19] sm:$0xff] %v4220
    %4421 = vst [vmem:[#allocation19 + $0x8] sm:$0xff] %v4221
    %4422 = vst [vmem:[#allocation19 + $0x10] sm:$0xff] %v4222
    %4423 = vst [vmem:[#allocation19 + $0x18] sm:$0xff] %v4223
    %4424 = vst [vmem:[#allocation19 + $0x20] sm:$0xff] %v4224
    %4425 = vst [vmem:[#allocation19 + $0x28] sm:$0xff] %v4225
    %4426 = vst [vmem:[#allocation19 + $0x30] sm:$0xff] %v4226
    %4427 = vst [vmem:[#allocation19 + $0x38] sm:$0xff] %v4227
    %4428 = vst [vmem:[#allocation19 + $0x40] sm:$0xff] %v4412
    %4429 = vst [vmem:[#allocation19 + $0x48] sm:$0xff] %v4413
    %4430 = vst [vmem:[#allocation19 + $0x50] sm:$0xff] %v4414
    %4431 = vst [vmem:[#allocation19 + $0x58] sm:$0xff] %v4415
    %4432 = vst [vmem:[#allocation19 + $0x60] sm:$0xff] %v4416
    %4433 = vst [vmem:[#allocation19 + $0x68] sm:$0xff] %v4417
    %4434 = vst [vmem:[#allocation19 + $0x70] sm:$0xff] %v4418
    %4435 = vst [vmem:[#allocation19 + $0x78] sm:$0xff] %v4419
    // Predicated region
    $region82: #{tpu_custom_call.1} parent=1 // pred_check
      _
    $region83: #{tpu_custom_call.1} parent=1 // pred_check_branch
      %4437 = sbr.rel (0) target = $region85
    $region84: #{tpu_custom_call.1} parent=1 // pred_region
      %4439 = vsyncadd [#allocation4], 0
      %s4440 = sshll.u32 [#allocation19], 4
      %s4441 = int_to_ptr.vmem [resolvable:$true] %s4440
      %s4442 = sshll.u32 %s10, 4
      %s4443 = int_to_ptr.hbm [resolvable:$true] %s4442
      %4448 = dma.vmem_to_hbm [thread:$0]  %s4441, 2048, %s4443, [#allocation4], 256, 256, 16
    $region85: #{tpu_custom_call.1} parent=1 // pred_fallthru
      _
    // Predicated region
    $region86: #{tpu_custom_call.1} parent=1 // pred_check
      _
    $region87: #{tpu_custom_call.1} parent=1 // pred_check_branch
      %4450 = sbr.rel (0) target = $region89
    $region88: #{tpu_custom_call.1} parent=1 // pred_region
      %4452 = dma.done [#allocation4], 2048
    $region89: #{tpu_custom_call.1} parent=1 // pred_fallthru
      _
    %4453 = vsyncpa [#allocation3], 1
    %4454 = vsyncpa [#allocation6], 1
    %4455 = vsyncpa [#allocation9], 1
    %4456 = vsyncpa [#allocation12], 1
    %4457 = vsyncpa [#allocation15], 1
    %4458 = vsyncpa [#allocation18], 1
    %4459 = vsyncpa [#allocation4], 1

</llo_original>
